<compile_context>
chip_gen: v7x
topology: tpu7x:2x2x1
jax: 0.10.0
libtpu: 0.0.40
codegen_flags: <defaults>
</compile_context>

<pallas_src>
import numpy as np

import jax
import jax.numpy as jnp
from jax.experimental import pallas as pl
from jax.experimental.pallas import tpu as pltpu


_CHANNELS = (3, 16, 32, 64, 128, 256)


def _ceil_to(x, m):
    return ((x + m - 1) // m) * m


def _tap_selection(h, w, ho, wo):
    """Constant 0/1 gather tensor S[t, o, i].

    S[t, o, i] = 1 iff output pixel o = (oh, ow) reads input pixel i = (ih, iw)
    for tap t = kh*3+kw with ih = 2*oh-1+kh, iw = 2*ow-1+kw (stride 2, pad 1).
    Out-of-bounds taps stay zero (they read the implicit zero padding).
    """
    s = np.zeros((9, ho * wo, h * w), np.float32)
    for kh in range(3):
        for kw in range(3):
            t = kh * 3 + kw
            for oh in range(ho):
                ih = 2 * oh - 1 + kh
                if ih < 0 or ih >= h:
                    continue
                for ow in range(wo):
                    iw = 2 * ow - 1 + kw
                    if iw < 0 or iw >= w:
                        continue
                    s[t, oh * wo + ow, ih * w + iw] = 1.0
    return s


def _encoder_fused_kernel(x_ref, *refs):
    """Fused 5-layer conv(3x3, s=2, p=1) + ReLU encoder for one batch tile.

    x_ref : (BT, HW*Cin)    pixel-major flattened input images
    refs  : per layer (K, B) with
              K: (HW*Cin, HoWo*Cout)   folded conv weights (one matmul/layer)
              B: (1, HoWo*Cout)        bias, already tiled over output pixels
            followed by o_ref: (BT, HoWo_last*Cout_last)
    """
    *layer_refs, o_ref = refs
    num_layers = len(layer_refs) // 2

    a = x_ref[...].astype(jnp.float32)                    # (BT, HW*Cin)
    for l in range(num_layers):                           # statically unrolled
        k_ref = layer_refs[2 * l + 0]
        b_ref = layer_refs[2 * l + 1]
        a = jnp.dot(a, k_ref[...], preferred_element_type=jnp.float32)  # MXU
        a = jnp.maximum(a + b_ref[...], 0.0)              # bias + ReLU (VPU)
    o_ref[...] = a.astype(o_ref.dtype)


@jax.jit
def encoder_forward(x_nchw, params):
    """Forward pass of Encoder. Input/output use the PyTorch NCHW convention."""
    N, C, H, W = x_nchw.shape

    # Pixel-major flatten: feature index = (ih*W + iw)*Cin + cin  (== NHWC flatten).
    x_flat = jnp.transpose(x_nchw, (0, 2, 3, 1)).reshape(N, H * W * C)

    bt = min(128, _ceil_to(N, 8))          # sublane-aligned batch tile
    n_pad = _ceil_to(N, bt)
    x_flat = jnp.pad(x_flat, ((0, n_pad - N), (0, 0)))

    inputs = [x_flat]
    in_specs = [pl.BlockSpec((bt, H * W * C), lambda n: (n, 0))]

    flops = 0
    bytes_accessed = x_flat.size * 4

    h, w_sp = H, W
    ho, wo, cout = H, W, C
    for wgt, b in params:
        cin, cout = wgt.shape[2], wgt.shape[3]
        ho, wo = (h + 1) // 2, (w_sp + 1) // 2

        s = jnp.asarray(_tap_selection(h, w_sp, ho, wo))      # (9, HoWo, HW) 0/1
        wt = wgt.reshape(9, cin, cout)                        # tap-major weights
        # Fold gather + weights into one dense matrix (exact: each (i, o) pair
        # is connected by at most one tap, so no summation of weights occurs).
        k = jnp.einsum("toi,tcd->icod", s, wt)
        k = k.reshape(h * w_sp * cin, ho * wo * cout)
        b_flat = jnp.tile(b.reshape(1, cout), (1, ho * wo))   # (1, HoWo*Cout)

        inputs += [k, b_flat]
        in_specs += [
            pl.BlockSpec(k.shape, lambda n: (0, 0)),          # resident constant
            pl.BlockSpec(b_flat.shape, lambda n: (0, 0)),
        ]

        flops += n_pad * 2 * k.shape[0] * k.shape[1]
        bytes_accessed += (k.size + b_flat.size) * 4

        h, w_sp = ho, wo

    f_last = ho * wo * cout
    bytes_accessed += n_pad * f_last * 4

    out = pl.pallas_call(
        _encoder_fused_kernel,
        out_shape=jax.ShapeDtypeStruct((n_pad, f_last), jnp.float32),
        grid_spec=pltpu.PrefetchScalarGridSpec(
            num_scalar_prefetch=0,
            grid=(n_pad // bt,),                              # one step per batch tile
            in_specs=in_specs,
            out_specs=pl.BlockSpec((bt, f_last), lambda n: (n, 0)),
        ),
        compiler_params=pltpu.CompilerParams(
            dimension_semantics=("parallel",),                # batch shards across TCs
            vmem_limit_bytes=32 * 1024 * 1024,
        ),
        cost_estimate=pl.CostEstimate(
            flops=flops, transcendentals=0, bytes_accessed=bytes_accessed),
    )(*inputs)

    out = out[:N].reshape(N, ho, wo, cout)                    # drop batch padding
    return jnp.transpose(out, (0, 3, 1, 2))                   # NHWC -> NCHW


def init_encoder_params(key):
    """Deterministic parameter init matching the Encoder's layer shapes (HWIO)."""
    params = []
    for i in range(5):
        cin, cout = _CHANNELS[i], _CHANNELS[i + 1]
        key, kw, kb = jax.random.split(key, 3)
        fan_in = 3 * 3 * cin
        scale = 1.0 / jnp.sqrt(fan_in)
        w = jax.random.uniform(kw, (3, 3, cin, cout), jnp.float32, -scale, scale)
        b = jax.random.uniform(kb, (cout,), jnp.float32, -scale, scale)
        params.append((w, b))
    return params


def _reference_forward(x_nchw, params):
    """Pure-JAX reference (lax conv) for correctness checking."""
    x = jnp.transpose(x_nchw, (0, 2, 3, 1))
    for w, b in params:
        x = jax.lax.conv_general_dilated(
            x, w, window_strides=(2, 2), padding=((1, 1), (1, 1)),
            dimension_numbers=("NHWC", "HWIO", "NHWC"))
        x = jax.nn.relu(x + b)
    return jnp.transpose(x, (0, 3, 1, 2))


if __name__ == "__main__":
    key = jax.random.PRNGKey(0)
    k_params, k_x = jax.random.split(key)

    params = init_encoder_params(k_params)
    x = jax.random.normal(k_x, (2, 3, 16, 16), jnp.float32)   # NCHW, like PyTorch

    out = jax.block_until_ready(encoder_forward(x, params))
    assert out.shape == (2, 256, 1, 1), out.shape

    ref = jax.block_until_ready(_reference_forward(x, params))
    assert jnp.allclose(out, ref, atol=1e-4, rtol=1e-4), \
        float(jnp.max(jnp.abs(out - ref)))

    print("KERNEL_OK")
</pallas_src>

<mosaic_0001>
module attributes {stable_mosaic.version = 11 : i64} {
  func.func @_encoder_fused_kernel(%arg0: i32, %arg1: memref<8x768xf32, #tpu.memory_space<vmem>>, %arg2: memref<768x1024xf32, #tpu.memory_space<vmem>>, %arg3: memref<1x1024xf32, #tpu.memory_space<vmem>>, %arg4: memref<1024x512xf32, #tpu.memory_space<vmem>>, %arg5: memref<1x512xf32, #tpu.memory_space<vmem>>, %arg6: memref<512x256xf32, #tpu.memory_space<vmem>>, %arg7: memref<1x256xf32, #tpu.memory_space<vmem>>, %arg8: memref<256x128xf32, #tpu.memory_space<vmem>>, %arg9: memref<1x128xf32, #tpu.memory_space<vmem>>, %arg10: memref<128x256xf32, #tpu.memory_space<vmem>>, %arg11: memref<1x256xf32, #tpu.memory_space<vmem>>, %arg12: memref<8x256xf32, #tpu.memory_space<vmem>>) attributes {dimension_semantics = [#tpu.dimension_semantics<parallel>], iteration_bounds = array<i64: 1>, scalar_prefetch = 0 : i64, scratch_operands = 0 : i64, tpu.core_type = #tpu.core_type<tc>, window_params = [{transform_indices = @transform_0, window_bounds = array<i64: 8, 768>}, {pipeline_mode = #tpu.pipeline_mode<synchronous>, transform_indices = @transform_1, window_bounds = array<i64: 768, 1024>}, {pipeline_mode = #tpu.pipeline_mode<synchronous>, transform_indices = @transform_2, window_bounds = array<i64: 1, 1024>}, {pipeline_mode = #tpu.pipeline_mode<synchronous>, transform_indices = @transform_3, window_bounds = array<i64: 1024, 512>}, {pipeline_mode = #tpu.pipeline_mode<synchronous>, transform_indices = @transform_4, window_bounds = array<i64: 1, 512>}, {pipeline_mode = #tpu.pipeline_mode<synchronous>, transform_indices = @transform_5, window_bounds = array<i64: 512, 256>}, {pipeline_mode = #tpu.pipeline_mode<synchronous>, transform_indices = @transform_6, window_bounds = array<i64: 1, 256>}, {pipeline_mode = #tpu.pipeline_mode<synchronous>, transform_indices = @transform_7, window_bounds = array<i64: 256, 128>}, {pipeline_mode = #tpu.pipeline_mode<synchronous>, transform_indices = @transform_8, window_bounds = array<i64: 1, 128>}, {pipeline_mode = #tpu.pipeline_mode<synchronous>, transform_indices = @transform_9, window_bounds = array<i64: 128, 256>}, {pipeline_mode = #tpu.pipeline_mode<synchronous>, transform_indices = @transform_10, window_bounds = array<i64: 1, 256>}, {transform_indices = @transform_11, window_bounds = array<i64: 8, 256>}]} {
    %c0 = arith.constant 0 : index
    %c0_0 = arith.constant 0 : index
    %0 = vector.load %arg1[%c0, %c0_0] : memref<8x768xf32, #tpu.memory_space<vmem>>, vector<8x768xf32>
    %c0_1 = arith.constant 0 : index
    %c0_2 = arith.constant 0 : index
    %1 = vector.load %arg2[%c0_1, %c0_2] : memref<768x1024xf32, #tpu.memory_space<vmem>>, vector<768x1024xf32>
    %cst = arith.constant dense<0.000000e+00> : vector<8x1024xf32>
    %2 = tpu.matmul %0, %1, %cst {dimension_numbers = #tpu.dot_dimension_numbers<[1], [0], [0], [1], [0, 0, 1, 1], [], []>} : vector<8x768xf32>, vector<768x1024xf32>, vector<8x1024xf32> -> vector<8x1024xf32>
    %c0_3 = arith.constant 0 : index
    %c0_4 = arith.constant 0 : index
    %3 = vector.load %arg3[%c0_3, %c0_4] : memref<1x1024xf32, #tpu.memory_space<vmem>>, vector<1x1024xf32>
    %4 = vector.broadcast %3 : vector<1x1024xf32> to vector<8x1024xf32>
    %5 = arith.addf %2, %4 : vector<8x1024xf32>
    %cst_5 = arith.constant 0.000000e+00 : f32
    %6 = vector.broadcast %cst_5 : f32 to vector<8x1024xf32>
    %7 = arith.maximumf %5, %6 : vector<8x1024xf32>
    %c0_6 = arith.constant 0 : index
    %c0_7 = arith.constant 0 : index
    %8 = vector.load %arg4[%c0_6, %c0_7] : memref<1024x512xf32, #tpu.memory_space<vmem>>, vector<1024x512xf32>
    %cst_8 = arith.constant dense<0.000000e+00> : vector<8x512xf32>
    %9 = tpu.matmul %7, %8, %cst_8 {dimension_numbers = #tpu.dot_dimension_numbers<[1], [0], [0], [1], [0, 0, 1, 1], [], []>} : vector<8x1024xf32>, vector<1024x512xf32>, vector<8x512xf32> -> vector<8x512xf32>
    %c0_9 = arith.constant 0 : index
    %c0_10 = arith.constant 0 : index
    %10 = vector.load %arg5[%c0_9, %c0_10] : memref<1x512xf32, #tpu.memory_space<vmem>>, vector<1x512xf32>
    %11 = vector.broadcast %10 : vector<1x512xf32> to vector<8x512xf32>
    %12 = arith.addf %9, %11 : vector<8x512xf32>
    %cst_11 = arith.constant 0.000000e+00 : f32
    %13 = vector.broadcast %cst_11 : f32 to vector<8x512xf32>
    %14 = arith.maximumf %12, %13 : vector<8x512xf32>
    %c0_12 = arith.constant 0 : index
    %c0_13 = arith.constant 0 : index
    %15 = vector.load %arg6[%c0_12, %c0_13] : memref<512x256xf32, #tpu.memory_space<vmem>>, vector<512x256xf32>
    %cst_14 = arith.constant dense<0.000000e+00> : vector<8x256xf32>
    %16 = tpu.matmul %14, %15, %cst_14 {dimension_numbers = #tpu.dot_dimension_numbers<[1], [0], [0], [1], [0, 0, 1, 1], [], []>} : vector<8x512xf32>, vector<512x256xf32>, vector<8x256xf32> -> vector<8x256xf32>
    %c0_15 = arith.constant 0 : index
    %c0_16 = arith.constant 0 : index
    %17 = vector.load %arg7[%c0_15, %c0_16] : memref<1x256xf32, #tpu.memory_space<vmem>>, vector<1x256xf32>
    %18 = vector.broadcast %17 : vector<1x256xf32> to vector<8x256xf32>
    %19 = arith.addf %16, %18 : vector<8x256xf32>
    %cst_17 = arith.constant 0.000000e+00 : f32
    %20 = vector.broadcast %cst_17 : f32 to vector<8x256xf32>
    %21 = arith.maximumf %19, %20 : vector<8x256xf32>
    %c0_18 = arith.constant 0 : index
    %c0_19 = arith.constant 0 : index
    %22 = vector.load %arg8[%c0_18, %c0_19] : memref<256x128xf32, #tpu.memory_space<vmem>>, vector<256x128xf32>
    %cst_20 = arith.constant dense<0.000000e+00> : vector<8x128xf32>
    %23 = tpu.matmul %21, %22, %cst_20 {dimension_numbers = #tpu.dot_dimension_numbers<[1], [0], [0], [1], [0, 0, 1, 1], [], []>} : vector<8x256xf32>, vector<256x128xf32>, vector<8x128xf32> -> vector<8x128xf32>
    %c0_21 = arith.constant 0 : index
    %c0_22 = arith.constant 0 : index
    %24 = vector.load %arg9[%c0_21, %c0_22] : memref<1x128xf32, #tpu.memory_space<vmem>>, vector<1x128xf32>
    %25 = vector.broadcast %24 : vector<1x128xf32> to vector<8x128xf32>
    %26 = arith.addf %23, %25 : vector<8x128xf32>
    %cst_23 = arith.constant 0.000000e+00 : f32
    %27 = vector.broadcast %cst_23 : f32 to vector<8x128xf32>
    %28 = arith.maximumf %26, %27 : vector<8x128xf32>
    %c0_24 = arith.constant 0 : index
    %c0_25 = arith.constant 0 : index
    %29 = vector.load %arg10[%c0_24, %c0_25] : memref<128x256xf32, #tpu.memory_space<vmem>>, vector<128x256xf32>
    %cst_26 = arith.constant dense<0.000000e+00> : vector<8x256xf32>
    %30 = tpu.matmul %28, %29, %cst_26 {dimension_numbers = #tpu.dot_dimension_numbers<[1], [0], [0], [1], [0, 0, 1, 1], [], []>} : vector<8x128xf32>, vector<128x256xf32>, vector<8x256xf32> -> vector<8x256xf32>
    %c0_27 = arith.constant 0 : index
    %c0_28 = arith.constant 0 : index
    %31 = vector.load %arg11[%c0_27, %c0_28] : memref<1x256xf32, #tpu.memory_space<vmem>>, vector<1x256xf32>
    %32 = vector.broadcast %31 : vector<1x256xf32> to vector<8x256xf32>
    %33 = arith.addf %30, %32 : vector<8x256xf32>
    %cst_29 = arith.constant 0.000000e+00 : f32
    %34 = vector.broadcast %cst_29 : f32 to vector<8x256xf32>
    %35 = arith.maximumf %33, %34 : vector<8x256xf32>
    %c0_30 = arith.constant 0 : index
    %c0_31 = arith.constant 0 : index
    %36 = vector.load %arg12[%c0_30, %c0_31] : memref<8x256xf32, #tpu.memory_space<vmem>>, vector<8x256xf32>
    tpu.vector_store %arg12[%c0_30, %c0_31], %35 {strides = array<i32>} : memref<8x256xf32, #tpu.memory_space<vmem>>, vector<8x256xf32>,
    return
  }
  func.func @transform_0(%arg0: i32) -> (i32, i32) {
    %c0_i32 = arith.constant 0 : i32
    %c0_i32_0 = arith.constant 0 : i32
    return %arg0, %c0_i32 : i32, i32
  }
  func.func @transform_1(%arg0: i32) -> (i32, i32) {
    %c0_i32 = arith.constant 0 : i32
    %c0_i32_0 = arith.constant 0 : i32
    %c0_i32_1 = arith.constant 0 : i32
    return %c0_i32, %c0_i32_0 : i32, i32
  }
  func.func @transform_2(%arg0: i32) -> (i32, i32) {
    %c0_i32 = arith.constant 0 : i32
    %c0_i32_0 = arith.constant 0 : i32
    %c0_i32_1 = arith.constant 0 : i32
    return %c0_i32, %c0_i32_0 : i32, i32
  }
  func.func @transform_3(%arg0: i32) -> (i32, i32) {
    %c0_i32 = arith.constant 0 : i32
    %c0_i32_0 = arith.constant 0 : i32
    %c0_i32_1 = arith.constant 0 : i32
    return %c0_i32, %c0_i32_0 : i32, i32
  }
  func.func @transform_4(%arg0: i32) -> (i32, i32) {
    %c0_i32 = arith.constant 0 : i32
    %c0_i32_0 = arith.constant 0 : i32
    %c0_i32_1 = arith.constant 0 : i32
    return %c0_i32, %c0_i32_0 : i32, i32
  }
  func.func @transform_5(%arg0: i32) -> (i32, i32) {
    %c0_i32 = arith.constant 0 : i32
    %c0_i32_0 = arith.constant 0 : i32
    %c0_i32_1 = arith.constant 0 : i32
    return %c0_i32, %c0_i32_0 : i32, i32
  }
  func.func @transform_6(%arg0: i32) -> (i32, i32) {
    %c0_i32 = arith.constant 0 : i32
    %c0_i32_0 = arith.constant 0 : i32
    %c0_i32_1 = arith.constant 0 : i32
    return %c0_i32, %c0_i32_0 : i32, i32
  }
  func.func @transform_7(%arg0: i32) -> (i32, i32) {
    %c0_i32 = arith.constant 0 : i32
    %c0_i32_0 = arith.constant 0 : i32
    %c0_i32_1 = arith.constant 0 : i32
    return %c0_i32, %c0_i32_0 : i32, i32
  }
  func.func @transform_8(%arg0: i32) -> (i32, i32) {
    %c0_i32 = arith.constant 0 : i32
    %c0_i32_0 = arith.constant 0 : i32
    %c0_i32_1 = arith.constant 0 : i32
    return %c0_i32, %c0_i32_0 : i32, i32
  }
  func.func @transform_9(%arg0: i32) -> (i32, i32) {
    %c0_i32 = arith.constant 0 : i32
    %c0_i32_0 = arith.constant 0 : i32
    %c0_i32_1 = arith.constant 0 : i32
    return %c0_i32, %c0_i32_0 : i32, i32
  }
  func.func @transform_10(%arg0: i32) -> (i32, i32) {
    %c0_i32 = arith.constant 0 : i32
    %c0_i32_0 = arith.constant 0 : i32
    %c0_i32_1 = arith.constant 0 : i32
    return %c0_i32, %c0_i32_0 : i32, i32
  }
  func.func @transform_11(%arg0: i32) -> (i32, i32) {
    %c0_i32 = arith.constant 0 : i32
    %c0_i32_0 = arith.constant 0 : i32
    return %arg0, %c0_i32 : i32, i32
  }
}

</mosaic_0001>

<llo_original>
// kernel: encoder_forward.1
$region0: #{encoder_forward.1}
  #allocation0 [shape = 'u32[]', space=smem, size = 0x4, offset = 0x4, fixed_abs, tag = 'smem constant byte address 0x4 - core index']
  #allocation1 [shape = 'u32[144,128]{1,0:T(1,128)}', space=vmem, size = 0x12000, scoped, tag = 'internal scratch']
  %s0 = inlined_call_operand.vmem [shape: f32[8,768], index: 0, kind: input, shape index: {}]
  %s1 = inlined_call_operand.vmem [shape: f32[768,1024], index: 1, kind: input, shape index: {}]
  %s2 = inlined_call_operand.vmem [shape: f32[1,1024], index: 2, kind: input, shape index: {}]
  %s3 = inlined_call_operand.vmem [shape: f32[1024,512], index: 3, kind: input, shape index: {}]
  %s4 = inlined_call_operand.vmem [shape: f32[1,512], index: 4, kind: input, shape index: {}]
  %s5 = inlined_call_operand.vmem [shape: f32[512,256], index: 5, kind: input, shape index: {}]
  %s6 = inlined_call_operand.vmem [shape: f32[1,256], index: 6, kind: input, shape index: {}]
  %s7 = inlined_call_operand.vmem [shape: f32[256,128], index: 7, kind: input, shape index: {}]
  %s8 = inlined_call_operand.vmem [shape: f32[1,128], index: 8, kind: input, shape index: {}]
  %s9 = inlined_call_operand.vmem [shape: f32[128,256], index: 9, kind: input, shape index: {}]
  %s10 = inlined_call_operand.vmem [shape: f32[1,256], index: 10, kind: input, shape index: {}]
  %s11 = inlined_call_operand.vmem [shape: f32[8,256], index: 11, kind: output, shape index: {}]
  %s12 = sld [smem:[#allocation0]]
  $region54: #{encoder_forward.1} parent=0
    _
  %s14 = ssub.s32 1, %s12
  %s15 = scalar_select 0, %s14, %s12
  // Predicated region
  $region2: #{encoder_forward.1} parent=0 // pred_check
    _
  $region3: #{encoder_forward.1} parent=0 // pred_check_branch
    %17 = sbr.rel (0) target = $region5
  $region4: #{encoder_forward.1} parent=0 // pred_region
    _
  $region5: #{encoder_forward.1} parent=0 // pred_fallthru
    _
  // Predicated region
  $region6: #{encoder_forward.1} parent=0 // pred_check
    _
  $region7: #{encoder_forward.1} parent=0 // pred_check_branch
    %19 = sbr.rel (0) target = $region9
  $region8: #{encoder_forward.1} parent=0 // pred_region
    _
  $region9: #{encoder_forward.1} parent=0 // pred_fallthru
    _
  // Predicated region
  $region10: #{encoder_forward.1} parent=0 // pred_check
    _
  $region11: #{encoder_forward.1} parent=0 // pred_check_branch
    %21 = sbr.rel (0) target = $region13
  $region12: #{encoder_forward.1} parent=0 // pred_region
    _
  $region13: #{encoder_forward.1} parent=0 // pred_fallthru
    _
  // Predicated region
  $region14: #{encoder_forward.1} parent=0 // pred_check
    _
  $region15: #{encoder_forward.1} parent=0 // pred_check_branch
    %23 = sbr.rel (0) target = $region17
  $region16: #{encoder_forward.1} parent=0 // pred_region
    _
  $region17: #{encoder_forward.1} parent=0 // pred_fallthru
    _
  // Predicated region
  $region18: #{encoder_forward.1} parent=0 // pred_check
    _
  $region19: #{encoder_forward.1} parent=0 // pred_check_branch
    %25 = sbr.rel (0) target = $region21
  $region20: #{encoder_forward.1} parent=0 // pred_region
    _
  $region21: #{encoder_forward.1} parent=0 // pred_fallthru
    _
  // Predicated region
  $region22: #{encoder_forward.1} parent=0 // pred_check
    _
  $region23: #{encoder_forward.1} parent=0 // pred_check_branch
    %27 = sbr.rel (0) target = $region25
  $region24: #{encoder_forward.1} parent=0 // pred_region
    _
  $region25: #{encoder_forward.1} parent=0 // pred_fallthru
    _
  // Predicated region
  $region26: #{encoder_forward.1} parent=0 // pred_check
    _
  $region27: #{encoder_forward.1} parent=0 // pred_check_branch
    %29 = sbr.rel (0) target = $region29
  $region28: #{encoder_forward.1} parent=0 // pred_region
    _
  $region29: #{encoder_forward.1} parent=0 // pred_fallthru
    _
  // Predicated region
  $region30: #{encoder_forward.1} parent=0 // pred_check
    _
  $region31: #{encoder_forward.1} parent=0 // pred_check_branch
    %31 = sbr.rel (0) target = $region33
  $region32: #{encoder_forward.1} parent=0 // pred_region
    _
  $region33: #{encoder_forward.1} parent=0 // pred_fallthru
    _
  // Predicated region
  $region34: #{encoder_forward.1} parent=0 // pred_check
    _
  $region35: #{encoder_forward.1} parent=0 // pred_check_branch
    %33 = sbr.rel (0) target = $region37
  $region36: #{encoder_forward.1} parent=0 // pred_region
    _
  $region37: #{encoder_forward.1} parent=0 // pred_fallthru
    _
  // Predicated region
  $region38: #{encoder_forward.1} parent=0 // pred_check
    _
  $region39: #{encoder_forward.1} parent=0 // pred_check_branch
    %35 = sbr.rel (0) target = $region41
  $region40: #{encoder_forward.1} parent=0 // pred_region
    _
  $region41: #{encoder_forward.1} parent=0 // pred_fallthru
    _
  // Predicated region
  $region42: #{encoder_forward.1} parent=0 // pred_check
    _
  $region43: #{encoder_forward.1} parent=0 // pred_check_branch
    %37 = sbr.rel (0) target = $region45
  $region44: #{encoder_forward.1} parent=0 // pred_region
    _
  $region45: #{encoder_forward.1} parent=0 // pred_fallthru
    _
  %v38 = vld [vmem:[%s0] sm:$0xff]
  %v39 = vld [vmem:[%s0 + $0x8] sm:$0xff]
  %v40 = vld [vmem:[%s0 + $0x10] sm:$0xff]
  %v41 = vld [vmem:[%s0 + $0x18] sm:$0xff]
  %v42 = vld [vmem:[%s0 + $0x20] sm:$0xff]
  %v43 = vld [vmem:[%s0 + $0x28] sm:$0xff]
  %v44 = vld [vmem:[%s1] sm:$0xff]
  %v45 = vld [vmem:[%s1 + $0x8] sm:$0xff]
  %v46 = vld [vmem:[%s1 + $0x10] sm:$0xff]
  %v47 = vld [vmem:[%s1 + $0x18] sm:$0xff]
  %v48 = vld [vmem:[%s1 + $0x20] sm:$0xff]
  %v49 = vld [vmem:[%s1 + $0x28] sm:$0xff]
  %v50 = vld [vmem:[%s1 + $0x30] sm:$0xff]
  %v51 = vld [vmem:[%s1 + $0x38] sm:$0xff]
  %v52 = vld [vmem:[%s1 + $0x40] sm:$0xff]
  %v53 = vld [vmem:[%s1 + $0x48] sm:$0xff]
  %v54 = vld [vmem:[%s1 + $0x50] sm:$0xff]
  %v55 = vld [vmem:[%s1 + $0x58] sm:$0xff]
  %v56 = vld [vmem:[%s1 + $0x60] sm:$0xff]
  %v57 = vld [vmem:[%s1 + $0x68] sm:$0xff]
  %v58 = vld [vmem:[%s1 + $0x70] sm:$0xff]
  %v59 = vld [vmem:[%s1 + $0x78] sm:$0xff]
  %v60 = vld [vmem:[%s1 + $0x80] sm:$0xff]
  %v61 = vld [vmem:[%s1 + $0x88] sm:$0xff]
  %v62 = vld [vmem:[%s1 + $0x90] sm:$0xff]
  %v63 = vld [vmem:[%s1 + $0x98] sm:$0xff]
  %v64 = vld [vmem:[%s1 + $0xa0] sm:$0xff]
  %v65 = vld [vmem:[%s1 + $0xa8] sm:$0xff]
  %v66 = vld [vmem:[%s1 + $0xb0] sm:$0xff]
  %v67 = vld [vmem:[%s1 + $0xb8] sm:$0xff]
  %v68 = vld [vmem:[%s1 + $0xc0] sm:$0xff]
  %v69 = vld [vmem:[%s1 + $0xc8] sm:$0xff]
  %v70 = vld [vmem:[%s1 + $0xd0] sm:$0xff]
  %v71 = vld [vmem:[%s1 + $0xd8] sm:$0xff]
  %v72 = vld [vmem:[%s1 + $0xe0] sm:$0xff]
  %v73 = vld [vmem:[%s1 + $0xe8] sm:$0xff]
  %v74 = vld [vmem:[%s1 + $0xf0] sm:$0xff]
  %v75 = vld [vmem:[%s1 + $0xf8] sm:$0xff]
  %v76 = vld [vmem:[%s1 + $0x100] sm:$0xff]
  %v77 = vld [vmem:[%s1 + $0x108] sm:$0xff]
  %v78 = vld [vmem:[%s1 + $0x110] sm:$0xff]
  %v79 = vld [vmem:[%s1 + $0x118] sm:$0xff]
  %v80 = vld [vmem:[%s1 + $0x120] sm:$0xff]
  %v81 = vld [vmem:[%s1 + $0x128] sm:$0xff]
  %v82 = vld [vmem:[%s1 + $0x130] sm:$0xff]
  %v83 = vld [vmem:[%s1 + $0x138] sm:$0xff]
  %v84 = vld [vmem:[%s1 + $0x140] sm:$0xff]
  %v85 = vld [vmem:[%s1 + $0x148] sm:$0xff]
  %v86 = vld [vmem:[%s1 + $0x150] sm:$0xff]
  %v87 = vld [vmem:[%s1 + $0x158] sm:$0xff]
  %v88 = vld [vmem:[%s1 + $0x160] sm:$0xff]
  %v89 = vld [vmem:[%s1 + $0x168] sm:$0xff]
  %v90 = vld [vmem:[%s1 + $0x170] sm:$0xff]
  %v91 = vld [vmem:[%s1 + $0x178] sm:$0xff]
  %v92 = vld [vmem:[%s1 + $0x180] sm:$0xff]
  %v93 = vld [vmem:[%s1 + $0x188] sm:$0xff]
  %v94 = vld [vmem:[%s1 + $0x190] sm:$0xff]
  %v95 = vld [vmem:[%s1 + $0x198] sm:$0xff]
  %v96 = vld [vmem:[%s1 + $0x1a0] sm:$0xff]
  %v97 = vld [vmem:[%s1 + $0x1a8] sm:$0xff]
  %v98 = vld [vmem:[%s1 + $0x1b0] sm:$0xff]
  %v99 = vld [vmem:[%s1 + $0x1b8] sm:$0xff]
  %v100 = vld [vmem:[%s1 + $0x1c0] sm:$0xff]
  %v101 = vld [vmem:[%s1 + $0x1c8] sm:$0xff]
  %v102 = vld [vmem:[%s1 + $0x1d0] sm:$0xff]
  %v103 = vld [vmem:[%s1 + $0x1d8] sm:$0xff]
  %v104 = vld [vmem:[%s1 + $0x1e0] sm:$0xff]
  %v105 = vld [vmem:[%s1 + $0x1e8] sm:$0xff]
  %v106 = vld [vmem:[%s1 + $0x1f0] sm:$0xff]
  %v107 = vld [vmem:[%s1 + $0x1f8] sm:$0xff]
  %v108 = vld [vmem:[%s1 + $0x200] sm:$0xff]
  %v109 = vld [vmem:[%s1 + $0x208] sm:$0xff]
  %v110 = vld [vmem:[%s1 + $0x210] sm:$0xff]
  %v111 = vld [vmem:[%s1 + $0x218] sm:$0xff]
  %v112 = vld [vmem:[%s1 + $0x220] sm:$0xff]
  %v113 = vld [vmem:[%s1 + $0x228] sm:$0xff]
  %v114 = vld [vmem:[%s1 + $0x230] sm:$0xff]
  %v115 = vld [vmem:[%s1 + $0x238] sm:$0xff]
  %v116 = vld [vmem:[%s1 + $0x240] sm:$0xff]
  %v117 = vld [vmem:[%s1 + $0x248] sm:$0xff]
  %v118 = vld [vmem:[%s1 + $0x250] sm:$0xff]
  %v119 = vld [vmem:[%s1 + $0x258] sm:$0xff]
  %v120 = vld [vmem:[%s1 + $0x260] sm:$0xff]
  %v121 = vld [vmem:[%s1 + $0x268] sm:$0xff]
  %v122 = vld [vmem:[%s1 + $0x270] sm:$0xff]
  %v123 = vld [vmem:[%s1 + $0x278] sm:$0xff]
  %v124 = vld [vmem:[%s1 + $0x280] sm:$0xff]
  %v125 = vld [vmem:[%s1 + $0x288] sm:$0xff]
  %v126 = vld [vmem:[%s1 + $0x290] sm:$0xff]
  %v127 = vld [vmem:[%s1 + $0x298] sm:$0xff]
  %v128 = vld [vmem:[%s1 + $0x2a0] sm:$0xff]
  %v129 = vld [vmem:[%s1 + $0x2a8] sm:$0xff]
  %v130 = vld [vmem:[%s1 + $0x2b0] sm:$0xff]
  %v131 = vld [vmem:[%s1 + $0x2b8] sm:$0xff]
  %v132 = vld [vmem:[%s1 + $0x2c0] sm:$0xff]
  %v133 = vld [vmem:[%s1 + $0x2c8] sm:$0xff]
  %v134 = vld [vmem:[%s1 + $0x2d0] sm:$0xff]
  %v135 = vld [vmem:[%s1 + $0x2d8] sm:$0xff]
  %v136 = vld [vmem:[%s1 + $0x2e0] sm:$0xff]
  %v137 = vld [vmem:[%s1 + $0x2e8] sm:$0xff]
  %v138 = vld [vmem:[%s1 + $0x2f0] sm:$0xff]
  %v139 = vld [vmem:[%s1 + $0x2f8] sm:$0xff]
  %v140 = vld [vmem:[%s1 + $0x300] sm:$0xff]
  %v141 = vld [vmem:[%s1 + $0x308] sm:$0xff]
  %v142 = vld [vmem:[%s1 + $0x310] sm:$0xff]
  %v143 = vld [vmem:[%s1 + $0x318] sm:$0xff]
  %v144 = vld [vmem:[%s1 + $0x320] sm:$0xff]
  %v145 = vld [vmem:[%s1 + $0x328] sm:$0xff]
  %v146 = vld [vmem:[%s1 + $0x330] sm:$0xff]
  %v147 = vld [vmem:[%s1 + $0x338] sm:$0xff]
  %v148 = vld [vmem:[%s1 + $0x340] sm:$0xff]
  %v149 = vld [vmem:[%s1 + $0x348] sm:$0xff]
  %v150 = vld [vmem:[%s1 + $0x350] sm:$0xff]
  %v151 = vld [vmem:[%s1 + $0x358] sm:$0xff]
  %v152 = vld [vmem:[%s1 + $0x360] sm:$0xff]
  %v153 = vld [vmem:[%s1 + $0x368] sm:$0xff]
  %v154 = vld [vmem:[%s1 + $0x370] sm:$0xff]
  %v155 = vld [vmem:[%s1 + $0x378] sm:$0xff]
  %v156 = vld [vmem:[%s1 + $0x380] sm:$0xff]
  %v157 = vld [vmem:[%s1 + $0x388] sm:$0xff]
  %v158 = vld [vmem:[%s1 + $0x390] sm:$0xff]
  %v159 = vld [vmem:[%s1 + $0x398] sm:$0xff]
  %v160 = vld [vmem:[%s1 + $0x3a0] sm:$0xff]
  %v161 = vld [vmem:[%s1 + $0x3a8] sm:$0xff]
  %v162 = vld [vmem:[%s1 + $0x3b0] sm:$0xff]
  %v163 = vld [vmem:[%s1 + $0x3b8] sm:$0xff]
  %v164 = vld [vmem:[%s1 + $0x3c0] sm:$0xff]
  %v165 = vld [vmem:[%s1 + $0x3c8] sm:$0xff]
  %v166 = vld [vmem:[%s1 + $0x3d0] sm:$0xff]
  %v167 = vld [vmem:[%s1 + $0x3d8] sm:$0xff]
  %v168 = vld [vmem:[%s1 + $0x3e0] sm:$0xff]
  %v169 = vld [vmem:[%s1 + $0x3e8] sm:$0xff]
  %v170 = vld [vmem:[%s1 + $0x3f0] sm:$0xff]
  %v171 = vld [vmem:[%s1 + $0x3f8] sm:$0xff]
  %v172 = vld [vmem:[%s1 + $0x400] sm:$0xff]
  %v173 = vld [vmem:[%s1 + $0x408] sm:$0xff]
  %v174 = vld [vmem:[%s1 + $0x410] sm:$0xff]
  %v175 = vld [vmem:[%s1 + $0x418] sm:$0xff]
  %v176 = vld [vmem:[%s1 + $0x420] sm:$0xff]
  %v177 = vld [vmem:[%s1 + $0x428] sm:$0xff]
  %v178 = vld [vmem:[%s1 + $0x430] sm:$0xff]
  %v179 = vld [vmem:[%s1 + $0x438] sm:$0xff]
  %v180 = vld [vmem:[%s1 + $0x440] sm:$0xff]
  %v181 = vld [vmem:[%s1 + $0x448] sm:$0xff]
  %v182 = vld [vmem:[%s1 + $0x450] sm:$0xff]
  %v183 = vld [vmem:[%s1 + $0x458] sm:$0xff]
  %v184 = vld [vmem:[%s1 + $0x460] sm:$0xff]
  %v185 = vld [vmem:[%s1 + $0x468] sm:$0xff]
  %v186 = vld [vmem:[%s1 + $0x470] sm:$0xff]
  %v187 = vld [vmem:[%s1 + $0x478] sm:$0xff]
  %v188 = vld [vmem:[%s1 + $0x480] sm:$0xff]
  %v189 = vld [vmem:[%s1 + $0x488] sm:$0xff]
  %v190 = vld [vmem:[%s1 + $0x490] sm:$0xff]
  %v191 = vld [vmem:[%s1 + $0x498] sm:$0xff]
  %v192 = vld [vmem:[%s1 + $0x4a0] sm:$0xff]
  %v193 = vld [vmem:[%s1 + $0x4a8] sm:$0xff]
  %v194 = vld [vmem:[%s1 + $0x4b0] sm:$0xff]
  %v195 = vld [vmem:[%s1 + $0x4b8] sm:$0xff]
  %v196 = vld [vmem:[%s1 + $0x4c0] sm:$0xff]
  %v197 = vld [vmem:[%s1 + $0x4c8] sm:$0xff]
  %v198 = vld [vmem:[%s1 + $0x4d0] sm:$0xff]
  %v199 = vld [vmem:[%s1 + $0x4d8] sm:$0xff]
  %v200 = vld [vmem:[%s1 + $0x4e0] sm:$0xff]
  %v201 = vld [vmem:[%s1 + $0x4e8] sm:$0xff]
  %v202 = vld [vmem:[%s1 + $0x4f0] sm:$0xff]
  %v203 = vld [vmem:[%s1 + $0x4f8] sm:$0xff]
  %v204 = vld [vmem:[%s1 + $0x500] sm:$0xff]
  %v205 = vld [vmem:[%s1 + $0x508] sm:$0xff]
  %v206 = vld [vmem:[%s1 + $0x510] sm:$0xff]
  %v207 = vld [vmem:[%s1 + $0x518] sm:$0xff]
  %v208 = vld [vmem:[%s1 + $0x520] sm:$0xff]
  %v209 = vld [vmem:[%s1 + $0x528] sm:$0xff]
  %v210 = vld [vmem:[%s1 + $0x530] sm:$0xff]
  %v211 = vld [vmem:[%s1 + $0x538] sm:$0xff]
  %v212 = vld [vmem:[%s1 + $0x540] sm:$0xff]
  %v213 = vld [vmem:[%s1 + $0x548] sm:$0xff]
  %v214 = vld [vmem:[%s1 + $0x550] sm:$0xff]
  %v215 = vld [vmem:[%s1 + $0x558] sm:$0xff]
  %v216 = vld [vmem:[%s1 + $0x560] sm:$0xff]
  %v217 = vld [vmem:[%s1 + $0x568] sm:$0xff]
  %v218 = vld [vmem:[%s1 + $0x570] sm:$0xff]
  %v219 = vld [vmem:[%s1 + $0x578] sm:$0xff]
  %v220 = vld [vmem:[%s1 + $0x580] sm:$0xff]
  %v221 = vld [vmem:[%s1 + $0x588] sm:$0xff]
  %v222 = vld [vmem:[%s1 + $0x590] sm:$0xff]
  %v223 = vld [vmem:[%s1 + $0x598] sm:$0xff]
  %v224 = vld [vmem:[%s1 + $0x5a0] sm:$0xff]
  %v225 = vld [vmem:[%s1 + $0x5a8] sm:$0xff]
  %v226 = vld [vmem:[%s1 + $0x5b0] sm:$0xff]
  %v227 = vld [vmem:[%s1 + $0x5b8] sm:$0xff]
  %v228 = vld [vmem:[%s1 + $0x5c0] sm:$0xff]
  %v229 = vld [vmem:[%s1 + $0x5c8] sm:$0xff]
  %v230 = vld [vmem:[%s1 + $0x5d0] sm:$0xff]
  %v231 = vld [vmem:[%s1 + $0x5d8] sm:$0xff]
  %v232 = vld [vmem:[%s1 + $0x5e0] sm:$0xff]
  %v233 = vld [vmem:[%s1 + $0x5e8] sm:$0xff]
  %v234 = vld [vmem:[%s1 + $0x5f0] sm:$0xff]
  %v235 = vld [vmem:[%s1 + $0x5f8] sm:$0xff]
  %v236 = vld [vmem:[%s1 + $0x600] sm:$0xff]
  %v237 = vld [vmem:[%s1 + $0x608] sm:$0xff]
  %v238 = vld [vmem:[%s1 + $0x610] sm:$0xff]
  %v239 = vld [vmem:[%s1 + $0x618] sm:$0xff]
  %v240 = vld [vmem:[%s1 + $0x620] sm:$0xff]
  %v241 = vld [vmem:[%s1 + $0x628] sm:$0xff]
  %v242 = vld [vmem:[%s1 + $0x630] sm:$0xff]
  %v243 = vld [vmem:[%s1 + $0x638] sm:$0xff]
  %v244 = vld [vmem:[%s1 + $0x640] sm:$0xff]
  %v245 = vld [vmem:[%s1 + $0x648] sm:$0xff]
  %v246 = vld [vmem:[%s1 + $0x650] sm:$0xff]
  %v247 = vld [vmem:[%s1 + $0x658] sm:$0xff]
  %v248 = vld [vmem:[%s1 + $0x660] sm:$0xff]
  %v249 = vld [vmem:[%s1 + $0x668] sm:$0xff]
  %v250 = vld [vmem:[%s1 + $0x670] sm:$0xff]
  %v251 = vld [vmem:[%s1 + $0x678] sm:$0xff]
  %v252 = vld [vmem:[%s1 + $0x680] sm:$0xff]
  %v253 = vld [vmem:[%s1 + $0x688] sm:$0xff]
  %v254 = vld [vmem:[%s1 + $0x690] sm:$0xff]
  %v255 = vld [vmem:[%s1 + $0x698] sm:$0xff]
  %v256 = vld [vmem:[%s1 + $0x6a0] sm:$0xff]
  %v257 = vld [vmem:[%s1 + $0x6a8] sm:$0xff]
  %v258 = vld [vmem:[%s1 + $0x6b0] sm:$0xff]
  %v259 = vld [vmem:[%s1 + $0x6b8] sm:$0xff]
  %v260 = vld [vmem:[%s1 + $0x6c0] sm:$0xff]
  %v261 = vld [vmem:[%s1 + $0x6c8] sm:$0xff]
  %v262 = vld [vmem:[%s1 + $0x6d0] sm:$0xff]
  %v263 = vld [vmem:[%s1 + $0x6d8] sm:$0xff]
  %v264 = vld [vmem:[%s1 + $0x6e0] sm:$0xff]
  %v265 = vld [vmem:[%s1 + $0x6e8] sm:$0xff]
  %v266 = vld [vmem:[%s1 + $0x6f0] sm:$0xff]
  %v267 = vld [vmem:[%s1 + $0x6f8] sm:$0xff]
  %v268 = vld [vmem:[%s1 + $0x700] sm:$0xff]
  %v269 = vld [vmem:[%s1 + $0x708] sm:$0xff]
  %v270 = vld [vmem:[%s1 + $0x710] sm:$0xff]
  %v271 = vld [vmem:[%s1 + $0x718] sm:$0xff]
  %v272 = vld [vmem:[%s1 + $0x720] sm:$0xff]
  %v273 = vld [vmem:[%s1 + $0x728] sm:$0xff]
  %v274 = vld [vmem:[%s1 + $0x730] sm:$0xff]
  %v275 = vld [vmem:[%s1 + $0x738] sm:$0xff]
  %v276 = vld [vmem:[%s1 + $0x740] sm:$0xff]
  %v277 = vld [vmem:[%s1 + $0x748] sm:$0xff]
  %v278 = vld [vmem:[%s1 + $0x750] sm:$0xff]
  %v279 = vld [vmem:[%s1 + $0x758] sm:$0xff]
  %v280 = vld [vmem:[%s1 + $0x760] sm:$0xff]
  %v281 = vld [vmem:[%s1 + $0x768] sm:$0xff]
  %v282 = vld [vmem:[%s1 + $0x770] sm:$0xff]
  %v283 = vld [vmem:[%s1 + $0x778] sm:$0xff]
  %v284 = vld [vmem:[%s1 + $0x780] sm:$0xff]
  %v285 = vld [vmem:[%s1 + $0x788] sm:$0xff]
  %v286 = vld [vmem:[%s1 + $0x790] sm:$0xff]
  %v287 = vld [vmem:[%s1 + $0x798] sm:$0xff]
  %v288 = vld [vmem:[%s1 + $0x7a0] sm:$0xff]
  %v289 = vld [vmem:[%s1 + $0x7a8] sm:$0xff]
  %v290 = vld [vmem:[%s1 + $0x7b0] sm:$0xff]
  %v291 = vld [vmem:[%s1 + $0x7b8] sm:$0xff]
  %v292 = vld [vmem:[%s1 + $0x7c0] sm:$0xff]
  %v293 = vld [vmem:[%s1 + $0x7c8] sm:$0xff]
  %v294 = vld [vmem:[%s1 + $0x7d0] sm:$0xff]
  %v295 = vld [vmem:[%s1 + $0x7d8] sm:$0xff]
  %v296 = vld [vmem:[%s1 + $0x7e0] sm:$0xff]
  %v297 = vld [vmem:[%s1 + $0x7e8] sm:$0xff]
  %v298 = vld [vmem:[%s1 + $0x7f0] sm:$0xff]
  %v299 = vld [vmem:[%s1 + $0x7f8] sm:$0xff]
  %v300 = vld [vmem:[%s1 + $0x800] sm:$0xff]
  %v301 = vld [vmem:[%s1 + $0x808] sm:$0xff]
  %v302 = vld [vmem:[%s1 + $0x810] sm:$0xff]
  %v303 = vld [vmem:[%s1 + $0x818] sm:$0xff]
  %v304 = vld [vmem:[%s1 + $0x820] sm:$0xff]
  %v305 = vld [vmem:[%s1 + $0x828] sm:$0xff]
  %v306 = vld [vmem:[%s1 + $0x830] sm:$0xff]
  %v307 = vld [vmem:[%s1 + $0x838] sm:$0xff]
  %v308 = vld [vmem:[%s1 + $0x840] sm:$0xff]
  %v309 = vld [vmem:[%s1 + $0x848] sm:$0xff]
  %v310 = vld [vmem:[%s1 + $0x850] sm:$0xff]
  %v311 = vld [vmem:[%s1 + $0x858] sm:$0xff]
  %v312 = vld [vmem:[%s1 + $0x860] sm:$0xff]
  %v313 = vld [vmem:[%s1 + $0x868] sm:$0xff]
  %v314 = vld [vmem:[%s1 + $0x870] sm:$0xff]
  %v315 = vld [vmem:[%s1 + $0x878] sm:$0xff]
  %v316 = vld [vmem:[%s1 + $0x880] sm:$0xff]
  %v317 = vld [vmem:[%s1 + $0x888] sm:$0xff]
  %v318 = vld [vmem:[%s1 + $0x890] sm:$0xff]
  %v319 = vld [vmem:[%s1 + $0x898] sm:$0xff]
  %v320 = vld [vmem:[%s1 + $0x8a0] sm:$0xff]
  %v321 = vld [vmem:[%s1 + $0x8a8] sm:$0xff]
  %v322 = vld [vmem:[%s1 + $0x8b0] sm:$0xff]
  %v323 = vld [vmem:[%s1 + $0x8b8] sm:$0xff]
  %v324 = vld [vmem:[%s1 + $0x8c0] sm:$0xff]
  %v325 = vld [vmem:[%s1 + $0x8c8] sm:$0xff]
  %v326 = vld [vmem:[%s1 + $0x8d0] sm:$0xff]
  %v327 = vld [vmem:[%s1 + $0x8d8] sm:$0xff]
  %v328 = vld [vmem:[%s1 + $0x8e0] sm:$0xff]
  %v329 = vld [vmem:[%s1 + $0x8e8] sm:$0xff]
  %v330 = vld [vmem:[%s1 + $0x8f0] sm:$0xff]
  %v331 = vld [vmem:[%s1 + $0x8f8] sm:$0xff]
  %v332 = vld [vmem:[%s1 + $0x900] sm:$0xff]
  %v333 = vld [vmem:[%s1 + $0x908] sm:$0xff]
  %v334 = vld [vmem:[%s1 + $0x910] sm:$0xff]
  %v335 = vld [vmem:[%s1 + $0x918] sm:$0xff]
  %v336 = vld [vmem:[%s1 + $0x920] sm:$0xff]
  %v337 = vld [vmem:[%s1 + $0x928] sm:$0xff]
  %v338 = vld [vmem:[%s1 + $0x930] sm:$0xff]
  %v339 = vld [vmem:[%s1 + $0x938] sm:$0xff]
  %v340 = vld [vmem:[%s1 + $0x940] sm:$0xff]
  %v341 = vld [vmem:[%s1 + $0x948] sm:$0xff]
  %v342 = vld [vmem:[%s1 + $0x950] sm:$0xff]
  %v343 = vld [vmem:[%s1 + $0x958] sm:$0xff]
  %v344 = vld [vmem:[%s1 + $0x960] sm:$0xff]
  %v345 = vld [vmem:[%s1 + $0x968] sm:$0xff]
  %v346 = vld [vmem:[%s1 + $0x970] sm:$0xff]
  %v347 = vld [vmem:[%s1 + $0x978] sm:$0xff]
  %v348 = vld [vmem:[%s1 + $0x980] sm:$0xff]
  %v349 = vld [vmem:[%s1 + $0x988] sm:$0xff]
  %v350 = vld [vmem:[%s1 + $0x990] sm:$0xff]
  %v351 = vld [vmem:[%s1 + $0x998] sm:$0xff]
  %v352 = vld [vmem:[%s1 + $0x9a0] sm:$0xff]
  %v353 = vld [vmem:[%s1 + $0x9a8] sm:$0xff]
  %v354 = vld [vmem:[%s1 + $0x9b0] sm:$0xff]
  %v355 = vld [vmem:[%s1 + $0x9b8] sm:$0xff]
  %v356 = vld [vmem:[%s1 + $0x9c0] sm:$0xff]
  %v357 = vld [vmem:[%s1 + $0x9c8] sm:$0xff]
  %v358 = vld [vmem:[%s1 + $0x9d0] sm:$0xff]
  %v359 = vld [vmem:[%s1 + $0x9d8] sm:$0xff]
  %v360 = vld [vmem:[%s1 + $0x9e0] sm:$0xff]
  %v361 = vld [vmem:[%s1 + $0x9e8] sm:$0xff]
  %v362 = vld [vmem:[%s1 + $0x9f0] sm:$0xff]
  %v363 = vld [vmem:[%s1 + $0x9f8] sm:$0xff]
  %v364 = vld [vmem:[%s1 + $0xa00] sm:$0xff]
  %v365 = vld [vmem:[%s1 + $0xa08] sm:$0xff]
  %v366 = vld [vmem:[%s1 + $0xa10] sm:$0xff]
  %v367 = vld [vmem:[%s1 + $0xa18] sm:$0xff]
  %v368 = vld [vmem:[%s1 + $0xa20] sm:$0xff]
  %v369 = vld [vmem:[%s1 + $0xa28] sm:$0xff]
  %v370 = vld [vmem:[%s1 + $0xa30] sm:$0xff]
  %v371 = vld [vmem:[%s1 + $0xa38] sm:$0xff]
  %v372 = vld [vmem:[%s1 + $0xa40] sm:$0xff]
  %v373 = vld [vmem:[%s1 + $0xa48] sm:$0xff]
  %v374 = vld [vmem:[%s1 + $0xa50] sm:$0xff]
  %v375 = vld [vmem:[%s1 + $0xa58] sm:$0xff]
  %v376 = vld [vmem:[%s1 + $0xa60] sm:$0xff]
  %v377 = vld [vmem:[%s1 + $0xa68] sm:$0xff]
  %v378 = vld [vmem:[%s1 + $0xa70] sm:$0xff]
  %v379 = vld [vmem:[%s1 + $0xa78] sm:$0xff]
  %v380 = vld [vmem:[%s1 + $0xa80] sm:$0xff]
  %v381 = vld [vmem:[%s1 + $0xa88] sm:$0xff]
  %v382 = vld [vmem:[%s1 + $0xa90] sm:$0xff]
  %v383 = vld [vmem:[%s1 + $0xa98] sm:$0xff]
  %v384 = vld [vmem:[%s1 + $0xaa0] sm:$0xff]
  %v385 = vld [vmem:[%s1 + $0xaa8] sm:$0xff]
  %v386 = vld [vmem:[%s1 + $0xab0] sm:$0xff]
  %v387 = vld [vmem:[%s1 + $0xab8] sm:$0xff]
  %v388 = vld [vmem:[%s1 + $0xac0] sm:$0xff]
  %v389 = vld [vmem:[%s1 + $0xac8] sm:$0xff]
  %v390 = vld [vmem:[%s1 + $0xad0] sm:$0xff]
  %v391 = vld [vmem:[%s1 + $0xad8] sm:$0xff]
  %v392 = vld [vmem:[%s1 + $0xae0] sm:$0xff]
  %v393 = vld [vmem:[%s1 + $0xae8] sm:$0xff]
  %v394 = vld [vmem:[%s1 + $0xaf0] sm:$0xff]
  %v395 = vld [vmem:[%s1 + $0xaf8] sm:$0xff]
  %v396 = vld [vmem:[%s1 + $0xb00] sm:$0xff]
  %v397 = vld [vmem:[%s1 + $0xb08] sm:$0xff]
  %v398 = vld [vmem:[%s1 + $0xb10] sm:$0xff]
  %v399 = vld [vmem:[%s1 + $0xb18] sm:$0xff]
  %v400 = vld [vmem:[%s1 + $0xb20] sm:$0xff]
  %v401 = vld [vmem:[%s1 + $0xb28] sm:$0xff]
  %v402 = vld [vmem:[%s1 + $0xb30] sm:$0xff]
  %v403 = vld [vmem:[%s1 + $0xb38] sm:$0xff]
  %v404 = vld [vmem:[%s1 + $0xb40] sm:$0xff]
  %v405 = vld [vmem:[%s1 + $0xb48] sm:$0xff]
  %v406 = vld [vmem:[%s1 + $0xb50] sm:$0xff]
  %v407 = vld [vmem:[%s1 + $0xb58] sm:$0xff]
  %v408 = vld [vmem:[%s1 + $0xb60] sm:$0xff]
  %v409 = vld [vmem:[%s1 + $0xb68] sm:$0xff]
  %v410 = vld [vmem:[%s1 + $0xb70] sm:$0xff]
  %v411 = vld [vmem:[%s1 + $0xb78] sm:$0xff]
  %v412 = vld [vmem:[%s1 + $0xb80] sm:$0xff]
  %v413 = vld [vmem:[%s1 + $0xb88] sm:$0xff]
  %v414 = vld [vmem:[%s1 + $0xb90] sm:$0xff]
  %v415 = vld [vmem:[%s1 + $0xb98] sm:$0xff]
  %v416 = vld [vmem:[%s1 + $0xba0] sm:$0xff]
  %v417 = vld [vmem:[%s1 + $0xba8] sm:$0xff]
  %v418 = vld [vmem:[%s1 + $0xbb0] sm:$0xff]
  %v419 = vld [vmem:[%s1 + $0xbb8] sm:$0xff]
  %v420 = vld [vmem:[%s1 + $0xbc0] sm:$0xff]
  %v421 = vld [vmem:[%s1 + $0xbc8] sm:$0xff]
  %v422 = vld [vmem:[%s1 + $0xbd0] sm:$0xff]
  %v423 = vld [vmem:[%s1 + $0xbd8] sm:$0xff]
  %v424 = vld [vmem:[%s1 + $0xbe0] sm:$0xff]
  %v425 = vld [vmem:[%s1 + $0xbe8] sm:$0xff]
  %v426 = vld [vmem:[%s1 + $0xbf0] sm:$0xff]
  %v427 = vld [vmem:[%s1 + $0xbf8] sm:$0xff]
  %v428 = vld [vmem:[%s1 + $0xc00] sm:$0xff]
  %v429 = vld [vmem:[%s1 + $0xc08] sm:$0xff]
  %v430 = vld [vmem:[%s1 + $0xc10] sm:$0xff]
  %v431 = vld [vmem:[%s1 + $0xc18] sm:$0xff]
  %v432 = vld [vmem:[%s1 + $0xc20] sm:$0xff]
  %v433 = vld [vmem:[%s1 + $0xc28] sm:$0xff]
  %v434 = vld [vmem:[%s1 + $0xc30] sm:$0xff]
  %v435 = vld [vmem:[%s1 + $0xc38] sm:$0xff]
  %v436 = vld [vmem:[%s1 + $0xc40] sm:$0xff]
  %v437 = vld [vmem:[%s1 + $0xc48] sm:$0xff]
  %v438 = vld [vmem:[%s1 + $0xc50] sm:$0xff]
  %v439 = vld [vmem:[%s1 + $0xc58] sm:$0xff]
  %v440 = vld [vmem:[%s1 + $0xc60] sm:$0xff]
  %v441 = vld [vmem:[%s1 + $0xc68] sm:$0xff]
  %v442 = vld [vmem:[%s1 + $0xc70] sm:$0xff]
  %v443 = vld [vmem:[%s1 + $0xc78] sm:$0xff]
  %v444 = vld [vmem:[%s1 + $0xc80] sm:$0xff]
  %v445 = vld [vmem:[%s1 + $0xc88] sm:$0xff]
  %v446 = vld [vmem:[%s1 + $0xc90] sm:$0xff]
  %v447 = vld [vmem:[%s1 + $0xc98] sm:$0xff]
  %v448 = vld [vmem:[%s1 + $0xca0] sm:$0xff]
  %v449 = vld [vmem:[%s1 + $0xca8] sm:$0xff]
  %v450 = vld [vmem:[%s1 + $0xcb0] sm:$0xff]
  %v451 = vld [vmem:[%s1 + $0xcb8] sm:$0xff]
  %v452 = vld [vmem:[%s1 + $0xcc0] sm:$0xff]
  %v453 = vld [vmem:[%s1 + $0xcc8] sm:$0xff]
  %v454 = vld [vmem:[%s1 + $0xcd0] sm:$0xff]
  %v455 = vld [vmem:[%s1 + $0xcd8] sm:$0xff]
  %v456 = vld [vmem:[%s1 + $0xce0] sm:$0xff]
  %v457 = vld [vmem:[%s1 + $0xce8] sm:$0xff]
  %v458 = vld [vmem:[%s1 + $0xcf0] sm:$0xff]
  %v459 = vld [vmem:[%s1 + $0xcf8] sm:$0xff]
  %v460 = vld [vmem:[%s1 + $0xd00] sm:$0xff]
  %v461 = vld [vmem:[%s1 + $0xd08] sm:$0xff]
  %v462 = vld [vmem:[%s1 + $0xd10] sm:$0xff]
  %v463 = vld [vmem:[%s1 + $0xd18] sm:$0xff]
  %v464 = vld [vmem:[%s1 + $0xd20] sm:$0xff]
  %v465 = vld [vmem:[%s1 + $0xd28] sm:$0xff]
  %v466 = vld [vmem:[%s1 + $0xd30] sm:$0xff]
  %v467 = vld [vmem:[%s1 + $0xd38] sm:$0xff]
  %v468 = vld [vmem:[%s1 + $0xd40] sm:$0xff]
  %v469 = vld [vmem:[%s1 + $0xd48] sm:$0xff]
  %v470 = vld [vmem:[%s1 + $0xd50] sm:$0xff]
  %v471 = vld [vmem:[%s1 + $0xd58] sm:$0xff]
  %v472 = vld [vmem:[%s1 + $0xd60] sm:$0xff]
  %v473 = vld [vmem:[%s1 + $0xd68] sm:$0xff]
  %v474 = vld [vmem:[%s1 + $0xd70] sm:$0xff]
  %v475 = vld [vmem:[%s1 + $0xd78] sm:$0xff]
  %v476 = vld [vmem:[%s1 + $0xd80] sm:$0xff]
  %v477 = vld [vmem:[%s1 + $0xd88] sm:$0xff]
  %v478 = vld [vmem:[%s1 + $0xd90] sm:$0xff]
  %v479 = vld [vmem:[%s1 + $0xd98] sm:$0xff]
  %v480 = vld [vmem:[%s1 + $0xda0] sm:$0xff]
  %v481 = vld [vmem:[%s1 + $0xda8] sm:$0xff]
  %v482 = vld [vmem:[%s1 + $0xdb0] sm:$0xff]
  %v483 = vld [vmem:[%s1 + $0xdb8] sm:$0xff]
  %v484 = vld [vmem:[%s1 + $0xdc0] sm:$0xff]
  %v485 = vld [vmem:[%s1 + $0xdc8] sm:$0xff]
  %v486 = vld [vmem:[%s1 + $0xdd0] sm:$0xff]
  %v487 = vld [vmem:[%s1 + $0xdd8] sm:$0xff]
  %v488 = vld [vmem:[%s1 + $0xde0] sm:$0xff]
  %v489 = vld [vmem:[%s1 + $0xde8] sm:$0xff]
  %v490 = vld [vmem:[%s1 + $0xdf0] sm:$0xff]
  %v491 = vld [vmem:[%s1 + $0xdf8] sm:$0xff]
  %v492 = vld [vmem:[%s1 + $0xe00] sm:$0xff]
  %v493 = vld [vmem:[%s1 + $0xe08] sm:$0xff]
  %v494 = vld [vmem:[%s1 + $0xe10] sm:$0xff]
  %v495 = vld [vmem:[%s1 + $0xe18] sm:$0xff]
  %v496 = vld [vmem:[%s1 + $0xe20] sm:$0xff]
  %v497 = vld [vmem:[%s1 + $0xe28] sm:$0xff]
  %v498 = vld [vmem:[%s1 + $0xe30] sm:$0xff]
  %v499 = vld [vmem:[%s1 + $0xe38] sm:$0xff]
  %v500 = vld [vmem:[%s1 + $0xe40] sm:$0xff]
  %v501 = vld [vmem:[%s1 + $0xe48] sm:$0xff]
  %v502 = vld [vmem:[%s1 + $0xe50] sm:$0xff]
  %v503 = vld [vmem:[%s1 + $0xe58] sm:$0xff]
  %v504 = vld [vmem:[%s1 + $0xe60] sm:$0xff]
  %v505 = vld [vmem:[%s1 + $0xe68] sm:$0xff]
  %v506 = vld [vmem:[%s1 + $0xe70] sm:$0xff]
  %v507 = vld [vmem:[%s1 + $0xe78] sm:$0xff]
  %v508 = vld [vmem:[%s1 + $0xe80] sm:$0xff]
  %v509 = vld [vmem:[%s1 + $0xe88] sm:$0xff]
  %v510 = vld [vmem:[%s1 + $0xe90] sm:$0xff]
  %v511 = vld [vmem:[%s1 + $0xe98] sm:$0xff]
  %v512 = vld [vmem:[%s1 + $0xea0] sm:$0xff]
  %v513 = vld [vmem:[%s1 + $0xea8] sm:$0xff]
  %v514 = vld [vmem:[%s1 + $0xeb0] sm:$0xff]
  %v515 = vld [vmem:[%s1 + $0xeb8] sm:$0xff]
  %v516 = vld [vmem:[%s1 + $0xec0] sm:$0xff]
  %v517 = vld [vmem:[%s1 + $0xec8] sm:$0xff]
  %v518 = vld [vmem:[%s1 + $0xed0] sm:$0xff]
  %v519 = vld [vmem:[%s1 + $0xed8] sm:$0xff]
  %v520 = vld [vmem:[%s1 + $0xee0] sm:$0xff]
  %v521 = vld [vmem:[%s1 + $0xee8] sm:$0xff]
  %v522 = vld [vmem:[%s1 + $0xef0] sm:$0xff]
  %v523 = vld [vmem:[%s1 + $0xef8] sm:$0xff]
  %v524 = vld [vmem:[%s1 + $0xf00] sm:$0xff]
  %v525 = vld [vmem:[%s1 + $0xf08] sm:$0xff]
  %v526 = vld [vmem:[%s1 + $0xf10] sm:$0xff]
  %v527 = vld [vmem:[%s1 + $0xf18] sm:$0xff]
  %v528 = vld [vmem:[%s1 + $0xf20] sm:$0xff]
  %v529 = vld [vmem:[%s1 + $0xf28] sm:$0xff]
  %v530 = vld [vmem:[%s1 + $0xf30] sm:$0xff]
  %v531 = vld [vmem:[%s1 + $0xf38] sm:$0xff]
  %v532 = vld [vmem:[%s1 + $0xf40] sm:$0xff]
  %v533 = vld [vmem:[%s1 + $0xf48] sm:$0xff]
  %v534 = vld [vmem:[%s1 + $0xf50] sm:$0xff]
  %v535 = vld [vmem:[%s1 + $0xf58] sm:$0xff]
  %v536 = vld [vmem:[%s1 + $0xf60] sm:$0xff]
  %v537 = vld [vmem:[%s1 + $0xf68] sm:$0xff]
  %v538 = vld [vmem:[%s1 + $0xf70] sm:$0xff]
  %v539 = vld [vmem:[%s1 + $0xf78] sm:$0xff]
  %v540 = vld [vmem:[%s1 + $0xf80] sm:$0xff]
  %v541 = vld [vmem:[%s1 + $0xf88] sm:$0xff]
  %v542 = vld [vmem:[%s1 + $0xf90] sm:$0xff]
  %v543 = vld [vmem:[%s1 + $0xf98] sm:$0xff]
  %v544 = vld [vmem:[%s1 + $0xfa0] sm:$0xff]
  %v545 = vld [vmem:[%s1 + $0xfa8] sm:$0xff]
  %v546 = vld [vmem:[%s1 + $0xfb0] sm:$0xff]
  %v547 = vld [vmem:[%s1 + $0xfb8] sm:$0xff]
  %v548 = vld [vmem:[%s1 + $0xfc0] sm:$0xff]
  %v549 = vld [vmem:[%s1 + $0xfc8] sm:$0xff]
  %v550 = vld [vmem:[%s1 + $0xfd0] sm:$0xff]
  %v551 = vld [vmem:[%s1 + $0xfd8] sm:$0xff]
  %v552 = vld [vmem:[%s1 + $0xfe0] sm:$0xff]
  %v553 = vld [vmem:[%s1 + $0xfe8] sm:$0xff]
  %v554 = vld [vmem:[%s1 + $0xff0] sm:$0xff]
  %v555 = vld [vmem:[%s1 + $0xff8] sm:$0xff]
  %v556 = vld [vmem:[%s1 + $0x1000] sm:$0xff]
  %v557 = vld [vmem:[%s1 + $0x1008] sm:$0xff]
  %v558 = vld [vmem:[%s1 + $0x1010] sm:$0xff]
  %v559 = vld [vmem:[%s1 + $0x1018] sm:$0xff]
  %v560 = vld [vmem:[%s1 + $0x1020] sm:$0xff]
  %v561 = vld [vmem:[%s1 + $0x1028] sm:$0xff]
  %v562 = vld [vmem:[%s1 + $0x1030] sm:$0xff]
  %v563 = vld [vmem:[%s1 + $0x1038] sm:$0xff]
  %v564 = vld [vmem:[%s1 + $0x1040] sm:$0xff]
  %v565 = vld [vmem:[%s1 + $0x1048] sm:$0xff]
  %v566 = vld [vmem:[%s1 + $0x1050] sm:$0xff]
  %v567 = vld [vmem:[%s1 + $0x1058] sm:$0xff]
  %v568 = vld [vmem:[%s1 + $0x1060] sm:$0xff]
  %v569 = vld [vmem:[%s1 + $0x1068] sm:$0xff]
  %v570 = vld [vmem:[%s1 + $0x1070] sm:$0xff]
  %v571 = vld [vmem:[%s1 + $0x1078] sm:$0xff]
  %v572 = vld [vmem:[%s1 + $0x1080] sm:$0xff]
  %v573 = vld [vmem:[%s1 + $0x1088] sm:$0xff]
  %v574 = vld [vmem:[%s1 + $0x1090] sm:$0xff]
  %v575 = vld [vmem:[%s1 + $0x1098] sm:$0xff]
  %v576 = vld [vmem:[%s1 + $0x10a0] sm:$0xff]
  %v577 = vld [vmem:[%s1 + $0x10a8] sm:$0xff]
  %v578 = vld [vmem:[%s1 + $0x10b0] sm:$0xff]
  %v579 = vld [vmem:[%s1 + $0x10b8] sm:$0xff]
  %v580 = vld [vmem:[%s1 + $0x10c0] sm:$0xff]
  %v581 = vld [vmem:[%s1 + $0x10c8] sm:$0xff]
  %v582 = vld [vmem:[%s1 + $0x10d0] sm:$0xff]
  %v583 = vld [vmem:[%s1 + $0x10d8] sm:$0xff]
  %v584 = vld [vmem:[%s1 + $0x10e0] sm:$0xff]
  %v585 = vld [vmem:[%s1 + $0x10e8] sm:$0xff]
  %v586 = vld [vmem:[%s1 + $0x10f0] sm:$0xff]
  %v587 = vld [vmem:[%s1 + $0x10f8] sm:$0xff]
  %v588 = vld [vmem:[%s1 + $0x1100] sm:$0xff]
  %v589 = vld [vmem:[%s1 + $0x1108] sm:$0xff]
  %v590 = vld [vmem:[%s1 + $0x1110] sm:$0xff]
  %v591 = vld [vmem:[%s1 + $0x1118] sm:$0xff]
  %v592 = vld [vmem:[%s1 + $0x1120] sm:$0xff]
  %v593 = vld [vmem:[%s1 + $0x1128] sm:$0xff]
  %v594 = vld [vmem:[%s1 + $0x1130] sm:$0xff]
  %v595 = vld [vmem:[%s1 + $0x1138] sm:$0xff]
  %v596 = vld [vmem:[%s1 + $0x1140] sm:$0xff]
  %v597 = vld [vmem:[%s1 + $0x1148] sm:$0xff]
  %v598 = vld [vmem:[%s1 + $0x1150] sm:$0xff]
  %v599 = vld [vmem:[%s1 + $0x1158] sm:$0xff]
  %v600 = vld [vmem:[%s1 + $0x1160] sm:$0xff]
  %v601 = vld [vmem:[%s1 + $0x1168] sm:$0xff]
  %v602 = vld [vmem:[%s1 + $0x1170] sm:$0xff]
  %v603 = vld [vmem:[%s1 + $0x1178] sm:$0xff]
  %v604 = vld [vmem:[%s1 + $0x1180] sm:$0xff]
  %v605 = vld [vmem:[%s1 + $0x1188] sm:$0xff]
  %v606 = vld [vmem:[%s1 + $0x1190] sm:$0xff]
  %v607 = vld [vmem:[%s1 + $0x1198] sm:$0xff]
  %v608 = vld [vmem:[%s1 + $0x11a0] sm:$0xff]
  %v609 = vld [vmem:[%s1 + $0x11a8] sm:$0xff]
  %v610 = vld [vmem:[%s1 + $0x11b0] sm:$0xff]
  %v611 = vld [vmem:[%s1 + $0x11b8] sm:$0xff]
  %v612 = vld [vmem:[%s1 + $0x11c0] sm:$0xff]
  %v613 = vld [vmem:[%s1 + $0x11c8] sm:$0xff]
  %v614 = vld [vmem:[%s1 + $0x11d0] sm:$0xff]
  %v615 = vld [vmem:[%s1 + $0x11d8] sm:$0xff]
  %v616 = vld [vmem:[%s1 + $0x11e0] sm:$0xff]
  %v617 = vld [vmem:[%s1 + $0x11e8] sm:$0xff]
  %v618 = vld [vmem:[%s1 + $0x11f0] sm:$0xff]
  %v619 = vld [vmem:[%s1 + $0x11f8] sm:$0xff]
  %v620 = vld [vmem:[%s1 + $0x1200] sm:$0xff]
  %v621 = vld [vmem:[%s1 + $0x1208] sm:$0xff]
  %v622 = vld [vmem:[%s1 + $0x1210] sm:$0xff]
  %v623 = vld [vmem:[%s1 + $0x1218] sm:$0xff]
  %v624 = vld [vmem:[%s1 + $0x1220] sm:$0xff]
  %v625 = vld [vmem:[%s1 + $0x1228] sm:$0xff]
  %v626 = vld [vmem:[%s1 + $0x1230] sm:$0xff]
  %v627 = vld [vmem:[%s1 + $0x1238] sm:$0xff]
  %v628 = vld [vmem:[%s1 + $0x1240] sm:$0xff]
  %v629 = vld [vmem:[%s1 + $0x1248] sm:$0xff]
  %v630 = vld [vmem:[%s1 + $0x1250] sm:$0xff]
  %v631 = vld [vmem:[%s1 + $0x1258] sm:$0xff]
  %v632 = vld [vmem:[%s1 + $0x1260] sm:$0xff]
  %v633 = vld [vmem:[%s1 + $0x1268] sm:$0xff]
  %v634 = vld [vmem:[%s1 + $0x1270] sm:$0xff]
  %v635 = vld [vmem:[%s1 + $0x1278] sm:$0xff]
  %v636 = vld [vmem:[%s1 + $0x1280] sm:$0xff]
  %v637 = vld [vmem:[%s1 + $0x1288] sm:$0xff]
  %v638 = vld [vmem:[%s1 + $0x1290] sm:$0xff]
  %v639 = vld [vmem:[%s1 + $0x1298] sm:$0xff]
  %v640 = vld [vmem:[%s1 + $0x12a0] sm:$0xff]
  %v641 = vld [vmem:[%s1 + $0x12a8] sm:$0xff]
  %v642 = vld [vmem:[%s1 + $0x12b0] sm:$0xff]
  %v643 = vld [vmem:[%s1 + $0x12b8] sm:$0xff]
  %v644 = vld [vmem:[%s1 + $0x12c0] sm:$0xff]
  %v645 = vld [vmem:[%s1 + $0x12c8] sm:$0xff]
  %v646 = vld [vmem:[%s1 + $0x12d0] sm:$0xff]
  %v647 = vld [vmem:[%s1 + $0x12d8] sm:$0xff]
  %v648 = vld [vmem:[%s1 + $0x12e0] sm:$0xff]
  %v649 = vld [vmem:[%s1 + $0x12e8] sm:$0xff]
  %v650 = vld [vmem:[%s1 + $0x12f0] sm:$0xff]
  %v651 = vld [vmem:[%s1 + $0x12f8] sm:$0xff]
  %v652 = vld [vmem:[%s1 + $0x1300] sm:$0xff]
  %v653 = vld [vmem:[%s1 + $0x1308] sm:$0xff]
  %v654 = vld [vmem:[%s1 + $0x1310] sm:$0xff]
  %v655 = vld [vmem:[%s1 + $0x1318] sm:$0xff]
  %v656 = vld [vmem:[%s1 + $0x1320] sm:$0xff]
  %v657 = vld [vmem:[%s1 + $0x1328] sm:$0xff]
  %v658 = vld [vmem:[%s1 + $0x1330] sm:$0xff]
  %v659 = vld [vmem:[%s1 + $0x1338] sm:$0xff]
  %v660 = vld [vmem:[%s1 + $0x1340] sm:$0xff]
  %v661 = vld [vmem:[%s1 + $0x1348] sm:$0xff]
  %v662 = vld [vmem:[%s1 + $0x1350] sm:$0xff]
  %v663 = vld [vmem:[%s1 + $0x1358] sm:$0xff]
  %v664 = vld [vmem:[%s1 + $0x1360] sm:$0xff]
  %v665 = vld [vmem:[%s1 + $0x1368] sm:$0xff]
  %v666 = vld [vmem:[%s1 + $0x1370] sm:$0xff]
  %v667 = vld [vmem:[%s1 + $0x1378] sm:$0xff]
  %v668 = vld [vmem:[%s1 + $0x1380] sm:$0xff]
  %v669 = vld [vmem:[%s1 + $0x1388] sm:$0xff]
  %v670 = vld [vmem:[%s1 + $0x1390] sm:$0xff]
  %v671 = vld [vmem:[%s1 + $0x1398] sm:$0xff]
  %v672 = vld [vmem:[%s1 + $0x13a0] sm:$0xff]
  %v673 = vld [vmem:[%s1 + $0x13a8] sm:$0xff]
  %v674 = vld [vmem:[%s1 + $0x13b0] sm:$0xff]
  %v675 = vld [vmem:[%s1 + $0x13b8] sm:$0xff]
  %v676 = vld [vmem:[%s1 + $0x13c0] sm:$0xff]
  %v677 = vld [vmem:[%s1 + $0x13c8] sm:$0xff]
  %v678 = vld [vmem:[%s1 + $0x13d0] sm:$0xff]
  %v679 = vld [vmem:[%s1 + $0x13d8] sm:$0xff]
  %v680 = vld [vmem:[%s1 + $0x13e0] sm:$0xff]
  %v681 = vld [vmem:[%s1 + $0x13e8] sm:$0xff]
  %v682 = vld [vmem:[%s1 + $0x13f0] sm:$0xff]
  %v683 = vld [vmem:[%s1 + $0x13f8] sm:$0xff]
  %v684 = vld [vmem:[%s1 + $0x1400] sm:$0xff]
  %v685 = vld [vmem:[%s1 + $0x1408] sm:$0xff]
  %v686 = vld [vmem:[%s1 + $0x1410] sm:$0xff]
  %v687 = vld [vmem:[%s1 + $0x1418] sm:$0xff]
  %v688 = vld [vmem:[%s1 + $0x1420] sm:$0xff]
  %v689 = vld [vmem:[%s1 + $0x1428] sm:$0xff]
  %v690 = vld [vmem:[%s1 + $0x1430] sm:$0xff]
  %v691 = vld [vmem:[%s1 + $0x1438] sm:$0xff]
  %v692 = vld [vmem:[%s1 + $0x1440] sm:$0xff]
  %v693 = vld [vmem:[%s1 + $0x1448] sm:$0xff]
  %v694 = vld [vmem:[%s1 + $0x1450] sm:$0xff]
  %v695 = vld [vmem:[%s1 + $0x1458] sm:$0xff]
  %v696 = vld [vmem:[%s1 + $0x1460] sm:$0xff]
  %v697 = vld [vmem:[%s1 + $0x1468] sm:$0xff]
  %v698 = vld [vmem:[%s1 + $0x1470] sm:$0xff]
  %v699 = vld [vmem:[%s1 + $0x1478] sm:$0xff]
  %v700 = vld [vmem:[%s1 + $0x1480] sm:$0xff]
  %v701 = vld [vmem:[%s1 + $0x1488] sm:$0xff]
  %v702 = vld [vmem:[%s1 + $0x1490] sm:$0xff]
  %v703 = vld [vmem:[%s1 + $0x1498] sm:$0xff]
  %v704 = vld [vmem:[%s1 + $0x14a0] sm:$0xff]
  %v705 = vld [vmem:[%s1 + $0x14a8] sm:$0xff]
  %v706 = vld [vmem:[%s1 + $0x14b0] sm:$0xff]
  %v707 = vld [vmem:[%s1 + $0x14b8] sm:$0xff]
  %v708 = vld [vmem:[%s1 + $0x14c0] sm:$0xff]
  %v709 = vld [vmem:[%s1 + $0x14c8] sm:$0xff]
  %v710 = vld [vmem:[%s1 + $0x14d0] sm:$0xff]
  %v711 = vld [vmem:[%s1 + $0x14d8] sm:$0xff]
  %v712 = vld [vmem:[%s1 + $0x14e0] sm:$0xff]
  %v713 = vld [vmem:[%s1 + $0x14e8] sm:$0xff]
  %v714 = vld [vmem:[%s1 + $0x14f0] sm:$0xff]
  %v715 = vld [vmem:[%s1 + $0x14f8] sm:$0xff]
  %v716 = vld [vmem:[%s1 + $0x1500] sm:$0xff]
  %v717 = vld [vmem:[%s1 + $0x1508] sm:$0xff]
  %v718 = vld [vmem:[%s1 + $0x1510] sm:$0xff]
  %v719 = vld [vmem:[%s1 + $0x1518] sm:$0xff]
  %v720 = vld [vmem:[%s1 + $0x1520] sm:$0xff]
  %v721 = vld [vmem:[%s1 + $0x1528] sm:$0xff]
  %v722 = vld [vmem:[%s1 + $0x1530] sm:$0xff]
  %v723 = vld [vmem:[%s1 + $0x1538] sm:$0xff]
  %v724 = vld [vmem:[%s1 + $0x1540] sm:$0xff]
  %v725 = vld [vmem:[%s1 + $0x1548] sm:$0xff]
  %v726 = vld [vmem:[%s1 + $0x1550] sm:$0xff]
  %v727 = vld [vmem:[%s1 + $0x1558] sm:$0xff]
  %v728 = vld [vmem:[%s1 + $0x1560] sm:$0xff]
  %v729 = vld [vmem:[%s1 + $0x1568] sm:$0xff]
  %v730 = vld [vmem:[%s1 + $0x1570] sm:$0xff]
  %v731 = vld [vmem:[%s1 + $0x1578] sm:$0xff]
  %v732 = vld [vmem:[%s1 + $0x1580] sm:$0xff]
  %v733 = vld [vmem:[%s1 + $0x1588] sm:$0xff]
  %v734 = vld [vmem:[%s1 + $0x1590] sm:$0xff]
  %v735 = vld [vmem:[%s1 + $0x1598] sm:$0xff]
  %v736 = vld [vmem:[%s1 + $0x15a0] sm:$0xff]
  %v737 = vld [vmem:[%s1 + $0x15a8] sm:$0xff]
  %v738 = vld [vmem:[%s1 + $0x15b0] sm:$0xff]
  %v739 = vld [vmem:[%s1 + $0x15b8] sm:$0xff]
  %v740 = vld [vmem:[%s1 + $0x15c0] sm:$0xff]
  %v741 = vld [vmem:[%s1 + $0x15c8] sm:$0xff]
  %v742 = vld [vmem:[%s1 + $0x15d0] sm:$0xff]
  %v743 = vld [vmem:[%s1 + $0x15d8] sm:$0xff]
  %v744 = vld [vmem:[%s1 + $0x15e0] sm:$0xff]
  %v745 = vld [vmem:[%s1 + $0x15e8] sm:$0xff]
  %v746 = vld [vmem:[%s1 + $0x15f0] sm:$0xff]
  %v747 = vld [vmem:[%s1 + $0x15f8] sm:$0xff]
  %v748 = vld [vmem:[%s1 + $0x1600] sm:$0xff]
  %v749 = vld [vmem:[%s1 + $0x1608] sm:$0xff]
  %v750 = vld [vmem:[%s1 + $0x1610] sm:$0xff]
  %v751 = vld [vmem:[%s1 + $0x1618] sm:$0xff]
  %v752 = vld [vmem:[%s1 + $0x1620] sm:$0xff]
  %v753 = vld [vmem:[%s1 + $0x1628] sm:$0xff]
  %v754 = vld [vmem:[%s1 + $0x1630] sm:$0xff]
  %v755 = vld [vmem:[%s1 + $0x1638] sm:$0xff]
  %v756 = vld [vmem:[%s1 + $0x1640] sm:$0xff]
  %v757 = vld [vmem:[%s1 + $0x1648] sm:$0xff]
  %v758 = vld [vmem:[%s1 + $0x1650] sm:$0xff]
  %v759 = vld [vmem:[%s1 + $0x1658] sm:$0xff]
  %v760 = vld [vmem:[%s1 + $0x1660] sm:$0xff]
  %v761 = vld [vmem:[%s1 + $0x1668] sm:$0xff]
  %v762 = vld [vmem:[%s1 + $0x1670] sm:$0xff]
  %v763 = vld [vmem:[%s1 + $0x1678] sm:$0xff]
  %v764 = vld [vmem:[%s1 + $0x1680] sm:$0xff]
  %v765 = vld [vmem:[%s1 + $0x1688] sm:$0xff]
  %v766 = vld [vmem:[%s1 + $0x1690] sm:$0xff]
  %v767 = vld [vmem:[%s1 + $0x1698] sm:$0xff]
  %v768 = vld [vmem:[%s1 + $0x16a0] sm:$0xff]
  %v769 = vld [vmem:[%s1 + $0x16a8] sm:$0xff]
  %v770 = vld [vmem:[%s1 + $0x16b0] sm:$0xff]
  %v771 = vld [vmem:[%s1 + $0x16b8] sm:$0xff]
  %v772 = vld [vmem:[%s1 + $0x16c0] sm:$0xff]
  %v773 = vld [vmem:[%s1 + $0x16c8] sm:$0xff]
  %v774 = vld [vmem:[%s1 + $0x16d0] sm:$0xff]
  %v775 = vld [vmem:[%s1 + $0x16d8] sm:$0xff]
  %v776 = vld [vmem:[%s1 + $0x16e0] sm:$0xff]
  %v777 = vld [vmem:[%s1 + $0x16e8] sm:$0xff]
  %v778 = vld [vmem:[%s1 + $0x16f0] sm:$0xff]
  %v779 = vld [vmem:[%s1 + $0x16f8] sm:$0xff]
  %v780 = vld [vmem:[%s1 + $0x1700] sm:$0xff]
  %v781 = vld [vmem:[%s1 + $0x1708] sm:$0xff]
  %v782 = vld [vmem:[%s1 + $0x1710] sm:$0xff]
  %v783 = vld [vmem:[%s1 + $0x1718] sm:$0xff]
  %v784 = vld [vmem:[%s1 + $0x1720] sm:$0xff]
  %v785 = vld [vmem:[%s1 + $0x1728] sm:$0xff]
  %v786 = vld [vmem:[%s1 + $0x1730] sm:$0xff]
  %v787 = vld [vmem:[%s1 + $0x1738] sm:$0xff]
  %v788 = vld [vmem:[%s1 + $0x1740] sm:$0xff]
  %v789 = vld [vmem:[%s1 + $0x1748] sm:$0xff]
  %v790 = vld [vmem:[%s1 + $0x1750] sm:$0xff]
  %v791 = vld [vmem:[%s1 + $0x1758] sm:$0xff]
  %v792 = vld [vmem:[%s1 + $0x1760] sm:$0xff]
  %v793 = vld [vmem:[%s1 + $0x1768] sm:$0xff]
  %v794 = vld [vmem:[%s1 + $0x1770] sm:$0xff]
  %v795 = vld [vmem:[%s1 + $0x1778] sm:$0xff]
  %v796 = vld [vmem:[%s1 + $0x1780] sm:$0xff]
  %v797 = vld [vmem:[%s1 + $0x1788] sm:$0xff]
  %v798 = vld [vmem:[%s1 + $0x1790] sm:$0xff]
  %v799 = vld [vmem:[%s1 + $0x1798] sm:$0xff]
  %v800 = vld [vmem:[%s1 + $0x17a0] sm:$0xff]
  %v801 = vld [vmem:[%s1 + $0x17a8] sm:$0xff]
  %v802 = vld [vmem:[%s1 + $0x17b0] sm:$0xff]
  %v803 = vld [vmem:[%s1 + $0x17b8] sm:$0xff]
  %v804 = vld [vmem:[%s1 + $0x17c0] sm:$0xff]
  %v805 = vld [vmem:[%s1 + $0x17c8] sm:$0xff]
  %v806 = vld [vmem:[%s1 + $0x17d0] sm:$0xff]
  %v807 = vld [vmem:[%s1 + $0x17d8] sm:$0xff]
  %v808 = vld [vmem:[%s1 + $0x17e0] sm:$0xff]
  %v809 = vld [vmem:[%s1 + $0x17e8] sm:$0xff]
  %v810 = vld [vmem:[%s1 + $0x17f0] sm:$0xff]
  %v811 = vld [vmem:[%s1 + $0x17f8] sm:$0xff]
  %v812 = vld [vmem:[%s2] sm:$0xff]
  %v814 = vlaneseq
  %v815 = vshrl.u32 %v814, 7
  %v816 = vsub.s32 0, %v815
  %v817 = vrot.slane %v812, %v816
  %v818 = vlaneseq
  %v819 = vshrl.u32 %v818, 7
  %v820 = vsub.s32 1, %v819
  %v821 = vrot.slane %v812, %v820
  %v822 = vlaneseq
  %v823 = vshrl.u32 %v822, 7
  %v824 = vsub.s32 2, %v823
  %v825 = vrot.slane %v812, %v824
  %v826 = vlaneseq
  %v827 = vshrl.u32 %v826, 7
  %v828 = vsub.s32 3, %v827
  %v829 = vrot.slane %v812, %v828
  %v830 = vlaneseq
  %v831 = vshrl.u32 %v830, 7
  %v832 = vsub.s32 4, %v831
  %v833 = vrot.slane %v812, %v832
  %v834 = vlaneseq
  %v835 = vshrl.u32 %v834, 7
  %v836 = vsub.s32 5, %v835
  %v837 = vrot.slane %v812, %v836
  %v838 = vlaneseq
  %v839 = vshrl.u32 %v838, 7
  %v840 = vsub.s32 6, %v839
  %v841 = vrot.slane %v812, %v840
  %v842 = vlaneseq
  %v843 = vshrl.u32 %v842, 7
  %v844 = vsub.s32 7, %v843
  %v845 = vrot.slane %v812, %v844
  %854 = vmatprep.subr.mxu0 %v45
  %855 = vmatpush1.msra.mxu0 %v44
  %856 = vmatprep.subr.mxu0 %v53
  %857 = vmatpush1.msra.mxu0 %v52
  %858 = vmatprep.subr.mxu0 %v61
  %859 = vmatpush1.msra.mxu0 %v60
  %860 = vmatprep.subr.mxu0 %v69
  %861 = vmatpush1.msra.mxu0 %v68
  %862 = vmatprep.subr.mxu0 %v77
  %863 = vmatpush1.msra.mxu0 %v76
  %864 = vmatprep.subr.mxu0 %v85
  %865 = vmatpush1.msra.mxu0 %v84
  %866 = vmatprep.subr.mxu0 %v93
  %867 = vmatpush1.msra.mxu0 %v92
  %868 = vmatprep.subr.mxu0 %v101
  %869 = vmatpush1.msra.mxu0 %v100
  %870 = vmatprep.subr.mxu0 %v109
  %871 = vmatpush1.msra.mxu0 %v108
  %872 = vmatprep.subr.mxu0 %v117
  %873 = vmatpush1.msra.mxu0 %v116
  %874 = vmatprep.subr.mxu0 %v125
  %875 = vmatpush1.msra.mxu0 %v124
  %876 = vmatprep.subr.mxu0 %v133
  %877 = vmatpush1.msra.mxu0 %v132
  %878 = vmatprep.subr.mxu0 %v141
  %879 = vmatpush1.msra.mxu0 %v140
  %880 = vmatprep.subr.mxu0 %v149
  %881 = vmatpush1.msra.mxu0 %v148
  %882 = vmatprep.subr.mxu0 %v157
  %883 = vmatpush1.msra.mxu0 %v156
  %884 = vmatprep.subr.mxu0 %v165
  %885 = vmatpush1.msra.mxu0 %v164
  %886 = vmatprep.subr.mxu0 %v173
  %887 = vmatpush1.msra.mxu0 %v172
  %888 = vmatprep.subr.mxu0 %v181
  %889 = vmatpush1.msra.mxu0 %v180
  %890 = vmatprep.subr.mxu0 %v189
  %891 = vmatpush1.msra.mxu0 %v188
  %892 = vmatprep.subr.mxu0 %v197
  %893 = vmatpush1.msra.mxu0 %v196
  %894 = vmatprep.subr.mxu0 %v205
  %895 = vmatpush1.msra.mxu0 %v204
  %896 = vmatprep.subr.mxu0 %v213
  %897 = vmatpush1.msra.mxu0 %v212
  %898 = vmatprep.subr.mxu0 %v221
  %899 = vmatpush1.msra.mxu0 %v220
  %900 = vmatprep.subr.mxu0 %v229
  %901 = vmatpush1.msra.mxu0 %v228
  %902 = vmatprep.subr.mxu0 %v237
  %903 = vmatpush1.msra.mxu0 %v236
  %904 = vmatprep.subr.mxu0 %v245
  %905 = vmatpush1.msra.mxu0 %v244
  %906 = vmatprep.subr.mxu0 %v253
  %907 = vmatpush1.msra.mxu0 %v252
  %908 = vmatprep.subr.mxu0 %v261
  %909 = vmatpush1.msra.mxu0 %v260
  %910 = vmatprep.subr.mxu0 %v269
  %911 = vmatpush1.msra.mxu0 %v268
  %912 = vmatprep.subr.mxu0 %v277
  %913 = vmatpush1.msra.mxu0 %v276
  %914 = vmatprep.subr.mxu0 %v285
  %915 = vmatpush1.msra.mxu0 %v284
  %916 = vmatprep.subr.mxu0 %v293
  %917 = vmatpush1.msra.mxu0 %v292
  %918 = vmatprep.mubr.f32.mxu0 %v39
  %919 = vmatmul.mubr.f32.gmra.mrb[0].mxu0 %v38
  %v920 = vpop.f32.mrb[0].mxu0
  %v921 = vadd.f32 %v817, %v920
  %v922 = vpop.f32.mrb[0].mxu0
  %v923 = vadd.f32 %v821, %v922
  %924 = vdwg.mxu0
  %925 = vmatprep.subr.mxu0 %v301
  %926 = vmatpush1.msra.mxu0 %v300
  %927 = vmatprep.subr.mxu0 %v309
  %928 = vmatpush1.msra.mxu0 %v308
  %929 = vmatprep.subr.mxu0 %v317
  %930 = vmatpush1.msra.mxu0 %v316
  %931 = vmatprep.subr.mxu0 %v325
  %932 = vmatpush1.msra.mxu0 %v324
  %933 = vmatprep.subr.mxu0 %v333
  %934 = vmatpush1.msra.mxu0 %v332
  %935 = vmatprep.subr.mxu0 %v341
  %936 = vmatpush1.msra.mxu0 %v340
  %937 = vmatprep.subr.mxu0 %v349
  %938 = vmatpush1.msra.mxu0 %v348
  %939 = vmatprep.subr.mxu0 %v357
  %940 = vmatpush1.msra.mxu0 %v356
  %941 = vmatprep.subr.mxu0 %v365
  %942 = vmatpush1.msra.mxu0 %v364
  %943 = vmatprep.subr.mxu0 %v373
  %944 = vmatpush1.msra.mxu0 %v372
  %945 = vmatprep.subr.mxu0 %v381
  %946 = vmatpush1.msra.mxu0 %v380
  %947 = vmatprep.subr.mxu0 %v389
  %948 = vmatpush1.msra.mxu0 %v388
  %949 = vmatprep.subr.mxu0 %v397
  %950 = vmatpush1.msra.mxu0 %v396
  %951 = vmatprep.subr.mxu0 %v405
  %952 = vmatpush1.msra.mxu0 %v404
  %953 = vmatprep.subr.mxu0 %v413
  %954 = vmatpush1.msra.mxu0 %v412
  %955 = vmatprep.subr.mxu0 %v421
  %956 = vmatpush1.msra.mxu0 %v420
  %957 = vmatprep.subr.mxu0 %v429
  %958 = vmatpush1.msra.mxu0 %v428
  %959 = vmatprep.subr.mxu0 %v437
  %960 = vmatpush1.msra.mxu0 %v436
  %961 = vmatprep.subr.mxu0 %v445
  %962 = vmatpush1.msra.mxu0 %v444
  %963 = vmatprep.subr.mxu0 %v453
  %964 = vmatpush1.msra.mxu0 %v452
  %965 = vmatprep.subr.mxu0 %v461
  %966 = vmatpush1.msra.mxu0 %v460
  %967 = vmatprep.subr.mxu0 %v469
  %968 = vmatpush1.msra.mxu0 %v468
  %969 = vmatprep.subr.mxu0 %v477
  %970 = vmatpush1.msra.mxu0 %v476
  %971 = vmatprep.subr.mxu0 %v485
  %972 = vmatpush1.msra.mxu0 %v484
  %973 = vmatprep.subr.mxu0 %v493
  %974 = vmatpush1.msra.mxu0 %v492
  %975 = vmatprep.subr.mxu0 %v501
  %976 = vmatpush1.msra.mxu0 %v500
  %977 = vmatprep.subr.mxu0 %v509
  %978 = vmatpush1.msra.mxu0 %v508
  %979 = vmatprep.subr.mxu0 %v517
  %980 = vmatpush1.msra.mxu0 %v516
  %981 = vmatprep.subr.mxu0 %v525
  %982 = vmatpush1.msra.mxu0 %v524
  %983 = vmatprep.subr.mxu0 %v533
  %984 = vmatpush1.msra.mxu0 %v532
  %985 = vmatprep.subr.mxu0 %v541
  %986 = vmatpush1.msra.mxu0 %v540
  %987 = vmatprep.subr.mxu0 %v549
  %988 = vmatpush1.msra.mxu0 %v548
  %989 = vmatprep.mubr.f32.mxu0 %v41
  %990 = vmatmul.mubr.f32.gmra.mrb[0].mxu0 %v40
  %v991 = vpop.f32.mrb[0].mxu0
  %v992 = vadd.f32 %v921, %v991
  %v993 = vpop.f32.mrb[0].mxu0
  %v994 = vadd.f32 %v923, %v993
  %995 = vdwg.mxu0
  %996 = vmatprep.subr.mxu0 %v557
  %997 = vmatpush1.msra.mxu0 %v556
  %998 = vmatprep.subr.mxu0 %v565
  %999 = vmatpush1.msra.mxu0 %v564
  %1000 = vmatprep.subr.mxu0 %v573
  %1001 = vmatpush1.msra.mxu0 %v572
  %1002 = vmatprep.subr.mxu0 %v581
  %1003 = vmatpush1.msra.mxu0 %v580
  %1004 = vmatprep.subr.mxu0 %v589
  %1005 = vmatpush1.msra.mxu0 %v588
  %1006 = vmatprep.subr.mxu0 %v597
  %1007 = vmatpush1.msra.mxu0 %v596
  %1008 = vmatprep.subr.mxu0 %v605
  %1009 = vmatpush1.msra.mxu0 %v604
  %1010 = vmatprep.subr.mxu0 %v613
  %1011 = vmatpush1.msra.mxu0 %v612
  %1012 = vmatprep.subr.mxu0 %v621
  %1013 = vmatpush1.msra.mxu0 %v620
  %1014 = vmatprep.subr.mxu0 %v629
  %1015 = vmatpush1.msra.mxu0 %v628
  %1016 = vmatprep.subr.mxu0 %v637
  %1017 = vmatpush1.msra.mxu0 %v636
  %1018 = vmatprep.subr.mxu0 %v645
  %1019 = vmatpush1.msra.mxu0 %v644
  %1020 = vmatprep.subr.mxu0 %v653
  %1021 = vmatpush1.msra.mxu0 %v652
  %1022 = vmatprep.subr.mxu0 %v661
  %1023 = vmatpush1.msra.mxu0 %v660
  %1024 = vmatprep.subr.mxu0 %v669
  %1025 = vmatpush1.msra.mxu0 %v668
  %1026 = vmatprep.subr.mxu0 %v677
  %1027 = vmatpush1.msra.mxu0 %v676
  %1028 = vmatprep.subr.mxu0 %v685
  %1029 = vmatpush1.msra.mxu0 %v684
  %1030 = vmatprep.subr.mxu0 %v693
  %1031 = vmatpush1.msra.mxu0 %v692
  %1032 = vmatprep.subr.mxu0 %v701
  %1033 = vmatpush1.msra.mxu0 %v700
  %1034 = vmatprep.subr.mxu0 %v709
  %1035 = vmatpush1.msra.mxu0 %v708
  %1036 = vmatprep.subr.mxu0 %v717
  %1037 = vmatpush1.msra.mxu0 %v716
  %1038 = vmatprep.subr.mxu0 %v725
  %1039 = vmatpush1.msra.mxu0 %v724
  %1040 = vmatprep.subr.mxu0 %v733
  %1041 = vmatpush1.msra.mxu0 %v732
  %1042 = vmatprep.subr.mxu0 %v741
  %1043 = vmatpush1.msra.mxu0 %v740
  %1044 = vmatprep.subr.mxu0 %v749
  %1045 = vmatpush1.msra.mxu0 %v748
  %1046 = vmatprep.subr.mxu0 %v757
  %1047 = vmatpush1.msra.mxu0 %v756
  %1048 = vmatprep.subr.mxu0 %v765
  %1049 = vmatpush1.msra.mxu0 %v764
  %1050 = vmatprep.subr.mxu0 %v773
  %1051 = vmatpush1.msra.mxu0 %v772
  %1052 = vmatprep.subr.mxu0 %v781
  %1053 = vmatpush1.msra.mxu0 %v780
  %1054 = vmatprep.subr.mxu0 %v789
  %1055 = vmatpush1.msra.mxu0 %v788
  %1056 = vmatprep.subr.mxu0 %v797
  %1057 = vmatpush1.msra.mxu0 %v796
  %1058 = vmatprep.subr.mxu0 %v805
  %1059 = vmatpush1.msra.mxu0 %v804
  %1060 = vmatprep.mubr.f32.mxu0 %v43
  %1061 = vmatmul.mubr.f32.gmra.mrb[0].mxu0 %v42
  %v1062 = vpop.f32.mrb[0].mxu0
  %v1063 = vadd.f32 %v992, %v1062
  %v1064 = vpop.f32.mrb[0].mxu0
  %v1065 = vadd.f32 %v994, %v1064
  %1066 = vdwg.mxu0
  %1067 = vmatprep.subr.mxu0 %v47
  %1068 = vmatpush1.msra.mxu0 %v46
  %1069 = vmatprep.subr.mxu0 %v55
  %1070 = vmatpush1.msra.mxu0 %v54
  %1071 = vmatprep.subr.mxu0 %v63
  %1072 = vmatpush1.msra.mxu0 %v62
  %1073 = vmatprep.subr.mxu0 %v71
  %1074 = vmatpush1.msra.mxu0 %v70
  %1075 = vmatprep.subr.mxu0 %v79
  %1076 = vmatpush1.msra.mxu0 %v78
  %1077 = vmatprep.subr.mxu0 %v87
  %1078 = vmatpush1.msra.mxu0 %v86
  %1079 = vmatprep.subr.mxu0 %v95
  %1080 = vmatpush1.msra.mxu0 %v94
  %1081 = vmatprep.subr.mxu0 %v103
  %1082 = vmatpush1.msra.mxu0 %v102
  %1083 = vmatprep.subr.mxu0 %v111
  %1084 = vmatpush1.msra.mxu0 %v110
  %1085 = vmatprep.subr.mxu0 %v119
  %1086 = vmatpush1.msra.mxu0 %v118
  %1087 = vmatprep.subr.mxu0 %v127
  %1088 = vmatpush1.msra.mxu0 %v126
  %1089 = vmatprep.subr.mxu0 %v135
  %1090 = vmatpush1.msra.mxu0 %v134
  %1091 = vmatprep.subr.mxu0 %v143
  %1092 = vmatpush1.msra.mxu0 %v142
  %1093 = vmatprep.subr.mxu0 %v151
  %1094 = vmatpush1.msra.mxu0 %v150
  %1095 = vmatprep.subr.mxu0 %v159
  %1096 = vmatpush1.msra.mxu0 %v158
  %1097 = vmatprep.subr.mxu0 %v167
  %1098 = vmatpush1.msra.mxu0 %v166
  %1099 = vmatprep.subr.mxu0 %v175
  %1100 = vmatpush1.msra.mxu0 %v174
  %1101 = vmatprep.subr.mxu0 %v183
  %1102 = vmatpush1.msra.mxu0 %v182
  %1103 = vmatprep.subr.mxu0 %v191
  %1104 = vmatpush1.msra.mxu0 %v190
  %1105 = vmatprep.subr.mxu0 %v199
  %1106 = vmatpush1.msra.mxu0 %v198
  %1107 = vmatprep.subr.mxu0 %v207
  %1108 = vmatpush1.msra.mxu0 %v206
  %1109 = vmatprep.subr.mxu0 %v215
  %1110 = vmatpush1.msra.mxu0 %v214
  %1111 = vmatprep.subr.mxu0 %v223
  %1112 = vmatpush1.msra.mxu0 %v222
  %1113 = vmatprep.subr.mxu0 %v231
  %1114 = vmatpush1.msra.mxu0 %v230
  %1115 = vmatprep.subr.mxu0 %v239
  %1116 = vmatpush1.msra.mxu0 %v238
  %1117 = vmatprep.subr.mxu0 %v247
  %1118 = vmatpush1.msra.mxu0 %v246
  %1119 = vmatprep.subr.mxu0 %v255
  %1120 = vmatpush1.msra.mxu0 %v254
  %1121 = vmatprep.subr.mxu0 %v263
  %1122 = vmatpush1.msra.mxu0 %v262
  %1123 = vmatprep.subr.mxu0 %v271
  %1124 = vmatpush1.msra.mxu0 %v270
  %1125 = vmatprep.subr.mxu0 %v279
  %1126 = vmatpush1.msra.mxu0 %v278
  %1127 = vmatprep.subr.mxu0 %v287
  %1128 = vmatpush1.msra.mxu0 %v286
  %1129 = vmatprep.subr.mxu0 %v295
  %1130 = vmatpush1.msra.mxu0 %v294
  %1131 = vmatprep.mubr.f32.mxu0 %v39
  %1132 = vmatmul.mubr.f32.gmra.mrb[0].mxu0 %v38
  %v1133 = vpop.f32.mrb[0].mxu0
  %v1134 = vadd.f32 %v825, %v1133
  %v1135 = vpop.f32.mrb[0].mxu0
  %v1136 = vadd.f32 %v829, %v1135
  %1137 = vdwg.mxu0
  %1138 = vmatprep.subr.mxu0 %v303
  %1139 = vmatpush1.msra.mxu0 %v302
  %1140 = vmatprep.subr.mxu0 %v311
  %1141 = vmatpush1.msra.mxu0 %v310
  %1142 = vmatprep.subr.mxu0 %v319
  %1143 = vmatpush1.msra.mxu0 %v318
  %1144 = vmatprep.subr.mxu0 %v327
  %1145 = vmatpush1.msra.mxu0 %v326
  %1146 = vmatprep.subr.mxu0 %v335
  %1147 = vmatpush1.msra.mxu0 %v334
  %1148 = vmatprep.subr.mxu0 %v343
  %1149 = vmatpush1.msra.mxu0 %v342
  %1150 = vmatprep.subr.mxu0 %v351
  %1151 = vmatpush1.msra.mxu0 %v350
  %1152 = vmatprep.subr.mxu0 %v359
  %1153 = vmatpush1.msra.mxu0 %v358
  %1154 = vmatprep.subr.mxu0 %v367
  %1155 = vmatpush1.msra.mxu0 %v366
  %1156 = vmatprep.subr.mxu0 %v375
  %1157 = vmatpush1.msra.mxu0 %v374
  %1158 = vmatprep.subr.mxu0 %v383
  %1159 = vmatpush1.msra.mxu0 %v382
  %1160 = vmatprep.subr.mxu0 %v391
  %1161 = vmatpush1.msra.mxu0 %v390
  %1162 = vmatprep.subr.mxu0 %v399
  %1163 = vmatpush1.msra.mxu0 %v398
  %1164 = vmatprep.subr.mxu0 %v407
  %1165 = vmatpush1.msra.mxu0 %v406
  %1166 = vmatprep.subr.mxu0 %v415
  %1167 = vmatpush1.msra.mxu0 %v414
  %1168 = vmatprep.subr.mxu0 %v423
  %1169 = vmatpush1.msra.mxu0 %v422
  %1170 = vmatprep.subr.mxu0 %v431
  %1171 = vmatpush1.msra.mxu0 %v430
  %1172 = vmatprep.subr.mxu0 %v439
  %1173 = vmatpush1.msra.mxu0 %v438
  %1174 = vmatprep.subr.mxu0 %v447
  %1175 = vmatpush1.msra.mxu0 %v446
  %1176 = vmatprep.subr.mxu0 %v455
  %1177 = vmatpush1.msra.mxu0 %v454
  %1178 = vmatprep.subr.mxu0 %v463
  %1179 = vmatpush1.msra.mxu0 %v462
  %1180 = vmatprep.subr.mxu0 %v471
  %1181 = vmatpush1.msra.mxu0 %v470
  %1182 = vmatprep.subr.mxu0 %v479
  %1183 = vmatpush1.msra.mxu0 %v478
  %1184 = vmatprep.subr.mxu0 %v487
  %1185 = vmatpush1.msra.mxu0 %v486
  %1186 = vmatprep.subr.mxu0 %v495
  %1187 = vmatpush1.msra.mxu0 %v494
  %1188 = vmatprep.subr.mxu0 %v503
  %1189 = vmatpush1.msra.mxu0 %v502
  %1190 = vmatprep.subr.mxu0 %v511
  %1191 = vmatpush1.msra.mxu0 %v510
  %1192 = vmatprep.subr.mxu0 %v519
  %1193 = vmatpush1.msra.mxu0 %v518
  %1194 = vmatprep.subr.mxu0 %v527
  %1195 = vmatpush1.msra.mxu0 %v526
  %1196 = vmatprep.subr.mxu0 %v535
  %1197 = vmatpush1.msra.mxu0 %v534
  %1198 = vmatprep.subr.mxu0 %v543
  %1199 = vmatpush1.msra.mxu0 %v542
  %1200 = vmatprep.subr.mxu0 %v551
  %1201 = vmatpush1.msra.mxu0 %v550
  %1202 = vmatprep.mubr.f32.mxu0 %v41
  %1203 = vmatmul.mubr.f32.gmra.mrb[0].mxu0 %v40
  %v1204 = vpop.f32.mrb[0].mxu0
  %v1205 = vadd.f32 %v1134, %v1204
  %v1206 = vpop.f32.mrb[0].mxu0
  %v1207 = vadd.f32 %v1136, %v1206
  %1208 = vdwg.mxu0
  %1209 = vmatprep.subr.mxu0 %v559
  %1210 = vmatpush1.msra.mxu0 %v558
  %1211 = vmatprep.subr.mxu0 %v567
  %1212 = vmatpush1.msra.mxu0 %v566
  %1213 = vmatprep.subr.mxu0 %v575
  %1214 = vmatpush1.msra.mxu0 %v574
  %1215 = vmatprep.subr.mxu0 %v583
  %1216 = vmatpush1.msra.mxu0 %v582
  %1217 = vmatprep.subr.mxu0 %v591
  %1218 = vmatpush1.msra.mxu0 %v590
  %1219 = vmatprep.subr.mxu0 %v599
  %1220 = vmatpush1.msra.mxu0 %v598
  %1221 = vmatprep.subr.mxu0 %v607
  %1222 = vmatpush1.msra.mxu0 %v606
  %1223 = vmatprep.subr.mxu0 %v615
  %1224 = vmatpush1.msra.mxu0 %v614
  %1225 = vmatprep.subr.mxu0 %v623
  %1226 = vmatpush1.msra.mxu0 %v622
  %1227 = vmatprep.subr.mxu0 %v631
  %1228 = vmatpush1.msra.mxu0 %v630
  %1229 = vmatprep.subr.mxu0 %v639
  %1230 = vmatpush1.msra.mxu0 %v638
  %1231 = vmatprep.subr.mxu0 %v647
  %1232 = vmatpush1.msra.mxu0 %v646
  %1233 = vmatprep.subr.mxu0 %v655
  %1234 = vmatpush1.msra.mxu0 %v654
  %1235 = vmatprep.subr.mxu0 %v663
  %1236 = vmatpush1.msra.mxu0 %v662
  %1237 = vmatprep.subr.mxu0 %v671
  %1238 = vmatpush1.msra.mxu0 %v670
  %1239 = vmatprep.subr.mxu0 %v679
  %1240 = vmatpush1.msra.mxu0 %v678
  %1241 = vmatprep.subr.mxu0 %v687
  %1242 = vmatpush1.msra.mxu0 %v686
  %1243 = vmatprep.subr.mxu0 %v695
  %1244 = vmatpush1.msra.mxu0 %v694
  %1245 = vmatprep.subr.mxu0 %v703
  %1246 = vmatpush1.msra.mxu0 %v702
  %1247 = vmatprep.subr.mxu0 %v711
  %1248 = vmatpush1.msra.mxu0 %v710
  %1249 = vmatprep.subr.mxu0 %v719
  %1250 = vmatpush1.msra.mxu0 %v718
  %1251 = vmatprep.subr.mxu0 %v727
  %1252 = vmatpush1.msra.mxu0 %v726
  %1253 = vmatprep.subr.mxu0 %v735
  %1254 = vmatpush1.msra.mxu0 %v734
  %1255 = vmatprep.subr.mxu0 %v743
  %1256 = vmatpush1.msra.mxu0 %v742
  %1257 = vmatprep.subr.mxu0 %v751
  %1258 = vmatpush1.msra.mxu0 %v750
  %1259 = vmatprep.subr.mxu0 %v759
  %1260 = vmatpush1.msra.mxu0 %v758
  %1261 = vmatprep.subr.mxu0 %v767
  %1262 = vmatpush1.msra.mxu0 %v766
  %1263 = vmatprep.subr.mxu0 %v775
  %1264 = vmatpush1.msra.mxu0 %v774
  %1265 = vmatprep.subr.mxu0 %v783
  %1266 = vmatpush1.msra.mxu0 %v782
  %1267 = vmatprep.subr.mxu0 %v791
  %1268 = vmatpush1.msra.mxu0 %v790
  %1269 = vmatprep.subr.mxu0 %v799
  %1270 = vmatpush1.msra.mxu0 %v798
  %1271 = vmatprep.subr.mxu0 %v807
  %1272 = vmatpush1.msra.mxu0 %v806
  %1273 = vmatprep.mubr.f32.mxu0 %v43
  %1274 = vmatmul.mubr.f32.gmra.mrb[0].mxu0 %v42
  %v1275 = vpop.f32.mrb[0].mxu0
  %v1276 = vadd.f32 %v1205, %v1275
  %v1277 = vpop.f32.mrb[0].mxu0
  %v1278 = vadd.f32 %v1207, %v1277
  %1279 = vdwg.mxu0
  %1280 = vmatprep.subr.mxu0 %v49
  %1281 = vmatpush1.msra.mxu0 %v48
  %1282 = vmatprep.subr.mxu0 %v57
  %1283 = vmatpush1.msra.mxu0 %v56
  %1284 = vmatprep.subr.mxu0 %v65
  %1285 = vmatpush1.msra.mxu0 %v64
  %1286 = vmatprep.subr.mxu0 %v73
  %1287 = vmatpush1.msra.mxu0 %v72
  %1288 = vmatprep.subr.mxu0 %v81
  %1289 = vmatpush1.msra.mxu0 %v80
  %1290 = vmatprep.subr.mxu0 %v89
  %1291 = vmatpush1.msra.mxu0 %v88
  %1292 = vmatprep.subr.mxu0 %v97
  %1293 = vmatpush1.msra.mxu0 %v96
  %1294 = vmatprep.subr.mxu0 %v105
  %1295 = vmatpush1.msra.mxu0 %v104
  %1296 = vmatprep.subr.mxu0 %v113
  %1297 = vmatpush1.msra.mxu0 %v112
  %1298 = vmatprep.subr.mxu0 %v121
  %1299 = vmatpush1.msra.mxu0 %v120
  %1300 = vmatprep.subr.mxu0 %v129
  %1301 = vmatpush1.msra.mxu0 %v128
  %1302 = vmatprep.subr.mxu0 %v137
  %1303 = vmatpush1.msra.mxu0 %v136
  %1304 = vmatprep.subr.mxu0 %v145
  %1305 = vmatpush1.msra.mxu0 %v144
  %1306 = vmatprep.subr.mxu0 %v153
  %1307 = vmatpush1.msra.mxu0 %v152
  %1308 = vmatprep.subr.mxu0 %v161
  %1309 = vmatpush1.msra.mxu0 %v160
  %1310 = vmatprep.subr.mxu0 %v169
  %1311 = vmatpush1.msra.mxu0 %v168
  %1312 = vmatprep.subr.mxu0 %v177
  %1313 = vmatpush1.msra.mxu0 %v176
  %1314 = vmatprep.subr.mxu0 %v185
  %1315 = vmatpush1.msra.mxu0 %v184
  %1316 = vmatprep.subr.mxu0 %v193
  %1317 = vmatpush1.msra.mxu0 %v192
  %1318 = vmatprep.subr.mxu0 %v201
  %1319 = vmatpush1.msra.mxu0 %v200
  %1320 = vmatprep.subr.mxu0 %v209
  %1321 = vmatpush1.msra.mxu0 %v208
  %1322 = vmatprep.subr.mxu0 %v217
  %1323 = vmatpush1.msra.mxu0 %v216
  %1324 = vmatprep.subr.mxu0 %v225
  %1325 = vmatpush1.msra.mxu0 %v224
  %1326 = vmatprep.subr.mxu0 %v233
  %1327 = vmatpush1.msra.mxu0 %v232
  %1328 = vmatprep.subr.mxu0 %v241
  %1329 = vmatpush1.msra.mxu0 %v240
  %1330 = vmatprep.subr.mxu0 %v249
  %1331 = vmatpush1.msra.mxu0 %v248
  %1332 = vmatprep.subr.mxu0 %v257
  %1333 = vmatpush1.msra.mxu0 %v256
  %1334 = vmatprep.subr.mxu0 %v265
  %1335 = vmatpush1.msra.mxu0 %v264
  %1336 = vmatprep.subr.mxu0 %v273
  %1337 = vmatpush1.msra.mxu0 %v272
  %1338 = vmatprep.subr.mxu0 %v281
  %1339 = vmatpush1.msra.mxu0 %v280
  %1340 = vmatprep.subr.mxu0 %v289
  %1341 = vmatpush1.msra.mxu0 %v288
  %1342 = vmatprep.subr.mxu0 %v297
  %1343 = vmatpush1.msra.mxu0 %v296
  %1344 = vmatprep.mubr.f32.mxu0 %v39
  %1345 = vmatmul.mubr.f32.gmra.mrb[0].mxu0 %v38
  %v1346 = vpop.f32.mrb[0].mxu0
  %v1347 = vadd.f32 %v833, %v1346
  %v1348 = vpop.f32.mrb[0].mxu0
  %v1349 = vadd.f32 %v837, %v1348
  %1350 = vdwg.mxu0
  %1351 = vmatprep.subr.mxu0 %v305
  %1352 = vmatpush1.msra.mxu0 %v304
  %1353 = vmatprep.subr.mxu0 %v313
  %1354 = vmatpush1.msra.mxu0 %v312
  %1355 = vmatprep.subr.mxu0 %v321
  %1356 = vmatpush1.msra.mxu0 %v320
  %1357 = vmatprep.subr.mxu0 %v329
  %1358 = vmatpush1.msra.mxu0 %v328
  %1359 = vmatprep.subr.mxu0 %v337
  %1360 = vmatpush1.msra.mxu0 %v336
  %1361 = vmatprep.subr.mxu0 %v345
  %1362 = vmatpush1.msra.mxu0 %v344
  %1363 = vmatprep.subr.mxu0 %v353
  %1364 = vmatpush1.msra.mxu0 %v352
  %1365 = vmatprep.subr.mxu0 %v361
  %1366 = vmatpush1.msra.mxu0 %v360
  %1367 = vmatprep.subr.mxu0 %v369
  %1368 = vmatpush1.msra.mxu0 %v368
  %1369 = vmatprep.subr.mxu0 %v377
  %1370 = vmatpush1.msra.mxu0 %v376
  %1371 = vmatprep.subr.mxu0 %v385
  %1372 = vmatpush1.msra.mxu0 %v384
  %1373 = vmatprep.subr.mxu0 %v393
  %1374 = vmatpush1.msra.mxu0 %v392
  %1375 = vmatprep.subr.mxu0 %v401
  %1376 = vmatpush1.msra.mxu0 %v400
  %1377 = vmatprep.subr.mxu0 %v409
  %1378 = vmatpush1.msra.mxu0 %v408
  %1379 = vmatprep.subr.mxu0 %v417
  %1380 = vmatpush1.msra.mxu0 %v416
  %1381 = vmatprep.subr.mxu0 %v425
  %1382 = vmatpush1.msra.mxu0 %v424
  %1383 = vmatprep.subr.mxu0 %v433
  %1384 = vmatpush1.msra.mxu0 %v432
  %1385 = vmatprep.subr.mxu0 %v441
  %1386 = vmatpush1.msra.mxu0 %v440
  %1387 = vmatprep.subr.mxu0 %v449
  %1388 = vmatpush1.msra.mxu0 %v448
  %1389 = vmatprep.subr.mxu0 %v457
  %1390 = vmatpush1.msra.mxu0 %v456
  %1391 = vmatprep.subr.mxu0 %v465
  %1392 = vmatpush1.msra.mxu0 %v464
  %1393 = vmatprep.subr.mxu0 %v473
  %1394 = vmatpush1.msra.mxu0 %v472
  %1395 = vmatprep.subr.mxu0 %v481
  %1396 = vmatpush1.msra.mxu0 %v480
  %1397 = vmatprep.subr.mxu0 %v489
  %1398 = vmatpush1.msra.mxu0 %v488
  %1399 = vmatprep.subr.mxu0 %v497
  %1400 = vmatpush1.msra.mxu0 %v496
  %1401 = vmatprep.subr.mxu0 %v505
  %1402 = vmatpush1.msra.mxu0 %v504
  %1403 = vmatprep.subr.mxu0 %v513
  %1404 = vmatpush1.msra.mxu0 %v512
  %1405 = vmatprep.subr.mxu0 %v521
  %1406 = vmatpush1.msra.mxu0 %v520
  %1407 = vmatprep.subr.mxu0 %v529
  %1408 = vmatpush1.msra.mxu0 %v528
  %1409 = vmatprep.subr.mxu0 %v537
  %1410 = vmatpush1.msra.mxu0 %v536
  %1411 = vmatprep.subr.mxu0 %v545
  %1412 = vmatpush1.msra.mxu0 %v544
  %1413 = vmatprep.subr.mxu0 %v553
  %1414 = vmatpush1.msra.mxu0 %v552
  %1415 = vmatprep.mubr.f32.mxu0 %v41
  %1416 = vmatmul.mubr.f32.gmra.mrb[0].mxu0 %v40
  %v1417 = vpop.f32.mrb[0].mxu0
  %v1418 = vadd.f32 %v1347, %v1417
  %v1419 = vpop.f32.mrb[0].mxu0
  %v1420 = vadd.f32 %v1349, %v1419
  %1421 = vdwg.mxu0
  %1422 = vmatprep.subr.mxu0 %v561
  %1423 = vmatpush1.msra.mxu0 %v560
  %1424 = vmatprep.subr.mxu0 %v569
  %1425 = vmatpush1.msra.mxu0 %v568
  %1426 = vmatprep.subr.mxu0 %v577
  %1427 = vmatpush1.msra.mxu0 %v576
  %1428 = vmatprep.subr.mxu0 %v585
  %1429 = vmatpush1.msra.mxu0 %v584
  %1430 = vmatprep.subr.mxu0 %v593
  %1431 = vmatpush1.msra.mxu0 %v592
  %1432 = vmatprep.subr.mxu0 %v601
  %1433 = vmatpush1.msra.mxu0 %v600
  %1434 = vmatprep.subr.mxu0 %v609
  %1435 = vmatpush1.msra.mxu0 %v608
  %1436 = vmatprep.subr.mxu0 %v617
  %1437 = vmatpush1.msra.mxu0 %v616
  %1438 = vmatprep.subr.mxu0 %v625
  %1439 = vmatpush1.msra.mxu0 %v624
  %1440 = vmatprep.subr.mxu0 %v633
  %1441 = vmatpush1.msra.mxu0 %v632
  %1442 = vmatprep.subr.mxu0 %v641
  %1443 = vmatpush1.msra.mxu0 %v640
  %1444 = vmatprep.subr.mxu0 %v649
  %1445 = vmatpush1.msra.mxu0 %v648
  %1446 = vmatprep.subr.mxu0 %v657
  %1447 = vmatpush1.msra.mxu0 %v656
  %1448 = vmatprep.subr.mxu0 %v665
  %1449 = vmatpush1.msra.mxu0 %v664
  %1450 = vmatprep.subr.mxu0 %v673
  %1451 = vmatpush1.msra.mxu0 %v672
  %1452 = vmatprep.subr.mxu0 %v681
  %1453 = vmatpush1.msra.mxu0 %v680
  %1454 = vmatprep.subr.mxu0 %v689
  %1455 = vmatpush1.msra.mxu0 %v688
  %1456 = vmatprep.subr.mxu0 %v697
  %1457 = vmatpush1.msra.mxu0 %v696
  %1458 = vmatprep.subr.mxu0 %v705
  %1459 = vmatpush1.msra.mxu0 %v704
  %1460 = vmatprep.subr.mxu0 %v713
  %1461 = vmatpush1.msra.mxu0 %v712
  %1462 = vmatprep.subr.mxu0 %v721
  %1463 = vmatpush1.msra.mxu0 %v720
  %1464 = vmatprep.subr.mxu0 %v729
  %1465 = vmatpush1.msra.mxu0 %v728
  %1466 = vmatprep.subr.mxu0 %v737
  %1467 = vmatpush1.msra.mxu0 %v736
  %1468 = vmatprep.subr.mxu0 %v745
  %1469 = vmatpush1.msra.mxu0 %v744
  %1470 = vmatprep.subr.mxu0 %v753
  %1471 = vmatpush1.msra.mxu0 %v752
  %1472 = vmatprep.subr.mxu0 %v761
  %1473 = vmatpush1.msra.mxu0 %v760
  %1474 = vmatprep.subr.mxu0 %v769
  %1475 = vmatpush1.msra.mxu0 %v768
  %1476 = vmatprep.subr.mxu0 %v777
  %1477 = vmatpush1.msra.mxu0 %v776
  %1478 = vmatprep.subr.mxu0 %v785
  %1479 = vmatpush1.msra.mxu0 %v784
  %1480 = vmatprep.subr.mxu0 %v793
  %1481 = vmatpush1.msra.mxu0 %v792
  %1482 = vmatprep.subr.mxu0 %v801
  %1483 = vmatpush1.msra.mxu0 %v800
  %1484 = vmatprep.subr.mxu0 %v809
  %1485 = vmatpush1.msra.mxu0 %v808
  %1486 = vmatprep.mubr.f32.mxu0 %v43
  %1487 = vmatmul.mubr.f32.gmra.mrb[0].mxu0 %v42
  %v1488 = vpop.f32.mrb[0].mxu0
  %v1489 = vadd.f32 %v1418, %v1488
  %v1490 = vpop.f32.mrb[0].mxu0
  %v1491 = vadd.f32 %v1420, %v1490
  %1492 = vdwg.mxu0
  %1493 = vmatprep.subr.mxu0 %v51
  %1494 = vmatpush1.msra.mxu0 %v50
  %1495 = vmatprep.subr.mxu0 %v59
  %1496 = vmatpush1.msra.mxu0 %v58
  %1497 = vmatprep.subr.mxu0 %v67
  %1498 = vmatpush1.msra.mxu0 %v66
  %1499 = vmatprep.subr.mxu0 %v75
  %1500 = vmatpush1.msra.mxu0 %v74
  %1501 = vmatprep.subr.mxu0 %v83
  %1502 = vmatpush1.msra.mxu0 %v82
  %1503 = vmatprep.subr.mxu0 %v91
  %1504 = vmatpush1.msra.mxu0 %v90
  %1505 = vmatprep.subr.mxu0 %v99
  %1506 = vmatpush1.msra.mxu0 %v98
  %1507 = vmatprep.subr.mxu0 %v107
  %1508 = vmatpush1.msra.mxu0 %v106
  %1509 = vmatprep.subr.mxu0 %v115
  %1510 = vmatpush1.msra.mxu0 %v114
  %1511 = vmatprep.subr.mxu0 %v123
  %1512 = vmatpush1.msra.mxu0 %v122
  %1513 = vmatprep.subr.mxu0 %v131
  %1514 = vmatpush1.msra.mxu0 %v130
  %1515 = vmatprep.subr.mxu0 %v139
  %1516 = vmatpush1.msra.mxu0 %v138
  %1517 = vmatprep.subr.mxu0 %v147
  %1518 = vmatpush1.msra.mxu0 %v146
  %1519 = vmatprep.subr.mxu0 %v155
  %1520 = vmatpush1.msra.mxu0 %v154
  %1521 = vmatprep.subr.mxu0 %v163
  %1522 = vmatpush1.msra.mxu0 %v162
  %1523 = vmatprep.subr.mxu0 %v171
  %1524 = vmatpush1.msra.mxu0 %v170
  %1525 = vmatprep.subr.mxu0 %v179
  %1526 = vmatpush1.msra.mxu0 %v178
  %1527 = vmatprep.subr.mxu0 %v187
  %1528 = vmatpush1.msra.mxu0 %v186
  %1529 = vmatprep.subr.mxu0 %v195
  %1530 = vmatpush1.msra.mxu0 %v194
  %1531 = vmatprep.subr.mxu0 %v203
  %1532 = vmatpush1.msra.mxu0 %v202
  %1533 = vmatprep.subr.mxu0 %v211
  %1534 = vmatpush1.msra.mxu0 %v210
  %1535 = vmatprep.subr.mxu0 %v219
  %1536 = vmatpush1.msra.mxu0 %v218
  %1537 = vmatprep.subr.mxu0 %v227
  %1538 = vmatpush1.msra.mxu0 %v226
  %1539 = vmatprep.subr.mxu0 %v235
  %1540 = vmatpush1.msra.mxu0 %v234
  %1541 = vmatprep.subr.mxu0 %v243
  %1542 = vmatpush1.msra.mxu0 %v242
  %1543 = vmatprep.subr.mxu0 %v251
  %1544 = vmatpush1.msra.mxu0 %v250
  %1545 = vmatprep.subr.mxu0 %v259
  %1546 = vmatpush1.msra.mxu0 %v258
  %1547 = vmatprep.subr.mxu0 %v267
  %1548 = vmatpush1.msra.mxu0 %v266
  %1549 = vmatprep.subr.mxu0 %v275
  %1550 = vmatpush1.msra.mxu0 %v274
  %1551 = vmatprep.subr.mxu0 %v283
  %1552 = vmatpush1.msra.mxu0 %v282
  %1553 = vmatprep.subr.mxu0 %v291
  %1554 = vmatpush1.msra.mxu0 %v290
  %1555 = vmatprep.subr.mxu0 %v299
  %1556 = vmatpush1.msra.mxu0 %v298
  %1557 = vmatprep.mubr.f32.mxu0 %v39
  %1558 = vmatmul.mubr.f32.gmra.mrb[0].mxu0 %v38
  %v1559 = vpop.f32.mrb[0].mxu0
  %v1560 = vadd.f32 %v841, %v1559
  %v1561 = vpop.f32.mrb[0].mxu0
  %v1562 = vadd.f32 %v845, %v1561
  %1563 = vdwg.mxu0
  %1564 = vmatprep.subr.mxu0 %v307
  %1565 = vmatpush1.msra.mxu0 %v306
  %1566 = vmatprep.subr.mxu0 %v315
  %1567 = vmatpush1.msra.mxu0 %v314
  %1568 = vmatprep.subr.mxu0 %v323
  %1569 = vmatpush1.msra.mxu0 %v322
  %1570 = vmatprep.subr.mxu0 %v331
  %1571 = vmatpush1.msra.mxu0 %v330
  %1572 = vmatprep.subr.mxu0 %v339
  %1573 = vmatpush1.msra.mxu0 %v338
  %1574 = vmatprep.subr.mxu0 %v347
  %1575 = vmatpush1.msra.mxu0 %v346
  %1576 = vmatprep.subr.mxu0 %v355
  %1577 = vmatpush1.msra.mxu0 %v354
  %1578 = vmatprep.subr.mxu0 %v363
  %1579 = vmatpush1.msra.mxu0 %v362
  %1580 = vmatprep.subr.mxu0 %v371
  %1581 = vmatpush1.msra.mxu0 %v370
  %1582 = vmatprep.subr.mxu0 %v379
  %1583 = vmatpush1.msra.mxu0 %v378
  %1584 = vmatprep.subr.mxu0 %v387
  %1585 = vmatpush1.msra.mxu0 %v386
  %1586 = vmatprep.subr.mxu0 %v395
  %1587 = vmatpush1.msra.mxu0 %v394
  %1588 = vmatprep.subr.mxu0 %v403
  %1589 = vmatpush1.msra.mxu0 %v402
  %1590 = vmatprep.subr.mxu0 %v411
  %1591 = vmatpush1.msra.mxu0 %v410
  %1592 = vmatprep.subr.mxu0 %v419
  %1593 = vmatpush1.msra.mxu0 %v418
  %1594 = vmatprep.subr.mxu0 %v427
  %1595 = vmatpush1.msra.mxu0 %v426
  %1596 = vmatprep.subr.mxu0 %v435
  %1597 = vmatpush1.msra.mxu0 %v434
  %1598 = vmatprep.subr.mxu0 %v443
  %1599 = vmatpush1.msra.mxu0 %v442
  %1600 = vmatprep.subr.mxu0 %v451
  %1601 = vmatpush1.msra.mxu0 %v450
  %1602 = vmatprep.subr.mxu0 %v459
  %1603 = vmatpush1.msra.mxu0 %v458
  %1604 = vmatprep.subr.mxu0 %v467
  %1605 = vmatpush1.msra.mxu0 %v466
  %1606 = vmatprep.subr.mxu0 %v475
  %1607 = vmatpush1.msra.mxu0 %v474
  %1608 = vmatprep.subr.mxu0 %v483
  %1609 = vmatpush1.msra.mxu0 %v482
  %1610 = vmatprep.subr.mxu0 %v491
  %1611 = vmatpush1.msra.mxu0 %v490
  %1612 = vmatprep.subr.mxu0 %v499
  %1613 = vmatpush1.msra.mxu0 %v498
  %1614 = vmatprep.subr.mxu0 %v507
  %1615 = vmatpush1.msra.mxu0 %v506
  %1616 = vmatprep.subr.mxu0 %v515
  %1617 = vmatpush1.msra.mxu0 %v514
  %1618 = vmatprep.subr.mxu0 %v523
  %1619 = vmatpush1.msra.mxu0 %v522
  %1620 = vmatprep.subr.mxu0 %v531
  %1621 = vmatpush1.msra.mxu0 %v530
  %1622 = vmatprep.subr.mxu0 %v539
  %1623 = vmatpush1.msra.mxu0 %v538
  %1624 = vmatprep.subr.mxu0 %v547
  %1625 = vmatpush1.msra.mxu0 %v546
  %1626 = vmatprep.subr.mxu0 %v555
  %1627 = vmatpush1.msra.mxu0 %v554
  %1628 = vmatprep.mubr.f32.mxu0 %v41
  %1629 = vmatmul.mubr.f32.gmra.mrb[0].mxu0 %v40
  %v1630 = vpop.f32.mrb[0].mxu0
  %v1631 = vadd.f32 %v1560, %v1630
  %v1632 = vpop.f32.mrb[0].mxu0
  %v1633 = vadd.f32 %v1562, %v1632
  %1634 = vdwg.mxu0
  %1635 = vmatprep.subr.mxu0 %v563
  %1636 = vmatpush1.msra.mxu0 %v562
  %1637 = vmatprep.subr.mxu0 %v571
  %1638 = vmatpush1.msra.mxu0 %v570
  %1639 = vmatprep.subr.mxu0 %v579
  %1640 = vmatpush1.msra.mxu0 %v578
  %1641 = vmatprep.subr.mxu0 %v587
  %1642 = vmatpush1.msra.mxu0 %v586
  %1643 = vmatprep.subr.mxu0 %v595
  %1644 = vmatpush1.msra.mxu0 %v594
  %1645 = vmatprep.subr.mxu0 %v603
  %1646 = vmatpush1.msra.mxu0 %v602
  %1647 = vmatprep.subr.mxu0 %v611
  %1648 = vmatpush1.msra.mxu0 %v610
  %1649 = vmatprep.subr.mxu0 %v619
  %1650 = vmatpush1.msra.mxu0 %v618
  %1651 = vmatprep.subr.mxu0 %v627
  %1652 = vmatpush1.msra.mxu0 %v626
  %1653 = vmatprep.subr.mxu0 %v635
  %1654 = vmatpush1.msra.mxu0 %v634
  %1655 = vmatprep.subr.mxu0 %v643
  %1656 = vmatpush1.msra.mxu0 %v642
  %1657 = vmatprep.subr.mxu0 %v651
  %1658 = vmatpush1.msra.mxu0 %v650
  %1659 = vmatprep.subr.mxu0 %v659
  %1660 = vmatpush1.msra.mxu0 %v658
  %1661 = vmatprep.subr.mxu0 %v667
  %1662 = vmatpush1.msra.mxu0 %v666
  %1663 = vmatprep.subr.mxu0 %v675
  %1664 = vmatpush1.msra.mxu0 %v674
  %1665 = vmatprep.subr.mxu0 %v683
  %1666 = vmatpush1.msra.mxu0 %v682
  %1667 = vmatprep.subr.mxu0 %v691
  %1668 = vmatpush1.msra.mxu0 %v690
  %1669 = vmatprep.subr.mxu0 %v699
  %1670 = vmatpush1.msra.mxu0 %v698
  %1671 = vmatprep.subr.mxu0 %v707
  %1672 = vmatpush1.msra.mxu0 %v706
  %1673 = vmatprep.subr.mxu0 %v715
  %1674 = vmatpush1.msra.mxu0 %v714
  %1675 = vmatprep.subr.mxu0 %v723
  %1676 = vmatpush1.msra.mxu0 %v722
  %1677 = vmatprep.subr.mxu0 %v731
  %1678 = vmatpush1.msra.mxu0 %v730
  %1679 = vmatprep.subr.mxu0 %v739
  %1680 = vmatpush1.msra.mxu0 %v738
  %1681 = vmatprep.subr.mxu0 %v747
  %1682 = vmatpush1.msra.mxu0 %v746
  %1683 = vmatprep.subr.mxu0 %v755
  %1684 = vmatpush1.msra.mxu0 %v754
  %1685 = vmatprep.subr.mxu0 %v763
  %1686 = vmatpush1.msra.mxu0 %v762
  %1687 = vmatprep.subr.mxu0 %v771
  %1688 = vmatpush1.msra.mxu0 %v770
  %1689 = vmatprep.subr.mxu0 %v779
  %1690 = vmatpush1.msra.mxu0 %v778
  %1691 = vmatprep.subr.mxu0 %v787
  %1692 = vmatpush1.msra.mxu0 %v786
  %1693 = vmatprep.subr.mxu0 %v795
  %1694 = vmatpush1.msra.mxu0 %v794
  %1695 = vmatprep.subr.mxu0 %v803
  %1696 = vmatpush1.msra.mxu0 %v802
  %1697 = vmatprep.subr.mxu0 %v811
  %1698 = vmatpush1.msra.mxu0 %v810
  %1699 = vmatprep.mubr.f32.mxu0 %v43
  %1700 = vmatmul.mubr.f32.gmra.mrb[0].mxu0 %v42
  %v1701 = vpop.f32.mrb[0].mxu0
  %v1702 = vadd.f32 %v1631, %v1701
  %v1703 = vpop.f32.mrb[0].mxu0
  %v1704 = vadd.f32 %v1633, %v1703
  %1705 = vdwg.mxu0
  %v1706 = vmax.f32 %v1063, 0.0
  %v1707 = vmax.f32 %v1065, 0.0
  %v1708 = vmax.f32 %v1276, 0.0
  %v1709 = vmax.f32 %v1278, 0.0
  %v1710 = vmax.f32 %v1489, 0.0
  %v1711 = vmax.f32 %v1491, 0.0
  %v1712 = vmax.f32 %v1702, 0.0
  %v1713 = vmax.f32 %v1704, 0.0
  %v1714 = vld [vmem:[%s3] sm:$0xff]
  %v1715 = vld [vmem:[%s3 + $0x8] sm:$0xff]
  %v1716 = vld [vmem:[%s3 + $0x10] sm:$0xff]
  %v1717 = vld [vmem:[%s3 + $0x18] sm:$0xff]
  %v1718 = vld [vmem:[%s3 + $0x20] sm:$0xff]
  %v1719 = vld [vmem:[%s3 + $0x28] sm:$0xff]
  %v1720 = vld [vmem:[%s3 + $0x30] sm:$0xff]
  %v1721 = vld [vmem:[%s3 + $0x38] sm:$0xff]
  %v1722 = vld [vmem:[%s3 + $0x40] sm:$0xff]
  %v1723 = vld [vmem:[%s3 + $0x48] sm:$0xff]
  %v1724 = vld [vmem:[%s3 + $0x50] sm:$0xff]
  %v1725 = vld [vmem:[%s3 + $0x58] sm:$0xff]
  %v1726 = vld [vmem:[%s3 + $0x60] sm:$0xff]
  %v1727 = vld [vmem:[%s3 + $0x68] sm:$0xff]
  %v1728 = vld [vmem:[%s3 + $0x70] sm:$0xff]
  %v1729 = vld [vmem:[%s3 + $0x78] sm:$0xff]
  %v1730 = vld [vmem:[%s3 + $0x80] sm:$0xff]
  %v1731 = vld [vmem:[%s3 + $0x88] sm:$0xff]
  %v1732 = vld [vmem:[%s3 + $0x90] sm:$0xff]
  %v1733 = vld [vmem:[%s3 + $0x98] sm:$0xff]
  %v1734 = vld [vmem:[%s3 + $0xa0] sm:$0xff]
  %v1735 = vld [vmem:[%s3 + $0xa8] sm:$0xff]
  %v1736 = vld [vmem:[%s3 + $0xb0] sm:$0xff]
  %v1737 = vld [vmem:[%s3 + $0xb8] sm:$0xff]
  %v1738 = vld [vmem:[%s3 + $0xc0] sm:$0xff]
  %v1739 = vld [vmem:[%s3 + $0xc8] sm:$0xff]
  %v1740 = vld [vmem:[%s3 + $0xd0] sm:$0xff]
  %v1741 = vld [vmem:[%s3 + $0xd8] sm:$0xff]
  %v1742 = vld [vmem:[%s3 + $0xe0] sm:$0xff]
  %v1743 = vld [vmem:[%s3 + $0xe8] sm:$0xff]
  %v1744 = vld [vmem:[%s3 + $0xf0] sm:$0xff]
  %v1745 = vld [vmem:[%s3 + $0xf8] sm:$0xff]
  %v1746 = vld [vmem:[%s3 + $0x100] sm:$0xff]
  %v1747 = vld [vmem:[%s3 + $0x108] sm:$0xff]
  %v1748 = vld [vmem:[%s3 + $0x110] sm:$0xff]
  %v1749 = vld [vmem:[%s3 + $0x118] sm:$0xff]
  %v1750 = vld [vmem:[%s3 + $0x120] sm:$0xff]
  %v1751 = vld [vmem:[%s3 + $0x128] sm:$0xff]
  %v1752 = vld [vmem:[%s3 + $0x130] sm:$0xff]
  %v1753 = vld [vmem:[%s3 + $0x138] sm:$0xff]
  %v1754 = vld [vmem:[%s3 + $0x140] sm:$0xff]
  %v1755 = vld [vmem:[%s3 + $0x148] sm:$0xff]
  %v1756 = vld [vmem:[%s3 + $0x150] sm:$0xff]
  %v1757 = vld [vmem:[%s3 + $0x158] sm:$0xff]
  %v1758 = vld [vmem:[%s3 + $0x160] sm:$0xff]
  %v1759 = vld [vmem:[%s3 + $0x168] sm:$0xff]
  %v1760 = vld [vmem:[%s3 + $0x170] sm:$0xff]
  %v1761 = vld [vmem:[%s3 + $0x178] sm:$0xff]
  %v1762 = vld [vmem:[%s3 + $0x180] sm:$0xff]
  %v1763 = vld [vmem:[%s3 + $0x188] sm:$0xff]
  %v1764 = vld [vmem:[%s3 + $0x190] sm:$0xff]
  %v1765 = vld [vmem:[%s3 + $0x198] sm:$0xff]
  %v1766 = vld [vmem:[%s3 + $0x1a0] sm:$0xff]
  %v1767 = vld [vmem:[%s3 + $0x1a8] sm:$0xff]
  %v1768 = vld [vmem:[%s3 + $0x1b0] sm:$0xff]
  %v1769 = vld [vmem:[%s3 + $0x1b8] sm:$0xff]
  %v1770 = vld [vmem:[%s3 + $0x1c0] sm:$0xff]
  %v1771 = vld [vmem:[%s3 + $0x1c8] sm:$0xff]
  %v1772 = vld [vmem:[%s3 + $0x1d0] sm:$0xff]
  %v1773 = vld [vmem:[%s3 + $0x1d8] sm:$0xff]
  %v1774 = vld [vmem:[%s3 + $0x1e0] sm:$0xff]
  %v1775 = vld [vmem:[%s3 + $0x1e8] sm:$0xff]
  %v1776 = vld [vmem:[%s3 + $0x1f0] sm:$0xff]
  %v1777 = vld [vmem:[%s3 + $0x1f8] sm:$0xff]
  %v1778 = vld [vmem:[%s3 + $0x200] sm:$0xff]
  %v1779 = vld [vmem:[%s3 + $0x208] sm:$0xff]
  %v1780 = vld [vmem:[%s3 + $0x210] sm:$0xff]
  %v1781 = vld [vmem:[%s3 + $0x218] sm:$0xff]
  %v1782 = vld [vmem:[%s3 + $0x220] sm:$0xff]
  %v1783 = vld [vmem:[%s3 + $0x228] sm:$0xff]
  %v1784 = vld [vmem:[%s3 + $0x230] sm:$0xff]
  %v1785 = vld [vmem:[%s3 + $0x238] sm:$0xff]
  %v1786 = vld [vmem:[%s3 + $0x240] sm:$0xff]
  %v1787 = vld [vmem:[%s3 + $0x248] sm:$0xff]
  %v1788 = vld [vmem:[%s3 + $0x250] sm:$0xff]
  %v1789 = vld [vmem:[%s3 + $0x258] sm:$0xff]
  %v1790 = vld [vmem:[%s3 + $0x260] sm:$0xff]
  %v1791 = vld [vmem:[%s3 + $0x268] sm:$0xff]
  %v1792 = vld [vmem:[%s3 + $0x270] sm:$0xff]
  %v1793 = vld [vmem:[%s3 + $0x278] sm:$0xff]
  %v1794 = vld [vmem:[%s3 + $0x280] sm:$0xff]
  %v1795 = vld [vmem:[%s3 + $0x288] sm:$0xff]
  %v1796 = vld [vmem:[%s3 + $0x290] sm:$0xff]
  %v1797 = vld [vmem:[%s3 + $0x298] sm:$0xff]
  %v1798 = vld [vmem:[%s3 + $0x2a0] sm:$0xff]
  %v1799 = vld [vmem:[%s3 + $0x2a8] sm:$0xff]
  %v1800 = vld [vmem:[%s3 + $0x2b0] sm:$0xff]
  %v1801 = vld [vmem:[%s3 + $0x2b8] sm:$0xff]
  %v1802 = vld [vmem:[%s3 + $0x2c0] sm:$0xff]
  %v1803 = vld [vmem:[%s3 + $0x2c8] sm:$0xff]
  %v1804 = vld [vmem:[%s3 + $0x2d0] sm:$0xff]
  %v1805 = vld [vmem:[%s3 + $0x2d8] sm:$0xff]
  %v1806 = vld [vmem:[%s3 + $0x2e0] sm:$0xff]
  %v1807 = vld [vmem:[%s3 + $0x2e8] sm:$0xff]
  %v1808 = vld [vmem:[%s3 + $0x2f0] sm:$0xff]
  %v1809 = vld [vmem:[%s3 + $0x2f8] sm:$0xff]
  %v1810 = vld [vmem:[%s3 + $0x300] sm:$0xff]
  %v1811 = vld [vmem:[%s3 + $0x308] sm:$0xff]
  %v1812 = vld [vmem:[%s3 + $0x310] sm:$0xff]
  %v1813 = vld [vmem:[%s3 + $0x318] sm:$0xff]
  %v1814 = vld [vmem:[%s3 + $0x320] sm:$0xff]
  %v1815 = vld [vmem:[%s3 + $0x328] sm:$0xff]
  %v1816 = vld [vmem:[%s3 + $0x330] sm:$0xff]
  %v1817 = vld [vmem:[%s3 + $0x338] sm:$0xff]
  %v1818 = vld [vmem:[%s3 + $0x340] sm:$0xff]
  %v1819 = vld [vmem:[%s3 + $0x348] sm:$0xff]
  %v1820 = vld [vmem:[%s3 + $0x350] sm:$0xff]
  %v1821 = vld [vmem:[%s3 + $0x358] sm:$0xff]
  %v1822 = vld [vmem:[%s3 + $0x360] sm:$0xff]
  %v1823 = vld [vmem:[%s3 + $0x368] sm:$0xff]
  %v1824 = vld [vmem:[%s3 + $0x370] sm:$0xff]
  %v1825 = vld [vmem:[%s3 + $0x378] sm:$0xff]
  %v1826 = vld [vmem:[%s3 + $0x380] sm:$0xff]
  %v1827 = vld [vmem:[%s3 + $0x388] sm:$0xff]
  %v1828 = vld [vmem:[%s3 + $0x390] sm:$0xff]
  %v1829 = vld [vmem:[%s3 + $0x398] sm:$0xff]
  %v1830 = vld [vmem:[%s3 + $0x3a0] sm:$0xff]
  %v1831 = vld [vmem:[%s3 + $0x3a8] sm:$0xff]
  %v1832 = vld [vmem:[%s3 + $0x3b0] sm:$0xff]
  %v1833 = vld [vmem:[%s3 + $0x3b8] sm:$0xff]
  %v1834 = vld [vmem:[%s3 + $0x3c0] sm:$0xff]
  %v1835 = vld [vmem:[%s3 + $0x3c8] sm:$0xff]
  %v1836 = vld [vmem:[%s3 + $0x3d0] sm:$0xff]
  %v1837 = vld [vmem:[%s3 + $0x3d8] sm:$0xff]
  %v1838 = vld [vmem:[%s3 + $0x3e0] sm:$0xff]
  %v1839 = vld [vmem:[%s3 + $0x3e8] sm:$0xff]
  %v1840 = vld [vmem:[%s3 + $0x3f0] sm:$0xff]
  %v1841 = vld [vmem:[%s3 + $0x3f8] sm:$0xff]
  %v1842 = vld [vmem:[%s3 + $0x400] sm:$0xff]
  %v1843 = vld [vmem:[%s3 + $0x408] sm:$0xff]
  %v1844 = vld [vmem:[%s3 + $0x410] sm:$0xff]
  %v1845 = vld [vmem:[%s3 + $0x418] sm:$0xff]
  %v1846 = vld [vmem:[%s3 + $0x420] sm:$0xff]
  %v1847 = vld [vmem:[%s3 + $0x428] sm:$0xff]
  %v1848 = vld [vmem:[%s3 + $0x430] sm:$0xff]
  %v1849 = vld [vmem:[%s3 + $0x438] sm:$0xff]
  %v1850 = vld [vmem:[%s3 + $0x440] sm:$0xff]
  %v1851 = vld [vmem:[%s3 + $0x448] sm:$0xff]
  %v1852 = vld [vmem:[%s3 + $0x450] sm:$0xff]
  %v1853 = vld [vmem:[%s3 + $0x458] sm:$0xff]
  %v1854 = vld [vmem:[%s3 + $0x460] sm:$0xff]
  %v1855 = vld [vmem:[%s3 + $0x468] sm:$0xff]
  %v1856 = vld [vmem:[%s3 + $0x470] sm:$0xff]
  %v1857 = vld [vmem:[%s3 + $0x478] sm:$0xff]
  %v1858 = vld [vmem:[%s3 + $0x480] sm:$0xff]
  %v1859 = vld [vmem:[%s3 + $0x488] sm:$0xff]
  %v1860 = vld [vmem:[%s3 + $0x490] sm:$0xff]
  %v1861 = vld [vmem:[%s3 + $0x498] sm:$0xff]
  %v1862 = vld [vmem:[%s3 + $0x4a0] sm:$0xff]
  %v1863 = vld [vmem:[%s3 + $0x4a8] sm:$0xff]
  %v1864 = vld [vmem:[%s3 + $0x4b0] sm:$0xff]
  %v1865 = vld [vmem:[%s3 + $0x4b8] sm:$0xff]
  %v1866 = vld [vmem:[%s3 + $0x4c0] sm:$0xff]
  %v1867 = vld [vmem:[%s3 + $0x4c8] sm:$0xff]
  %v1868 = vld [vmem:[%s3 + $0x4d0] sm:$0xff]
  %v1869 = vld [vmem:[%s3 + $0x4d8] sm:$0xff]
  %v1870 = vld [vmem:[%s3 + $0x4e0] sm:$0xff]
  %v1871 = vld [vmem:[%s3 + $0x4e8] sm:$0xff]
  %v1872 = vld [vmem:[%s3 + $0x4f0] sm:$0xff]
  %v1873 = vld [vmem:[%s3 + $0x4f8] sm:$0xff]
  %v1874 = vld [vmem:[%s3 + $0x500] sm:$0xff]
  %v1875 = vld [vmem:[%s3 + $0x508] sm:$0xff]
  %v1876 = vld [vmem:[%s3 + $0x510] sm:$0xff]
  %v1877 = vld [vmem:[%s3 + $0x518] sm:$0xff]
  %v1878 = vld [vmem:[%s3 + $0x520] sm:$0xff]
  %v1879 = vld [vmem:[%s3 + $0x528] sm:$0xff]
  %v1880 = vld [vmem:[%s3 + $0x530] sm:$0xff]
  %v1881 = vld [vmem:[%s3 + $0x538] sm:$0xff]
  %v1882 = vld [vmem:[%s3 + $0x540] sm:$0xff]
  %v1883 = vld [vmem:[%s3 + $0x548] sm:$0xff]
  %v1884 = vld [vmem:[%s3 + $0x550] sm:$0xff]
  %v1885 = vld [vmem:[%s3 + $0x558] sm:$0xff]
  %v1886 = vld [vmem:[%s3 + $0x560] sm:$0xff]
  %v1887 = vld [vmem:[%s3 + $0x568] sm:$0xff]
  %v1888 = vld [vmem:[%s3 + $0x570] sm:$0xff]
  %v1889 = vld [vmem:[%s3 + $0x578] sm:$0xff]
  %v1890 = vld [vmem:[%s3 + $0x580] sm:$0xff]
  %v1891 = vld [vmem:[%s3 + $0x588] sm:$0xff]
  %v1892 = vld [vmem:[%s3 + $0x590] sm:$0xff]
  %v1893 = vld [vmem:[%s3 + $0x598] sm:$0xff]
  %v1894 = vld [vmem:[%s3 + $0x5a0] sm:$0xff]
  %v1895 = vld [vmem:[%s3 + $0x5a8] sm:$0xff]
  %v1896 = vld [vmem:[%s3 + $0x5b0] sm:$0xff]
  %v1897 = vld [vmem:[%s3 + $0x5b8] sm:$0xff]
  %v1898 = vld [vmem:[%s3 + $0x5c0] sm:$0xff]
  %v1899 = vld [vmem:[%s3 + $0x5c8] sm:$0xff]
  %v1900 = vld [vmem:[%s3 + $0x5d0] sm:$0xff]
  %v1901 = vld [vmem:[%s3 + $0x5d8] sm:$0xff]
  %v1902 = vld [vmem:[%s3 + $0x5e0] sm:$0xff]
  %v1903 = vld [vmem:[%s3 + $0x5e8] sm:$0xff]
  %v1904 = vld [vmem:[%s3 + $0x5f0] sm:$0xff]
  %v1905 = vld [vmem:[%s3 + $0x5f8] sm:$0xff]
  %v1906 = vld [vmem:[%s3 + $0x600] sm:$0xff]
  %v1907 = vld [vmem:[%s3 + $0x608] sm:$0xff]
  %v1908 = vld [vmem:[%s3 + $0x610] sm:$0xff]
  %v1909 = vld [vmem:[%s3 + $0x618] sm:$0xff]
  %v1910 = vld [vmem:[%s3 + $0x620] sm:$0xff]
  %v1911 = vld [vmem:[%s3 + $0x628] sm:$0xff]
  %v1912 = vld [vmem:[%s3 + $0x630] sm:$0xff]
  %v1913 = vld [vmem:[%s3 + $0x638] sm:$0xff]
  %v1914 = vld [vmem:[%s3 + $0x640] sm:$0xff]
  %v1915 = vld [vmem:[%s3 + $0x648] sm:$0xff]
  %v1916 = vld [vmem:[%s3 + $0x650] sm:$0xff]
  %v1917 = vld [vmem:[%s3 + $0x658] sm:$0xff]
  %v1918 = vld [vmem:[%s3 + $0x660] sm:$0xff]
  %v1919 = vld [vmem:[%s3 + $0x668] sm:$0xff]
  %v1920 = vld [vmem:[%s3 + $0x670] sm:$0xff]
  %v1921 = vld [vmem:[%s3 + $0x678] sm:$0xff]
  %v1922 = vld [vmem:[%s3 + $0x680] sm:$0xff]
  %v1923 = vld [vmem:[%s3 + $0x688] sm:$0xff]
  %v1924 = vld [vmem:[%s3 + $0x690] sm:$0xff]
  %v1925 = vld [vmem:[%s3 + $0x698] sm:$0xff]
  %v1926 = vld [vmem:[%s3 + $0x6a0] sm:$0xff]
  %v1927 = vld [vmem:[%s3 + $0x6a8] sm:$0xff]
  %v1928 = vld [vmem:[%s3 + $0x6b0] sm:$0xff]
  %v1929 = vld [vmem:[%s3 + $0x6b8] sm:$0xff]
  %v1930 = vld [vmem:[%s3 + $0x6c0] sm:$0xff]
  %v1931 = vld [vmem:[%s3 + $0x6c8] sm:$0xff]
  %v1932 = vld [vmem:[%s3 + $0x6d0] sm:$0xff]
  %v1933 = vld [vmem:[%s3 + $0x6d8] sm:$0xff]
  %v1934 = vld [vmem:[%s3 + $0x6e0] sm:$0xff]
  %v1935 = vld [vmem:[%s3 + $0x6e8] sm:$0xff]
  %v1936 = vld [vmem:[%s3 + $0x6f0] sm:$0xff]
  %v1937 = vld [vmem:[%s3 + $0x6f8] sm:$0xff]
  %v1938 = vld [vmem:[%s3 + $0x700] sm:$0xff]
  %v1939 = vld [vmem:[%s3 + $0x708] sm:$0xff]
  %v1940 = vld [vmem:[%s3 + $0x710] sm:$0xff]
  %v1941 = vld [vmem:[%s3 + $0x718] sm:$0xff]
  %v1942 = vld [vmem:[%s3 + $0x720] sm:$0xff]
  %v1943 = vld [vmem:[%s3 + $0x728] sm:$0xff]
  %v1944 = vld [vmem:[%s3 + $0x730] sm:$0xff]
  %v1945 = vld [vmem:[%s3 + $0x738] sm:$0xff]
  %v1946 = vld [vmem:[%s3 + $0x740] sm:$0xff]
  %v1947 = vld [vmem:[%s3 + $0x748] sm:$0xff]
  %v1948 = vld [vmem:[%s3 + $0x750] sm:$0xff]
  %v1949 = vld [vmem:[%s3 + $0x758] sm:$0xff]
  %v1950 = vld [vmem:[%s3 + $0x760] sm:$0xff]
  %v1951 = vld [vmem:[%s3 + $0x768] sm:$0xff]
  %v1952 = vld [vmem:[%s3 + $0x770] sm:$0xff]
  %v1953 = vld [vmem:[%s3 + $0x778] sm:$0xff]
  %v1954 = vld [vmem:[%s3 + $0x780] sm:$0xff]
  %v1955 = vld [vmem:[%s3 + $0x788] sm:$0xff]
  %v1956 = vld [vmem:[%s3 + $0x790] sm:$0xff]
  %v1957 = vld [vmem:[%s3 + $0x798] sm:$0xff]
  %v1958 = vld [vmem:[%s3 + $0x7a0] sm:$0xff]
  %v1959 = vld [vmem:[%s3 + $0x7a8] sm:$0xff]
  %v1960 = vld [vmem:[%s3 + $0x7b0] sm:$0xff]
  %v1961 = vld [vmem:[%s3 + $0x7b8] sm:$0xff]
  %v1962 = vld [vmem:[%s3 + $0x7c0] sm:$0xff]
  %v1963 = vld [vmem:[%s3 + $0x7c8] sm:$0xff]
  %v1964 = vld [vmem:[%s3 + $0x7d0] sm:$0xff]
  %v1965 = vld [vmem:[%s3 + $0x7d8] sm:$0xff]
  %v1966 = vld [vmem:[%s3 + $0x7e0] sm:$0xff]
  %v1967 = vld [vmem:[%s3 + $0x7e8] sm:$0xff]
  %v1968 = vld [vmem:[%s3 + $0x7f0] sm:$0xff]
  %v1969 = vld [vmem:[%s3 + $0x7f8] sm:$0xff]
  %v1970 = vld [vmem:[%s3 + $0x800] sm:$0xff]
  %v1971 = vld [vmem:[%s3 + $0x808] sm:$0xff]
  %v1972 = vld [vmem:[%s3 + $0x810] sm:$0xff]
  %v1973 = vld [vmem:[%s3 + $0x818] sm:$0xff]
  %v1974 = vld [vmem:[%s3 + $0x820] sm:$0xff]
  %v1975 = vld [vmem:[%s3 + $0x828] sm:$0xff]
  %v1976 = vld [vmem:[%s3 + $0x830] sm:$0xff]
  %v1977 = vld [vmem:[%s3 + $0x838] sm:$0xff]
  %v1978 = vld [vmem:[%s3 + $0x840] sm:$0xff]
  %v1979 = vld [vmem:[%s3 + $0x848] sm:$0xff]
  %v1980 = vld [vmem:[%s3 + $0x850] sm:$0xff]
  %v1981 = vld [vmem:[%s3 + $0x858] sm:$0xff]
  %v1982 = vld [vmem:[%s3 + $0x860] sm:$0xff]
  %v1983 = vld [vmem:[%s3 + $0x868] sm:$0xff]
  %v1984 = vld [vmem:[%s3 + $0x870] sm:$0xff]
  %v1985 = vld [vmem:[%s3 + $0x878] sm:$0xff]
  %v1986 = vld [vmem:[%s3 + $0x880] sm:$0xff]
  %v1987 = vld [vmem:[%s3 + $0x888] sm:$0xff]
  %v1988 = vld [vmem:[%s3 + $0x890] sm:$0xff]
  %v1989 = vld [vmem:[%s3 + $0x898] sm:$0xff]
  %v1990 = vld [vmem:[%s3 + $0x8a0] sm:$0xff]
  %v1991 = vld [vmem:[%s3 + $0x8a8] sm:$0xff]
  %v1992 = vld [vmem:[%s3 + $0x8b0] sm:$0xff]
  %v1993 = vld [vmem:[%s3 + $0x8b8] sm:$0xff]
  %v1994 = vld [vmem:[%s3 + $0x8c0] sm:$0xff]
  %v1995 = vld [vmem:[%s3 + $0x8c8] sm:$0xff]
  %v1996 = vld [vmem:[%s3 + $0x8d0] sm:$0xff]
  %v1997 = vld [vmem:[%s3 + $0x8d8] sm:$0xff]
  %v1998 = vld [vmem:[%s3 + $0x8e0] sm:$0xff]
  %v1999 = vld [vmem:[%s3 + $0x8e8] sm:$0xff]
  %v2000 = vld [vmem:[%s3 + $0x8f0] sm:$0xff]
  %v2001 = vld [vmem:[%s3 + $0x8f8] sm:$0xff]
  %v2002 = vld [vmem:[%s3 + $0x900] sm:$0xff]
  %v2003 = vld [vmem:[%s3 + $0x908] sm:$0xff]
  %v2004 = vld [vmem:[%s3 + $0x910] sm:$0xff]
  %v2005 = vld [vmem:[%s3 + $0x918] sm:$0xff]
  %v2006 = vld [vmem:[%s3 + $0x920] sm:$0xff]
  %v2007 = vld [vmem:[%s3 + $0x928] sm:$0xff]
  %v2008 = vld [vmem:[%s3 + $0x930] sm:$0xff]
  %v2009 = vld [vmem:[%s3 + $0x938] sm:$0xff]
  %v2010 = vld [vmem:[%s3 + $0x940] sm:$0xff]
  %v2011 = vld [vmem:[%s3 + $0x948] sm:$0xff]
  %v2012 = vld [vmem:[%s3 + $0x950] sm:$0xff]
  %v2013 = vld [vmem:[%s3 + $0x958] sm:$0xff]
  %v2014 = vld [vmem:[%s3 + $0x960] sm:$0xff]
  %v2015 = vld [vmem:[%s3 + $0x968] sm:$0xff]
  %v2016 = vld [vmem:[%s3 + $0x970] sm:$0xff]
  %v2017 = vld [vmem:[%s3 + $0x978] sm:$0xff]
  %v2018 = vld [vmem:[%s3 + $0x980] sm:$0xff]
  %v2019 = vld [vmem:[%s3 + $0x988] sm:$0xff]
  %v2020 = vld [vmem:[%s3 + $0x990] sm:$0xff]
  %v2021 = vld [vmem:[%s3 + $0x998] sm:$0xff]
  %v2022 = vld [vmem:[%s3 + $0x9a0] sm:$0xff]
  %v2023 = vld [vmem:[%s3 + $0x9a8] sm:$0xff]
  %v2024 = vld [vmem:[%s3 + $0x9b0] sm:$0xff]
  %v2025 = vld [vmem:[%s3 + $0x9b8] sm:$0xff]
  %v2026 = vld [vmem:[%s3 + $0x9c0] sm:$0xff]
  %v2027 = vld [vmem:[%s3 + $0x9c8] sm:$0xff]
  %v2028 = vld [vmem:[%s3 + $0x9d0] sm:$0xff]
  %v2029 = vld [vmem:[%s3 + $0x9d8] sm:$0xff]
  %v2030 = vld [vmem:[%s3 + $0x9e0] sm:$0xff]
  %v2031 = vld [vmem:[%s3 + $0x9e8] sm:$0xff]
  %v2032 = vld [vmem:[%s3 + $0x9f0] sm:$0xff]
  %v2033 = vld [vmem:[%s3 + $0x9f8] sm:$0xff]
  %v2034 = vld [vmem:[%s3 + $0xa00] sm:$0xff]
  %v2035 = vld [vmem:[%s3 + $0xa08] sm:$0xff]
  %v2036 = vld [vmem:[%s3 + $0xa10] sm:$0xff]
  %v2037 = vld [vmem:[%s3 + $0xa18] sm:$0xff]
  %v2038 = vld [vmem:[%s3 + $0xa20] sm:$0xff]
  %v2039 = vld [vmem:[%s3 + $0xa28] sm:$0xff]
  %v2040 = vld [vmem:[%s3 + $0xa30] sm:$0xff]
  %v2041 = vld [vmem:[%s3 + $0xa38] sm:$0xff]
  %v2042 = vld [vmem:[%s3 + $0xa40] sm:$0xff]
  %v2043 = vld [vmem:[%s3 + $0xa48] sm:$0xff]
  %v2044 = vld [vmem:[%s3 + $0xa50] sm:$0xff]
  %v2045 = vld [vmem:[%s3 + $0xa58] sm:$0xff]
  %v2046 = vld [vmem:[%s3 + $0xa60] sm:$0xff]
  %v2047 = vld [vmem:[%s3 + $0xa68] sm:$0xff]
  %v2048 = vld [vmem:[%s3 + $0xa70] sm:$0xff]
  %v2049 = vld [vmem:[%s3 + $0xa78] sm:$0xff]
  %v2050 = vld [vmem:[%s3 + $0xa80] sm:$0xff]
  %v2051 = vld [vmem:[%s3 + $0xa88] sm:$0xff]
  %v2052 = vld [vmem:[%s3 + $0xa90] sm:$0xff]
  %v2053 = vld [vmem:[%s3 + $0xa98] sm:$0xff]
  %v2054 = vld [vmem:[%s3 + $0xaa0] sm:$0xff]
  %v2055 = vld [vmem:[%s3 + $0xaa8] sm:$0xff]
  %v2056 = vld [vmem:[%s3 + $0xab0] sm:$0xff]
  %v2057 = vld [vmem:[%s3 + $0xab8] sm:$0xff]
  %v2058 = vld [vmem:[%s3 + $0xac0] sm:$0xff]
  %v2059 = vld [vmem:[%s3 + $0xac8] sm:$0xff]
  %v2060 = vld [vmem:[%s3 + $0xad0] sm:$0xff]
  %v2061 = vld [vmem:[%s3 + $0xad8] sm:$0xff]
  %v2062 = vld [vmem:[%s3 + $0xae0] sm:$0xff]
  %v2063 = vld [vmem:[%s3 + $0xae8] sm:$0xff]
  %v2064 = vld [vmem:[%s3 + $0xaf0] sm:$0xff]
  %v2065 = vld [vmem:[%s3 + $0xaf8] sm:$0xff]
  %v2066 = vld [vmem:[%s3 + $0xb00] sm:$0xff]
  %v2067 = vld [vmem:[%s3 + $0xb08] sm:$0xff]
  %v2068 = vld [vmem:[%s3 + $0xb10] sm:$0xff]
  %v2069 = vld [vmem:[%s3 + $0xb18] sm:$0xff]
  %v2070 = vld [vmem:[%s3 + $0xb20] sm:$0xff]
  %v2071 = vld [vmem:[%s3 + $0xb28] sm:$0xff]
  %v2072 = vld [vmem:[%s3 + $0xb30] sm:$0xff]
  %v2073 = vld [vmem:[%s3 + $0xb38] sm:$0xff]
  %v2074 = vld [vmem:[%s3 + $0xb40] sm:$0xff]
  %v2075 = vld [vmem:[%s3 + $0xb48] sm:$0xff]
  %v2076 = vld [vmem:[%s3 + $0xb50] sm:$0xff]
  %v2077 = vld [vmem:[%s3 + $0xb58] sm:$0xff]
  %v2078 = vld [vmem:[%s3 + $0xb60] sm:$0xff]
  %v2079 = vld [vmem:[%s3 + $0xb68] sm:$0xff]
  %v2080 = vld [vmem:[%s3 + $0xb70] sm:$0xff]
  %v2081 = vld [vmem:[%s3 + $0xb78] sm:$0xff]
  %v2082 = vld [vmem:[%s3 + $0xb80] sm:$0xff]
  %v2083 = vld [vmem:[%s3 + $0xb88] sm:$0xff]
  %v2084 = vld [vmem:[%s3 + $0xb90] sm:$0xff]
  %v2085 = vld [vmem:[%s3 + $0xb98] sm:$0xff]
  %v2086 = vld [vmem:[%s3 + $0xba0] sm:$0xff]
  %v2087 = vld [vmem:[%s3 + $0xba8] sm:$0xff]
  %v2088 = vld [vmem:[%s3 + $0xbb0] sm:$0xff]
  %v2089 = vld [vmem:[%s3 + $0xbb8] sm:$0xff]
  %v2090 = vld [vmem:[%s3 + $0xbc0] sm:$0xff]
  %v2091 = vld [vmem:[%s3 + $0xbc8] sm:$0xff]
  %v2092 = vld [vmem:[%s3 + $0xbd0] sm:$0xff]
  %v2093 = vld [vmem:[%s3 + $0xbd8] sm:$0xff]
  %v2094 = vld [vmem:[%s3 + $0xbe0] sm:$0xff]
  %v2095 = vld [vmem:[%s3 + $0xbe8] sm:$0xff]
  %v2096 = vld [vmem:[%s3 + $0xbf0] sm:$0xff]
  %v2097 = vld [vmem:[%s3 + $0xbf8] sm:$0xff]
  %v2098 = vld [vmem:[%s3 + $0xc00] sm:$0xff]
  %v2099 = vld [vmem:[%s3 + $0xc08] sm:$0xff]
  %v2100 = vld [vmem:[%s3 + $0xc10] sm:$0xff]
  %v2101 = vld [vmem:[%s3 + $0xc18] sm:$0xff]
  %v2102 = vld [vmem:[%s3 + $0xc20] sm:$0xff]
  %v2103 = vld [vmem:[%s3 + $0xc28] sm:$0xff]
  %v2104 = vld [vmem:[%s3 + $0xc30] sm:$0xff]
  %v2105 = vld [vmem:[%s3 + $0xc38] sm:$0xff]
  %v2106 = vld [vmem:[%s3 + $0xc40] sm:$0xff]
  %v2107 = vld [vmem:[%s3 + $0xc48] sm:$0xff]
  %v2108 = vld [vmem:[%s3 + $0xc50] sm:$0xff]
  %v2109 = vld [vmem:[%s3 + $0xc58] sm:$0xff]
  %v2110 = vld [vmem:[%s3 + $0xc60] sm:$0xff]
  %v2111 = vld [vmem:[%s3 + $0xc68] sm:$0xff]
  %v2112 = vld [vmem:[%s3 + $0xc70] sm:$0xff]
  %v2113 = vld [vmem:[%s3 + $0xc78] sm:$0xff]
  %v2114 = vld [vmem:[%s3 + $0xc80] sm:$0xff]
  %v2115 = vld [vmem:[%s3 + $0xc88] sm:$0xff]
  %v2116 = vld [vmem:[%s3 + $0xc90] sm:$0xff]
  %v2117 = vld [vmem:[%s3 + $0xc98] sm:$0xff]
  %v2118 = vld [vmem:[%s3 + $0xca0] sm:$0xff]
  %v2119 = vld [vmem:[%s3 + $0xca8] sm:$0xff]
  %v2120 = vld [vmem:[%s3 + $0xcb0] sm:$0xff]
  %v2121 = vld [vmem:[%s3 + $0xcb8] sm:$0xff]
  %v2122 = vld [vmem:[%s3 + $0xcc0] sm:$0xff]
  %v2123 = vld [vmem:[%s3 + $0xcc8] sm:$0xff]
  %v2124 = vld [vmem:[%s3 + $0xcd0] sm:$0xff]
  %v2125 = vld [vmem:[%s3 + $0xcd8] sm:$0xff]
  %v2126 = vld [vmem:[%s3 + $0xce0] sm:$0xff]
  %v2127 = vld [vmem:[%s3 + $0xce8] sm:$0xff]
  %v2128 = vld [vmem:[%s3 + $0xcf0] sm:$0xff]
  %v2129 = vld [vmem:[%s3 + $0xcf8] sm:$0xff]
  %v2130 = vld [vmem:[%s3 + $0xd00] sm:$0xff]
  %v2131 = vld [vmem:[%s3 + $0xd08] sm:$0xff]
  %v2132 = vld [vmem:[%s3 + $0xd10] sm:$0xff]
  %v2133 = vld [vmem:[%s3 + $0xd18] sm:$0xff]
  %v2134 = vld [vmem:[%s3 + $0xd20] sm:$0xff]
  %v2135 = vld [vmem:[%s3 + $0xd28] sm:$0xff]
  %v2136 = vld [vmem:[%s3 + $0xd30] sm:$0xff]
  %v2137 = vld [vmem:[%s3 + $0xd38] sm:$0xff]
  %v2138 = vld [vmem:[%s3 + $0xd40] sm:$0xff]
  %v2139 = vld [vmem:[%s3 + $0xd48] sm:$0xff]
  %v2140 = vld [vmem:[%s3 + $0xd50] sm:$0xff]
  %v2141 = vld [vmem:[%s3 + $0xd58] sm:$0xff]
  %v2142 = vld [vmem:[%s3 + $0xd60] sm:$0xff]
  %v2143 = vld [vmem:[%s3 + $0xd68] sm:$0xff]
  %v2144 = vld [vmem:[%s3 + $0xd70] sm:$0xff]
  %v2145 = vld [vmem:[%s3 + $0xd78] sm:$0xff]
  %v2146 = vld [vmem:[%s3 + $0xd80] sm:$0xff]
  %v2147 = vld [vmem:[%s3 + $0xd88] sm:$0xff]
  %v2148 = vld [vmem:[%s3 + $0xd90] sm:$0xff]
  %v2149 = vld [vmem:[%s3 + $0xd98] sm:$0xff]
  %v2150 = vld [vmem:[%s3 + $0xda0] sm:$0xff]
  %v2151 = vld [vmem:[%s3 + $0xda8] sm:$0xff]
  %v2152 = vld [vmem:[%s3 + $0xdb0] sm:$0xff]
  %v2153 = vld [vmem:[%s3 + $0xdb8] sm:$0xff]
  %v2154 = vld [vmem:[%s3 + $0xdc0] sm:$0xff]
  %v2155 = vld [vmem:[%s3 + $0xdc8] sm:$0xff]
  %v2156 = vld [vmem:[%s3 + $0xdd0] sm:$0xff]
  %v2157 = vld [vmem:[%s3 + $0xdd8] sm:$0xff]
  %v2158 = vld [vmem:[%s3 + $0xde0] sm:$0xff]
  %v2159 = vld [vmem:[%s3 + $0xde8] sm:$0xff]
  %v2160 = vld [vmem:[%s3 + $0xdf0] sm:$0xff]
  %v2161 = vld [vmem:[%s3 + $0xdf8] sm:$0xff]
  %v2162 = vld [vmem:[%s3 + $0xe00] sm:$0xff]
  %v2163 = vld [vmem:[%s3 + $0xe08] sm:$0xff]
  %v2164 = vld [vmem:[%s3 + $0xe10] sm:$0xff]
  %v2165 = vld [vmem:[%s3 + $0xe18] sm:$0xff]
  %v2166 = vld [vmem:[%s3 + $0xe20] sm:$0xff]
  %v2167 = vld [vmem:[%s3 + $0xe28] sm:$0xff]
  %v2168 = vld [vmem:[%s3 + $0xe30] sm:$0xff]
  %v2169 = vld [vmem:[%s3 + $0xe38] sm:$0xff]
  %v2170 = vld [vmem:[%s3 + $0xe40] sm:$0xff]
  %v2171 = vld [vmem:[%s3 + $0xe48] sm:$0xff]
  %v2172 = vld [vmem:[%s3 + $0xe50] sm:$0xff]
  %v2173 = vld [vmem:[%s3 + $0xe58] sm:$0xff]
  %v2174 = vld [vmem:[%s3 + $0xe60] sm:$0xff]
  %v2175 = vld [vmem:[%s3 + $0xe68] sm:$0xff]
  %v2176 = vld [vmem:[%s3 + $0xe70] sm:$0xff]
  %v2177 = vld [vmem:[%s3 + $0xe78] sm:$0xff]
  %v2178 = vld [vmem:[%s3 + $0xe80] sm:$0xff]
  %v2179 = vld [vmem:[%s3 + $0xe88] sm:$0xff]
  %v2180 = vld [vmem:[%s3 + $0xe90] sm:$0xff]
  %v2181 = vld [vmem:[%s3 + $0xe98] sm:$0xff]
  %v2182 = vld [vmem:[%s3 + $0xea0] sm:$0xff]
  %v2183 = vld [vmem:[%s3 + $0xea8] sm:$0xff]
  %v2184 = vld [vmem:[%s3 + $0xeb0] sm:$0xff]
  %v2185 = vld [vmem:[%s3 + $0xeb8] sm:$0xff]
  %v2186 = vld [vmem:[%s3 + $0xec0] sm:$0xff]
  %v2187 = vld [vmem:[%s3 + $0xec8] sm:$0xff]
  %v2188 = vld [vmem:[%s3 + $0xed0] sm:$0xff]
  %v2189 = vld [vmem:[%s3 + $0xed8] sm:$0xff]
  %v2190 = vld [vmem:[%s3 + $0xee0] sm:$0xff]
  %v2191 = vld [vmem:[%s3 + $0xee8] sm:$0xff]
  %v2192 = vld [vmem:[%s3 + $0xef0] sm:$0xff]
  %v2193 = vld [vmem:[%s3 + $0xef8] sm:$0xff]
  %v2194 = vld [vmem:[%s3 + $0xf00] sm:$0xff]
  %v2195 = vld [vmem:[%s3 + $0xf08] sm:$0xff]
  %v2196 = vld [vmem:[%s3 + $0xf10] sm:$0xff]
  %v2197 = vld [vmem:[%s3 + $0xf18] sm:$0xff]
  %v2198 = vld [vmem:[%s3 + $0xf20] sm:$0xff]
  %v2199 = vld [vmem:[%s3 + $0xf28] sm:$0xff]
  %v2200 = vld [vmem:[%s3 + $0xf30] sm:$0xff]
  %v2201 = vld [vmem:[%s3 + $0xf38] sm:$0xff]
  %v2202 = vld [vmem:[%s3 + $0xf40] sm:$0xff]
  %v2203 = vld [vmem:[%s3 + $0xf48] sm:$0xff]
  %v2204 = vld [vmem:[%s3 + $0xf50] sm:$0xff]
  %v2205 = vld [vmem:[%s3 + $0xf58] sm:$0xff]
  %v2206 = vld [vmem:[%s3 + $0xf60] sm:$0xff]
  %v2207 = vld [vmem:[%s3 + $0xf68] sm:$0xff]
  %v2208 = vld [vmem:[%s3 + $0xf70] sm:$0xff]
  %v2209 = vld [vmem:[%s3 + $0xf78] sm:$0xff]
  %v2210 = vld [vmem:[%s3 + $0xf80] sm:$0xff]
  %v2211 = vld [vmem:[%s3 + $0xf88] sm:$0xff]
  %v2212 = vld [vmem:[%s3 + $0xf90] sm:$0xff]
  %v2213 = vld [vmem:[%s3 + $0xf98] sm:$0xff]
  %v2214 = vld [vmem:[%s3 + $0xfa0] sm:$0xff]
  %v2215 = vld [vmem:[%s3 + $0xfa8] sm:$0xff]
  %v2216 = vld [vmem:[%s3 + $0xfb0] sm:$0xff]
  %v2217 = vld [vmem:[%s3 + $0xfb8] sm:$0xff]
  %v2218 = vld [vmem:[%s3 + $0xfc0] sm:$0xff]
  %v2219 = vld [vmem:[%s3 + $0xfc8] sm:$0xff]
  %v2220 = vld [vmem:[%s3 + $0xfd0] sm:$0xff]
  %v2221 = vld [vmem:[%s3 + $0xfd8] sm:$0xff]
  %v2222 = vld [vmem:[%s3 + $0xfe0] sm:$0xff]
  %v2223 = vld [vmem:[%s3 + $0xfe8] sm:$0xff]
  %v2224 = vld [vmem:[%s3 + $0xff0] sm:$0xff]
  %v2225 = vld [vmem:[%s3 + $0xff8] sm:$0xff]
  %v2226 = vld [vmem:[%s4] sm:$0xf]
  %v2228 = vlaneseq
  %v2229 = vshrl.u32 %v2228, 7
  %v2230 = vsub.s32 0, %v2229
  %v2231 = vrot.slane %v2226, %v2230
  %v2232 = vlaneseq
  %v2233 = vshrl.u32 %v2232, 7
  %v2234 = vsub.s32 1, %v2233
  %v2235 = vrot.slane %v2226, %v2234
  %v2236 = vlaneseq
  %v2237 = vshrl.u32 %v2236, 7
  %v2238 = vsub.s32 2, %v2237
  %v2239 = vrot.slane %v2226, %v2238
  %v2240 = vlaneseq
  %v2241 = vshrl.u32 %v2240, 7
  %v2242 = vsub.s32 3, %v2241
  %v2243 = vrot.slane %v2226, %v2242
  %2248 = vmatprep.subr.mxu0 %v1715
  %2249 = vmatpush1.msra.mxu0 %v1714
  %2250 = vmatprep.subr.mxu0 %v1719
  %2251 = vmatpush1.msra.mxu0 %v1718
  %2252 = vmatprep.subr.mxu0 %v1723
  %2253 = vmatpush1.msra.mxu0 %v1722
  %2254 = vmatprep.subr.mxu0 %v1727
  %2255 = vmatpush1.msra.mxu0 %v1726
  %2256 = vmatprep.subr.mxu0 %v1731
  %2257 = vmatpush1.msra.mxu0 %v1730
  %2258 = vmatprep.subr.mxu0 %v1735
  %2259 = vmatpush1.msra.mxu0 %v1734
  %2260 = vmatprep.subr.mxu0 %v1739
  %2261 = vmatpush1.msra.mxu0 %v1738
  %2262 = vmatprep.subr.mxu0 %v1743
  %2263 = vmatpush1.msra.mxu0 %v1742
  %2264 = vmatprep.subr.mxu0 %v1747
  %2265 = vmatpush1.msra.mxu0 %v1746
  %2266 = vmatprep.subr.mxu0 %v1751
  %2267 = vmatpush1.msra.mxu0 %v1750
  %2268 = vmatprep.subr.mxu0 %v1755
  %2269 = vmatpush1.msra.mxu0 %v1754
  %2270 = vmatprep.subr.mxu0 %v1759
  %2271 = vmatpush1.msra.mxu0 %v1758
  %2272 = vmatprep.subr.mxu0 %v1763
  %2273 = vmatpush1.msra.mxu0 %v1762
  %2274 = vmatprep.subr.mxu0 %v1767
  %2275 = vmatpush1.msra.mxu0 %v1766
  %2276 = vmatprep.subr.mxu0 %v1771
  %2277 = vmatpush1.msra.mxu0 %v1770
  %2278 = vmatprep.subr.mxu0 %v1775
  %2279 = vmatpush1.msra.mxu0 %v1774
  %2280 = vmatprep.subr.mxu0 %v1779
  %2281 = vmatpush1.msra.mxu0 %v1778
  %2282 = vmatprep.subr.mxu0 %v1783
  %2283 = vmatpush1.msra.mxu0 %v1782
  %2284 = vmatprep.subr.mxu0 %v1787
  %2285 = vmatpush1.msra.mxu0 %v1786
  %2286 = vmatprep.subr.mxu0 %v1791
  %2287 = vmatpush1.msra.mxu0 %v1790
  %2288 = vmatprep.subr.mxu0 %v1795
  %2289 = vmatpush1.msra.mxu0 %v1794
  %2290 = vmatprep.subr.mxu0 %v1799
  %2291 = vmatpush1.msra.mxu0 %v1798
  %2292 = vmatprep.subr.mxu0 %v1803
  %2293 = vmatpush1.msra.mxu0 %v1802
  %2294 = vmatprep.subr.mxu0 %v1807
  %2295 = vmatpush1.msra.mxu0 %v1806
  %2296 = vmatprep.subr.mxu0 %v1811
  %2297 = vmatpush1.msra.mxu0 %v1810
  %2298 = vmatprep.subr.mxu0 %v1815
  %2299 = vmatpush1.msra.mxu0 %v1814
  %2300 = vmatprep.subr.mxu0 %v1819
  %2301 = vmatpush1.msra.mxu0 %v1818
  %2302 = vmatprep.subr.mxu0 %v1823
  %2303 = vmatpush1.msra.mxu0 %v1822
  %2304 = vmatprep.subr.mxu0 %v1827
  %2305 = vmatpush1.msra.mxu0 %v1826
  %2306 = vmatprep.subr.mxu0 %v1831
  %2307 = vmatpush1.msra.mxu0 %v1830
  %2308 = vmatprep.subr.mxu0 %v1835
  %2309 = vmatpush1.msra.mxu0 %v1834
  %2310 = vmatprep.subr.mxu0 %v1839
  %2311 = vmatpush1.msra.mxu0 %v1838
  %2312 = vmatprep.mubr.f32.mxu0 %v1707
  %2313 = vmatmul.mubr.f32.gmra.mrb[0].mxu0 %v1706
  %v2314 = vpop.f32.mrb[0].mxu0
  %v2315 = vadd.f32 %v2231, %v2314
  %v2316 = vpop.f32.mrb[0].mxu0
  %v2317 = vadd.f32 %v2235, %v2316
  %2318 = vdwg.mxu0
  %2319 = vmatprep.subr.mxu0 %v1843
  %2320 = vmatpush1.msra.mxu0 %v1842
  %2321 = vmatprep.subr.mxu0 %v1847
  %2322 = vmatpush1.msra.mxu0 %v1846
  %2323 = vmatprep.subr.mxu0 %v1851
  %2324 = vmatpush1.msra.mxu0 %v1850
  %2325 = vmatprep.subr.mxu0 %v1855
  %2326 = vmatpush1.msra.mxu0 %v1854
  %2327 = vmatprep.subr.mxu0 %v1859
  %2328 = vmatpush1.msra.mxu0 %v1858
  %2329 = vmatprep.subr.mxu0 %v1863
  %2330 = vmatpush1.msra.mxu0 %v1862
  %2331 = vmatprep.subr.mxu0 %v1867
  %2332 = vmatpush1.msra.mxu0 %v1866
  %2333 = vmatprep.subr.mxu0 %v1871
  %2334 = vmatpush1.msra.mxu0 %v1870
  %2335 = vmatprep.subr.mxu0 %v1875
  %2336 = vmatpush1.msra.mxu0 %v1874
  %2337 = vmatprep.subr.mxu0 %v1879
  %2338 = vmatpush1.msra.mxu0 %v1878
  %2339 = vmatprep.subr.mxu0 %v1883
  %2340 = vmatpush1.msra.mxu0 %v1882
  %2341 = vmatprep.subr.mxu0 %v1887
  %2342 = vmatpush1.msra.mxu0 %v1886
  %2343 = vmatprep.subr.mxu0 %v1891
  %2344 = vmatpush1.msra.mxu0 %v1890
  %2345 = vmatprep.subr.mxu0 %v1895
  %2346 = vmatpush1.msra.mxu0 %v1894
  %2347 = vmatprep.subr.mxu0 %v1899
  %2348 = vmatpush1.msra.mxu0 %v1898
  %2349 = vmatprep.subr.mxu0 %v1903
  %2350 = vmatpush1.msra.mxu0 %v1902
  %2351 = vmatprep.subr.mxu0 %v1907
  %2352 = vmatpush1.msra.mxu0 %v1906
  %2353 = vmatprep.subr.mxu0 %v1911
  %2354 = vmatpush1.msra.mxu0 %v1910
  %2355 = vmatprep.subr.mxu0 %v1915
  %2356 = vmatpush1.msra.mxu0 %v1914
  %2357 = vmatprep.subr.mxu0 %v1919
  %2358 = vmatpush1.msra.mxu0 %v1918
  %2359 = vmatprep.subr.mxu0 %v1923
  %2360 = vmatpush1.msra.mxu0 %v1922
  %2361 = vmatprep.subr.mxu0 %v1927
  %2362 = vmatpush1.msra.mxu0 %v1926
  %2363 = vmatprep.subr.mxu0 %v1931
  %2364 = vmatpush1.msra.mxu0 %v1930
  %2365 = vmatprep.subr.mxu0 %v1935
  %2366 = vmatpush1.msra.mxu0 %v1934
  %2367 = vmatprep.subr.mxu0 %v1939
  %2368 = vmatpush1.msra.mxu0 %v1938
  %2369 = vmatprep.subr.mxu0 %v1943
  %2370 = vmatpush1.msra.mxu0 %v1942
  %2371 = vmatprep.subr.mxu0 %v1947
  %2372 = vmatpush1.msra.mxu0 %v1946
  %2373 = vmatprep.subr.mxu0 %v1951
  %2374 = vmatpush1.msra.mxu0 %v1950
  %2375 = vmatprep.subr.mxu0 %v1955
  %2376 = vmatpush1.msra.mxu0 %v1954
  %2377 = vmatprep.subr.mxu0 %v1959
  %2378 = vmatpush1.msra.mxu0 %v1958
  %2379 = vmatprep.subr.mxu0 %v1963
  %2380 = vmatpush1.msra.mxu0 %v1962
  %2381 = vmatprep.subr.mxu0 %v1967
  %2382 = vmatpush1.msra.mxu0 %v1966
  %2383 = vmatprep.mubr.f32.mxu0 %v1709
  %2384 = vmatmul.mubr.f32.gmra.mrb[0].mxu0 %v1708
  %v2385 = vpop.f32.mrb[0].mxu0
  %v2386 = vadd.f32 %v2315, %v2385
  %v2387 = vpop.f32.mrb[0].mxu0
  %v2388 = vadd.f32 %v2317, %v2387
  %2389 = vdwg.mxu0
  %2390 = vmatprep.subr.mxu0 %v1971
  %2391 = vmatpush1.msra.mxu0 %v1970
  %2392 = vmatprep.subr.mxu0 %v1975
  %2393 = vmatpush1.msra.mxu0 %v1974
  %2394 = vmatprep.subr.mxu0 %v1979
  %2395 = vmatpush1.msra.mxu0 %v1978
  %2396 = vmatprep.subr.mxu0 %v1983
  %2397 = vmatpush1.msra.mxu0 %v1982
  %2398 = vmatprep.subr.mxu0 %v1987
  %2399 = vmatpush1.msra.mxu0 %v1986
  %2400 = vmatprep.subr.mxu0 %v1991
  %2401 = vmatpush1.msra.mxu0 %v1990
  %2402 = vmatprep.subr.mxu0 %v1995
  %2403 = vmatpush1.msra.mxu0 %v1994
  %2404 = vmatprep.subr.mxu0 %v1999
  %2405 = vmatpush1.msra.mxu0 %v1998
  %2406 = vmatprep.subr.mxu0 %v2003
  %2407 = vmatpush1.msra.mxu0 %v2002
  %2408 = vmatprep.subr.mxu0 %v2007
  %2409 = vmatpush1.msra.mxu0 %v2006
  %2410 = vmatprep.subr.mxu0 %v2011
  %2411 = vmatpush1.msra.mxu0 %v2010
  %2412 = vmatprep.subr.mxu0 %v2015
  %2413 = vmatpush1.msra.mxu0 %v2014
  %2414 = vmatprep.subr.mxu0 %v2019
  %2415 = vmatpush1.msra.mxu0 %v2018
  %2416 = vmatprep.subr.mxu0 %v2023
  %2417 = vmatpush1.msra.mxu0 %v2022
  %2418 = vmatprep.subr.mxu0 %v2027
  %2419 = vmatpush1.msra.mxu0 %v2026
  %2420 = vmatprep.subr.mxu0 %v2031
  %2421 = vmatpush1.msra.mxu0 %v2030
  %2422 = vmatprep.subr.mxu0 %v2035
  %2423 = vmatpush1.msra.mxu0 %v2034
  %2424 = vmatprep.subr.mxu0 %v2039
  %2425 = vmatpush1.msra.mxu0 %v2038
  %2426 = vmatprep.subr.mxu0 %v2043
  %2427 = vmatpush1.msra.mxu0 %v2042
  %2428 = vmatprep.subr.mxu0 %v2047
  %2429 = vmatpush1.msra.mxu0 %v2046
  %2430 = vmatprep.subr.mxu0 %v2051
  %2431 = vmatpush1.msra.mxu0 %v2050
  %2432 = vmatprep.subr.mxu0 %v2055
  %2433 = vmatpush1.msra.mxu0 %v2054
  %2434 = vmatprep.subr.mxu0 %v2059
  %2435 = vmatpush1.msra.mxu0 %v2058
  %2436 = vmatprep.subr.mxu0 %v2063
  %2437 = vmatpush1.msra.mxu0 %v2062
  %2438 = vmatprep.subr.mxu0 %v2067
  %2439 = vmatpush1.msra.mxu0 %v2066
  %2440 = vmatprep.subr.mxu0 %v2071
  %2441 = vmatpush1.msra.mxu0 %v2070
  %2442 = vmatprep.subr.mxu0 %v2075
  %2443 = vmatpush1.msra.mxu0 %v2074
  %2444 = vmatprep.subr.mxu0 %v2079
  %2445 = vmatpush1.msra.mxu0 %v2078
  %2446 = vmatprep.subr.mxu0 %v2083
  %2447 = vmatpush1.msra.mxu0 %v2082
  %2448 = vmatprep.subr.mxu0 %v2087
  %2449 = vmatpush1.msra.mxu0 %v2086
  %2450 = vmatprep.subr.mxu0 %v2091
  %2451 = vmatpush1.msra.mxu0 %v2090
  %2452 = vmatprep.subr.mxu0 %v2095
  %2453 = vmatpush1.msra.mxu0 %v2094
  %2454 = vmatprep.mubr.f32.mxu0 %v1711
  %2455 = vmatmul.mubr.f32.gmra.mrb[0].mxu0 %v1710
  %v2456 = vpop.f32.mrb[0].mxu0
  %v2457 = vadd.f32 %v2386, %v2456
  %v2458 = vpop.f32.mrb[0].mxu0
  %v2459 = vadd.f32 %v2388, %v2458
  %2460 = vdwg.mxu0
  %2461 = vmatprep.subr.mxu0 %v2099
  %2462 = vmatpush1.msra.mxu0 %v2098
  %2463 = vmatprep.subr.mxu0 %v2103
  %2464 = vmatpush1.msra.mxu0 %v2102
  %2465 = vmatprep.subr.mxu0 %v2107
  %2466 = vmatpush1.msra.mxu0 %v2106
  %2467 = vmatprep.subr.mxu0 %v2111
  %2468 = vmatpush1.msra.mxu0 %v2110
  %2469 = vmatprep.subr.mxu0 %v2115
  %2470 = vmatpush1.msra.mxu0 %v2114
  %2471 = vmatprep.subr.mxu0 %v2119
  %2472 = vmatpush1.msra.mxu0 %v2118
  %2473 = vmatprep.subr.mxu0 %v2123
  %2474 = vmatpush1.msra.mxu0 %v2122
  %2475 = vmatprep.subr.mxu0 %v2127
  %2476 = vmatpush1.msra.mxu0 %v2126
  %2477 = vmatprep.subr.mxu0 %v2131
  %2478 = vmatpush1.msra.mxu0 %v2130
  %2479 = vmatprep.subr.mxu0 %v2135
  %2480 = vmatpush1.msra.mxu0 %v2134
  %2481 = vmatprep.subr.mxu0 %v2139
  %2482 = vmatpush1.msra.mxu0 %v2138
  %2483 = vmatprep.subr.mxu0 %v2143
  %2484 = vmatpush1.msra.mxu0 %v2142
  %2485 = vmatprep.subr.mxu0 %v2147
  %2486 = vmatpush1.msra.mxu0 %v2146
  %2487 = vmatprep.subr.mxu0 %v2151
  %2488 = vmatpush1.msra.mxu0 %v2150
  %2489 = vmatprep.subr.mxu0 %v2155
  %2490 = vmatpush1.msra.mxu0 %v2154
  %2491 = vmatprep.subr.mxu0 %v2159
  %2492 = vmatpush1.msra.mxu0 %v2158
  %2493 = vmatprep.subr.mxu0 %v2163
  %2494 = vmatpush1.msra.mxu0 %v2162
  %2495 = vmatprep.subr.mxu0 %v2167
  %2496 = vmatpush1.msra.mxu0 %v2166
  %2497 = vmatprep.subr.mxu0 %v2171
  %2498 = vmatpush1.msra.mxu0 %v2170
  %2499 = vmatprep.subr.mxu0 %v2175
  %2500 = vmatpush1.msra.mxu0 %v2174
  %2501 = vmatprep.subr.mxu0 %v2179
  %2502 = vmatpush1.msra.mxu0 %v2178
  %2503 = vmatprep.subr.mxu0 %v2183
  %2504 = vmatpush1.msra.mxu0 %v2182
  %2505 = vmatprep.subr.mxu0 %v2187
  %2506 = vmatpush1.msra.mxu0 %v2186
  %2507 = vmatprep.subr.mxu0 %v2191
  %2508 = vmatpush1.msra.mxu0 %v2190
  %2509 = vmatprep.subr.mxu0 %v2195
  %2510 = vmatpush1.msra.mxu0 %v2194
  %2511 = vmatprep.subr.mxu0 %v2199
  %2512 = vmatpush1.msra.mxu0 %v2198
  %2513 = vmatprep.subr.mxu0 %v2203
  %2514 = vmatpush1.msra.mxu0 %v2202
  %2515 = vmatprep.subr.mxu0 %v2207
  %2516 = vmatpush1.msra.mxu0 %v2206
  %2517 = vmatprep.subr.mxu0 %v2211
  %2518 = vmatpush1.msra.mxu0 %v2210
  %2519 = vmatprep.subr.mxu0 %v2215
  %2520 = vmatpush1.msra.mxu0 %v2214
  %2521 = vmatprep.subr.mxu0 %v2219
  %2522 = vmatpush1.msra.mxu0 %v2218
  %2523 = vmatprep.subr.mxu0 %v2223
  %2524 = vmatpush1.msra.mxu0 %v2222
  %2525 = vmatprep.mubr.f32.mxu0 %v1713
  %2526 = vmatmul.mubr.f32.gmra.mrb[0].mxu0 %v1712
  %v2527 = vpop.f32.mrb[0].mxu0
  %v2528 = vadd.f32 %v2457, %v2527
  %v2529 = vpop.f32.mrb[0].mxu0
  %v2530 = vadd.f32 %v2459, %v2529
  %2531 = vdwg.mxu0
  %2532 = vmatprep.subr.mxu0 %v1717
  %2533 = vmatpush1.msra.mxu0 %v1716
  %2534 = vmatprep.subr.mxu0 %v1721
  %2535 = vmatpush1.msra.mxu0 %v1720
  %2536 = vmatprep.subr.mxu0 %v1725
  %2537 = vmatpush1.msra.mxu0 %v1724
  %2538 = vmatprep.subr.mxu0 %v1729
  %2539 = vmatpush1.msra.mxu0 %v1728
  %2540 = vmatprep.subr.mxu0 %v1733
  %2541 = vmatpush1.msra.mxu0 %v1732
  %2542 = vmatprep.subr.mxu0 %v1737
  %2543 = vmatpush1.msra.mxu0 %v1736
  %2544 = vmatprep.subr.mxu0 %v1741
  %2545 = vmatpush1.msra.mxu0 %v1740
  %2546 = vmatprep.subr.mxu0 %v1745
  %2547 = vmatpush1.msra.mxu0 %v1744
  %2548 = vmatprep.subr.mxu0 %v1749
  %2549 = vmatpush1.msra.mxu0 %v1748
  %2550 = vmatprep.subr.mxu0 %v1753
  %2551 = vmatpush1.msra.mxu0 %v1752
  %2552 = vmatprep.subr.mxu0 %v1757
  %2553 = vmatpush1.msra.mxu0 %v1756
  %2554 = vmatprep.subr.mxu0 %v1761
  %2555 = vmatpush1.msra.mxu0 %v1760
  %2556 = vmatprep.subr.mxu0 %v1765
  %2557 = vmatpush1.msra.mxu0 %v1764
  %2558 = vmatprep.subr.mxu0 %v1769
  %2559 = vmatpush1.msra.mxu0 %v1768
  %2560 = vmatprep.subr.mxu0 %v1773
  %2561 = vmatpush1.msra.mxu0 %v1772
  %2562 = vmatprep.subr.mxu0 %v1777
  %2563 = vmatpush1.msra.mxu0 %v1776
  %2564 = vmatprep.subr.mxu0 %v1781
  %2565 = vmatpush1.msra.mxu0 %v1780
  %2566 = vmatprep.subr.mxu0 %v1785
  %2567 = vmatpush1.msra.mxu0 %v1784
  %2568 = vmatprep.subr.mxu0 %v1789
  %2569 = vmatpush1.msra.mxu0 %v1788
  %2570 = vmatprep.subr.mxu0 %v1793
  %2571 = vmatpush1.msra.mxu0 %v1792
  %2572 = vmatprep.subr.mxu0 %v1797
  %2573 = vmatpush1.msra.mxu0 %v1796
  %2574 = vmatprep.subr.mxu0 %v1801
  %2575 = vmatpush1.msra.mxu0 %v1800
  %2576 = vmatprep.subr.mxu0 %v1805
  %2577 = vmatpush1.msra.mxu0 %v1804
  %2578 = vmatprep.subr.mxu0 %v1809
  %2579 = vmatpush1.msra.mxu0 %v1808
  %2580 = vmatprep.subr.mxu0 %v1813
  %2581 = vmatpush1.msra.mxu0 %v1812
  %2582 = vmatprep.subr.mxu0 %v1817
  %2583 = vmatpush1.msra.mxu0 %v1816
  %2584 = vmatprep.subr.mxu0 %v1821
  %2585 = vmatpush1.msra.mxu0 %v1820
  %2586 = vmatprep.subr.mxu0 %v1825
  %2587 = vmatpush1.msra.mxu0 %v1824
  %2588 = vmatprep.subr.mxu0 %v1829
  %2589 = vmatpush1.msra.mxu0 %v1828
  %2590 = vmatprep.subr.mxu0 %v1833
  %2591 = vmatpush1.msra.mxu0 %v1832
  %2592 = vmatprep.subr.mxu0 %v1837
  %2593 = vmatpush1.msra.mxu0 %v1836
  %2594 = vmatprep.subr.mxu0 %v1841
  %2595 = vmatpush1.msra.mxu0 %v1840
  %2596 = vmatprep.mubr.f32.mxu0 %v1707
  %2597 = vmatmul.mubr.f32.gmra.mrb[0].mxu0 %v1706
  %v2598 = vpop.f32.mrb[0].mxu0
  %v2599 = vadd.f32 %v2239, %v2598
  %v2600 = vpop.f32.mrb[0].mxu0
  %v2601 = vadd.f32 %v2243, %v2600
  %2602 = vdwg.mxu0
  %2603 = vmatprep.subr.mxu0 %v1845
  %2604 = vmatpush1.msra.mxu0 %v1844
  %2605 = vmatprep.subr.mxu0 %v1849
  %2606 = vmatpush1.msra.mxu0 %v1848
  %2607 = vmatprep.subr.mxu0 %v1853
  %2608 = vmatpush1.msra.mxu0 %v1852
  %2609 = vmatprep.subr.mxu0 %v1857
  %2610 = vmatpush1.msra.mxu0 %v1856
  %2611 = vmatprep.subr.mxu0 %v1861
  %2612 = vmatpush1.msra.mxu0 %v1860
  %2613 = vmatprep.subr.mxu0 %v1865
  %2614 = vmatpush1.msra.mxu0 %v1864
  %2615 = vmatprep.subr.mxu0 %v1869
  %2616 = vmatpush1.msra.mxu0 %v1868
  %2617 = vmatprep.subr.mxu0 %v1873
  %2618 = vmatpush1.msra.mxu0 %v1872
  %2619 = vmatprep.subr.mxu0 %v1877
  %2620 = vmatpush1.msra.mxu0 %v1876
  %2621 = vmatprep.subr.mxu0 %v1881
  %2622 = vmatpush1.msra.mxu0 %v1880
  %2623 = vmatprep.subr.mxu0 %v1885
  %2624 = vmatpush1.msra.mxu0 %v1884
  %2625 = vmatprep.subr.mxu0 %v1889
  %2626 = vmatpush1.msra.mxu0 %v1888
  %2627 = vmatprep.subr.mxu0 %v1893
  %2628 = vmatpush1.msra.mxu0 %v1892
  %2629 = vmatprep.subr.mxu0 %v1897
  %2630 = vmatpush1.msra.mxu0 %v1896
  %2631 = vmatprep.subr.mxu0 %v1901
  %2632 = vmatpush1.msra.mxu0 %v1900
  %2633 = vmatprep.subr.mxu0 %v1905
  %2634 = vmatpush1.msra.mxu0 %v1904
  %2635 = vmatprep.subr.mxu0 %v1909
  %2636 = vmatpush1.msra.mxu0 %v1908
  %2637 = vmatprep.subr.mxu0 %v1913
  %2638 = vmatpush1.msra.mxu0 %v1912
  %2639 = vmatprep.subr.mxu0 %v1917
  %2640 = vmatpush1.msra.mxu0 %v1916
  %2641 = vmatprep.subr.mxu0 %v1921
  %2642 = vmatpush1.msra.mxu0 %v1920
  %2643 = vmatprep.subr.mxu0 %v1925
  %2644 = vmatpush1.msra.mxu0 %v1924
  %2645 = vmatprep.subr.mxu0 %v1929
  %2646 = vmatpush1.msra.mxu0 %v1928
  %2647 = vmatprep.subr.mxu0 %v1933
  %2648 = vmatpush1.msra.mxu0 %v1932
  %2649 = vmatprep.subr.mxu0 %v1937
  %2650 = vmatpush1.msra.mxu0 %v1936
  %2651 = vmatprep.subr.mxu0 %v1941
  %2652 = vmatpush1.msra.mxu0 %v1940
  %2653 = vmatprep.subr.mxu0 %v1945
  %2654 = vmatpush1.msra.mxu0 %v1944
  %2655 = vmatprep.subr.mxu0 %v1949
  %2656 = vmatpush1.msra.mxu0 %v1948
  %2657 = vmatprep.subr.mxu0 %v1953
  %2658 = vmatpush1.msra.mxu0 %v1952
  %2659 = vmatprep.subr.mxu0 %v1957
  %2660 = vmatpush1.msra.mxu0 %v1956
  %2661 = vmatprep.subr.mxu0 %v1961
  %2662 = vmatpush1.msra.mxu0 %v1960
  %2663 = vmatprep.subr.mxu0 %v1965
  %2664 = vmatpush1.msra.mxu0 %v1964
  %2665 = vmatprep.subr.mxu0 %v1969
  %2666 = vmatpush1.msra.mxu0 %v1968
  %2667 = vmatprep.mubr.f32.mxu0 %v1709
  %2668 = vmatmul.mubr.f32.gmra.mrb[0].mxu0 %v1708
  %v2669 = vpop.f32.mrb[0].mxu0
  %v2670 = vadd.f32 %v2599, %v2669
  %v2671 = vpop.f32.mrb[0].mxu0
  %v2672 = vadd.f32 %v2601, %v2671
  %2673 = vdwg.mxu0
  %2674 = vmatprep.subr.mxu0 %v1973
  %2675 = vmatpush1.msra.mxu0 %v1972
  %2676 = vmatprep.subr.mxu0 %v1977
  %2677 = vmatpush1.msra.mxu0 %v1976
  %2678 = vmatprep.subr.mxu0 %v1981
  %2679 = vmatpush1.msra.mxu0 %v1980
  %2680 = vmatprep.subr.mxu0 %v1985
  %2681 = vmatpush1.msra.mxu0 %v1984
  %2682 = vmatprep.subr.mxu0 %v1989
  %2683 = vmatpush1.msra.mxu0 %v1988
  %2684 = vmatprep.subr.mxu0 %v1993
  %2685 = vmatpush1.msra.mxu0 %v1992
  %2686 = vmatprep.subr.mxu0 %v1997
  %2687 = vmatpush1.msra.mxu0 %v1996
  %2688 = vmatprep.subr.mxu0 %v2001
  %2689 = vmatpush1.msra.mxu0 %v2000
  %2690 = vmatprep.subr.mxu0 %v2005
  %2691 = vmatpush1.msra.mxu0 %v2004
  %2692 = vmatprep.subr.mxu0 %v2009
  %2693 = vmatpush1.msra.mxu0 %v2008
  %2694 = vmatprep.subr.mxu0 %v2013
  %2695 = vmatpush1.msra.mxu0 %v2012
  %2696 = vmatprep.subr.mxu0 %v2017
  %2697 = vmatpush1.msra.mxu0 %v2016
  %2698 = vmatprep.subr.mxu0 %v2021
  %2699 = vmatpush1.msra.mxu0 %v2020
  %2700 = vmatprep.subr.mxu0 %v2025
  %2701 = vmatpush1.msra.mxu0 %v2024
  %2702 = vmatprep.subr.mxu0 %v2029
  %2703 = vmatpush1.msra.mxu0 %v2028
  %2704 = vmatprep.subr.mxu0 %v2033
  %2705 = vmatpush1.msra.mxu0 %v2032
  %2706 = vmatprep.subr.mxu0 %v2037
  %2707 = vmatpush1.msra.mxu0 %v2036
  %2708 = vmatprep.subr.mxu0 %v2041
  %2709 = vmatpush1.msra.mxu0 %v2040
  %2710 = vmatprep.subr.mxu0 %v2045
  %2711 = vmatpush1.msra.mxu0 %v2044
  %2712 = vmatprep.subr.mxu0 %v2049
  %2713 = vmatpush1.msra.mxu0 %v2048
  %2714 = vmatprep.subr.mxu0 %v2053
  %2715 = vmatpush1.msra.mxu0 %v2052
  %2716 = vmatprep.subr.mxu0 %v2057
  %2717 = vmatpush1.msra.mxu0 %v2056
  %2718 = vmatprep.subr.mxu0 %v2061
  %2719 = vmatpush1.msra.mxu0 %v2060
  %2720 = vmatprep.subr.mxu0 %v2065
  %2721 = vmatpush1.msra.mxu0 %v2064
  %2722 = vmatprep.subr.mxu0 %v2069
  %2723 = vmatpush1.msra.mxu0 %v2068
  %2724 = vmatprep.subr.mxu0 %v2073
  %2725 = vmatpush1.msra.mxu0 %v2072
  %2726 = vmatprep.subr.mxu0 %v2077
  %2727 = vmatpush1.msra.mxu0 %v2076
  %2728 = vmatprep.subr.mxu0 %v2081
  %2729 = vmatpush1.msra.mxu0 %v2080
  %2730 = vmatprep.subr.mxu0 %v2085
  %2731 = vmatpush1.msra.mxu0 %v2084
  %2732 = vmatprep.subr.mxu0 %v2089
  %2733 = vmatpush1.msra.mxu0 %v2088
  %2734 = vmatprep.subr.mxu0 %v2093
  %2735 = vmatpush1.msra.mxu0 %v2092
  %2736 = vmatprep.subr.mxu0 %v2097
  %2737 = vmatpush1.msra.mxu0 %v2096
  %2738 = vmatprep.mubr.f32.mxu0 %v1711
  %2739 = vmatmul.mubr.f32.gmra.mrb[0].mxu0 %v1710
  %v2740 = vpop.f32.mrb[0].mxu0
  %v2741 = vadd.f32 %v2670, %v2740
  %v2742 = vpop.f32.mrb[0].mxu0
  %v2743 = vadd.f32 %v2672, %v2742
  %2744 = vdwg.mxu0
  %2745 = vmatprep.subr.mxu0 %v2101
  %2746 = vmatpush1.msra.mxu0 %v2100
  %2747 = vmatprep.subr.mxu0 %v2105
  %2748 = vmatpush1.msra.mxu0 %v2104
  %2749 = vmatprep.subr.mxu0 %v2109
  %2750 = vmatpush1.msra.mxu0 %v2108
  %2751 = vmatprep.subr.mxu0 %v2113
  %2752 = vmatpush1.msra.mxu0 %v2112
  %2753 = vmatprep.subr.mxu0 %v2117
  %2754 = vmatpush1.msra.mxu0 %v2116
  %2755 = vmatprep.subr.mxu0 %v2121
  %2756 = vmatpush1.msra.mxu0 %v2120
  %2757 = vmatprep.subr.mxu0 %v2125
  %2758 = vmatpush1.msra.mxu0 %v2124
  %2759 = vmatprep.subr.mxu0 %v2129
  %2760 = vmatpush1.msra.mxu0 %v2128
  %2761 = vmatprep.subr.mxu0 %v2133
  %2762 = vmatpush1.msra.mxu0 %v2132
  %2763 = vmatprep.subr.mxu0 %v2137
  %2764 = vmatpush1.msra.mxu0 %v2136
  %2765 = vmatprep.subr.mxu0 %v2141
  %2766 = vmatpush1.msra.mxu0 %v2140
  %2767 = vmatprep.subr.mxu0 %v2145
  %2768 = vmatpush1.msra.mxu0 %v2144
  %2769 = vmatprep.subr.mxu0 %v2149
  %2770 = vmatpush1.msra.mxu0 %v2148
  %2771 = vmatprep.subr.mxu0 %v2153
  %2772 = vmatpush1.msra.mxu0 %v2152
  %2773 = vmatprep.subr.mxu0 %v2157
  %2774 = vmatpush1.msra.mxu0 %v2156
  %2775 = vmatprep.subr.mxu0 %v2161
  %2776 = vmatpush1.msra.mxu0 %v2160
  %2777 = vmatprep.subr.mxu0 %v2165
  %2778 = vmatpush1.msra.mxu0 %v2164
  %2779 = vmatprep.subr.mxu0 %v2169
  %2780 = vmatpush1.msra.mxu0 %v2168
  %2781 = vmatprep.subr.mxu0 %v2173
  %2782 = vmatpush1.msra.mxu0 %v2172
  %2783 = vmatprep.subr.mxu0 %v2177
  %2784 = vmatpush1.msra.mxu0 %v2176
  %2785 = vmatprep.subr.mxu0 %v2181
  %2786 = vmatpush1.msra.mxu0 %v2180
  %2787 = vmatprep.subr.mxu0 %v2185
  %2788 = vmatpush1.msra.mxu0 %v2184
  %2789 = vmatprep.subr.mxu0 %v2189
  %2790 = vmatpush1.msra.mxu0 %v2188
  %2791 = vmatprep.subr.mxu0 %v2193
  %2792 = vmatpush1.msra.mxu0 %v2192
  %2793 = vmatprep.subr.mxu0 %v2197
  %2794 = vmatpush1.msra.mxu0 %v2196
  %2795 = vmatprep.subr.mxu0 %v2201
  %2796 = vmatpush1.msra.mxu0 %v2200
  %2797 = vmatprep.subr.mxu0 %v2205
  %2798 = vmatpush1.msra.mxu0 %v2204
  %2799 = vmatprep.subr.mxu0 %v2209
  %2800 = vmatpush1.msra.mxu0 %v2208
  %2801 = vmatprep.subr.mxu0 %v2213
  %2802 = vmatpush1.msra.mxu0 %v2212
  %2803 = vmatprep.subr.mxu0 %v2217
  %2804 = vmatpush1.msra.mxu0 %v2216
  %2805 = vmatprep.subr.mxu0 %v2221
  %2806 = vmatpush1.msra.mxu0 %v2220
  %2807 = vmatprep.subr.mxu0 %v2225
  %2808 = vmatpush1.msra.mxu0 %v2224
  %2809 = vmatprep.mubr.f32.mxu0 %v1713
  %2810 = vmatmul.mubr.f32.gmra.mrb[0].mxu0 %v1712
  %v2811 = vpop.f32.mrb[0].mxu0
  %v2812 = vadd.f32 %v2741, %v2811
  %v2813 = vpop.f32.mrb[0].mxu0
  %v2814 = vadd.f32 %v2743, %v2813
  %2815 = vdwg.mxu0
  %v2816 = vmax.f32 %v2528, 0.0
  %v2817 = vmax.f32 %v2530, 0.0
  %v2818 = vmax.f32 %v2812, 0.0
  %v2819 = vmax.f32 %v2814, 0.0
  %v2820 = vld [vmem:[%s5] sm:$0xff]
  %v2821 = vld [vmem:[%s5 + $0x8] sm:$0xff]
  %v2822 = vld [vmem:[%s5 + $0x10] sm:$0xff]
  %v2823 = vld [vmem:[%s5 + $0x18] sm:$0xff]
  %v2824 = vld [vmem:[%s5 + $0x20] sm:$0xff]
  %v2825 = vld [vmem:[%s5 + $0x28] sm:$0xff]
  %v2826 = vld [vmem:[%s5 + $0x30] sm:$0xff]
  %v2827 = vld [vmem:[%s5 + $0x38] sm:$0xff]
  %v2828 = vld [vmem:[%s5 + $0x40] sm:$0xff]
  %v2829 = vld [vmem:[%s5 + $0x48] sm:$0xff]
  %v2830 = vld [vmem:[%s5 + $0x50] sm:$0xff]
  %v2831 = vld [vmem:[%s5 + $0x58] sm:$0xff]
  %v2832 = vld [vmem:[%s5 + $0x60] sm:$0xff]
  %v2833 = vld [vmem:[%s5 + $0x68] sm:$0xff]
  %v2834 = vld [vmem:[%s5 + $0x70] sm:$0xff]
  %v2835 = vld [vmem:[%s5 + $0x78] sm:$0xff]
  %v2836 = vld [vmem:[%s5 + $0x80] sm:$0xff]
  %v2837 = vld [vmem:[%s5 + $0x88] sm:$0xff]
  %v2838 = vld [vmem:[%s5 + $0x90] sm:$0xff]
  %v2839 = vld [vmem:[%s5 + $0x98] sm:$0xff]
  %v2840 = vld [vmem:[%s5 + $0xa0] sm:$0xff]
  %v2841 = vld [vmem:[%s5 + $0xa8] sm:$0xff]
  %v2842 = vld [vmem:[%s5 + $0xb0] sm:$0xff]
  %v2843 = vld [vmem:[%s5 + $0xb8] sm:$0xff]
  %v2844 = vld [vmem:[%s5 + $0xc0] sm:$0xff]
  %v2845 = vld [vmem:[%s5 + $0xc8] sm:$0xff]
  %v2846 = vld [vmem:[%s5 + $0xd0] sm:$0xff]
  %v2847 = vld [vmem:[%s5 + $0xd8] sm:$0xff]
  %v2848 = vld [vmem:[%s5 + $0xe0] sm:$0xff]
  %v2849 = vld [vmem:[%s5 + $0xe8] sm:$0xff]
  %v2850 = vld [vmem:[%s5 + $0xf0] sm:$0xff]
  %v2851 = vld [vmem:[%s5 + $0xf8] sm:$0xff]
  %v2852 = vld [vmem:[%s5 + $0x100] sm:$0xff]
  %v2853 = vld [vmem:[%s5 + $0x108] sm:$0xff]
  %v2854 = vld [vmem:[%s5 + $0x110] sm:$0xff]
  %v2855 = vld [vmem:[%s5 + $0x118] sm:$0xff]
  %v2856 = vld [vmem:[%s5 + $0x120] sm:$0xff]
  %v2857 = vld [vmem:[%s5 + $0x128] sm:$0xff]
  %v2858 = vld [vmem:[%s5 + $0x130] sm:$0xff]
  %v2859 = vld [vmem:[%s5 + $0x138] sm:$0xff]
  %v2860 = vld [vmem:[%s5 + $0x140] sm:$0xff]
  %v2861 = vld [vmem:[%s5 + $0x148] sm:$0xff]
  %v2862 = vld [vmem:[%s5 + $0x150] sm:$0xff]
  %v2863 = vld [vmem:[%s5 + $0x158] sm:$0xff]
  %v2864 = vld [vmem:[%s5 + $0x160] sm:$0xff]
  %v2865 = vld [vmem:[%s5 + $0x168] sm:$0xff]
  %v2866 = vld [vmem:[%s5 + $0x170] sm:$0xff]
  %v2867 = vld [vmem:[%s5 + $0x178] sm:$0xff]
  %v2868 = vld [vmem:[%s5 + $0x180] sm:$0xff]
  %v2869 = vld [vmem:[%s5 + $0x188] sm:$0xff]
  %v2870 = vld [vmem:[%s5 + $0x190] sm:$0xff]
  %v2871 = vld [vmem:[%s5 + $0x198] sm:$0xff]
  %v2872 = vld [vmem:[%s5 + $0x1a0] sm:$0xff]
  %v2873 = vld [vmem:[%s5 + $0x1a8] sm:$0xff]
  %v2874 = vld [vmem:[%s5 + $0x1b0] sm:$0xff]
  %v2875 = vld [vmem:[%s5 + $0x1b8] sm:$0xff]
  %v2876 = vld [vmem:[%s5 + $0x1c0] sm:$0xff]
  %v2877 = vld [vmem:[%s5 + $0x1c8] sm:$0xff]
  %v2878 = vld [vmem:[%s5 + $0x1d0] sm:$0xff]
  %v2879 = vld [vmem:[%s5 + $0x1d8] sm:$0xff]
  %v2880 = vld [vmem:[%s5 + $0x1e0] sm:$0xff]
  %v2881 = vld [vmem:[%s5 + $0x1e8] sm:$0xff]
  %v2882 = vld [vmem:[%s5 + $0x1f0] sm:$0xff]
  %v2883 = vld [vmem:[%s5 + $0x1f8] sm:$0xff]
  %v2884 = vld [vmem:[%s5 + $0x200] sm:$0xff]
  %v2885 = vld [vmem:[%s5 + $0x208] sm:$0xff]
  %v2886 = vld [vmem:[%s5 + $0x210] sm:$0xff]
  %v2887 = vld [vmem:[%s5 + $0x218] sm:$0xff]
  %v2888 = vld [vmem:[%s5 + $0x220] sm:$0xff]
  %v2889 = vld [vmem:[%s5 + $0x228] sm:$0xff]
  %v2890 = vld [vmem:[%s5 + $0x230] sm:$0xff]
  %v2891 = vld [vmem:[%s5 + $0x238] sm:$0xff]
  %v2892 = vld [vmem:[%s5 + $0x240] sm:$0xff]
  %v2893 = vld [vmem:[%s5 + $0x248] sm:$0xff]
  %v2894 = vld [vmem:[%s5 + $0x250] sm:$0xff]
  %v2895 = vld [vmem:[%s5 + $0x258] sm:$0xff]
  %v2896 = vld [vmem:[%s5 + $0x260] sm:$0xff]
  %v2897 = vld [vmem:[%s5 + $0x268] sm:$0xff]
  %v2898 = vld [vmem:[%s5 + $0x270] sm:$0xff]
  %v2899 = vld [vmem:[%s5 + $0x278] sm:$0xff]
  %v2900 = vld [vmem:[%s5 + $0x280] sm:$0xff]
  %v2901 = vld [vmem:[%s5 + $0x288] sm:$0xff]
  %v2902 = vld [vmem:[%s5 + $0x290] sm:$0xff]
  %v2903 = vld [vmem:[%s5 + $0x298] sm:$0xff]
  %v2904 = vld [vmem:[%s5 + $0x2a0] sm:$0xff]
  %v2905 = vld [vmem:[%s5 + $0x2a8] sm:$0xff]
  %v2906 = vld [vmem:[%s5 + $0x2b0] sm:$0xff]
  %v2907 = vld [vmem:[%s5 + $0x2b8] sm:$0xff]
  %v2908 = vld [vmem:[%s5 + $0x2c0] sm:$0xff]
  %v2909 = vld [vmem:[%s5 + $0x2c8] sm:$0xff]
  %v2910 = vld [vmem:[%s5 + $0x2d0] sm:$0xff]
  %v2911 = vld [vmem:[%s5 + $0x2d8] sm:$0xff]
  %v2912 = vld [vmem:[%s5 + $0x2e0] sm:$0xff]
  %v2913 = vld [vmem:[%s5 + $0x2e8] sm:$0xff]
  %v2914 = vld [vmem:[%s5 + $0x2f0] sm:$0xff]
  %v2915 = vld [vmem:[%s5 + $0x2f8] sm:$0xff]
  %v2916 = vld [vmem:[%s5 + $0x300] sm:$0xff]
  %v2917 = vld [vmem:[%s5 + $0x308] sm:$0xff]
  %v2918 = vld [vmem:[%s5 + $0x310] sm:$0xff]
  %v2919 = vld [vmem:[%s5 + $0x318] sm:$0xff]
  %v2920 = vld [vmem:[%s5 + $0x320] sm:$0xff]
  %v2921 = vld [vmem:[%s5 + $0x328] sm:$0xff]
  %v2922 = vld [vmem:[%s5 + $0x330] sm:$0xff]
  %v2923 = vld [vmem:[%s5 + $0x338] sm:$0xff]
  %v2924 = vld [vmem:[%s5 + $0x340] sm:$0xff]
  %v2925 = vld [vmem:[%s5 + $0x348] sm:$0xff]
  %v2926 = vld [vmem:[%s5 + $0x350] sm:$0xff]
  %v2927 = vld [vmem:[%s5 + $0x358] sm:$0xff]
  %v2928 = vld [vmem:[%s5 + $0x360] sm:$0xff]
  %v2929 = vld [vmem:[%s5 + $0x368] sm:$0xff]
  %v2930 = vld [vmem:[%s5 + $0x370] sm:$0xff]
  %v2931 = vld [vmem:[%s5 + $0x378] sm:$0xff]
  %v2932 = vld [vmem:[%s5 + $0x380] sm:$0xff]
  %v2933 = vld [vmem:[%s5 + $0x388] sm:$0xff]
  %v2934 = vld [vmem:[%s5 + $0x390] sm:$0xff]
  %v2935 = vld [vmem:[%s5 + $0x398] sm:$0xff]
  %v2936 = vld [vmem:[%s5 + $0x3a0] sm:$0xff]
  %v2937 = vld [vmem:[%s5 + $0x3a8] sm:$0xff]
  %v2938 = vld [vmem:[%s5 + $0x3b0] sm:$0xff]
  %v2939 = vld [vmem:[%s5 + $0x3b8] sm:$0xff]
  %v2940 = vld [vmem:[%s5 + $0x3c0] sm:$0xff]
  %v2941 = vld [vmem:[%s5 + $0x3c8] sm:$0xff]
  %v2942 = vld [vmem:[%s5 + $0x3d0] sm:$0xff]
  %v2943 = vld [vmem:[%s5 + $0x3d8] sm:$0xff]
  %v2944 = vld [vmem:[%s5 + $0x3e0] sm:$0xff]
  %v2945 = vld [vmem:[%s5 + $0x3e8] sm:$0xff]
  %v2946 = vld [vmem:[%s5 + $0x3f0] sm:$0xff]
  %v2947 = vld [vmem:[%s5 + $0x3f8] sm:$0xff]
  %v2948 = vld [vmem:[%s6] sm:$0x3]
  %v2950 = vlaneseq
  %v2951 = vshrl.u32 %v2950, 7
  %v2952 = vsub.s32 0, %v2951
  %v2953 = vrot.slane %v2948, %v2952
  %v2954 = vlaneseq
  %v2955 = vshrl.u32 %v2954, 7
  %v2956 = vsub.s32 1, %v2955
  %v2957 = vrot.slane %v2948, %v2956
  %2960 = vmatprep.subr.mxu0 %v2821
  %2961 = vmatpush1.msra.mxu0 %v2820
  %2962 = vmatprep.subr.mxu0 %v2823
  %2963 = vmatpush1.msra.mxu0 %v2822
  %2964 = vmatprep.subr.mxu0 %v2825
  %2965 = vmatpush1.msra.mxu0 %v2824
  %2966 = vmatprep.subr.mxu0 %v2827
  %2967 = vmatpush1.msra.mxu0 %v2826
  %2968 = vmatprep.subr.mxu0 %v2829
  %2969 = vmatpush1.msra.mxu0 %v2828
  %2970 = vmatprep.subr.mxu0 %v2831
  %2971 = vmatpush1.msra.mxu0 %v2830
  %2972 = vmatprep.subr.mxu0 %v2833
  %2973 = vmatpush1.msra.mxu0 %v2832
  %2974 = vmatprep.subr.mxu0 %v2835
  %2975 = vmatpush1.msra.mxu0 %v2834
  %2976 = vmatprep.subr.mxu0 %v2837
  %2977 = vmatpush1.msra.mxu0 %v2836
  %2978 = vmatprep.subr.mxu0 %v2839
  %2979 = vmatpush1.msra.mxu0 %v2838
  %2980 = vmatprep.subr.mxu0 %v2841
  %2981 = vmatpush1.msra.mxu0 %v2840
  %2982 = vmatprep.subr.mxu0 %v2843
  %2983 = vmatpush1.msra.mxu0 %v2842
  %2984 = vmatprep.subr.mxu0 %v2845
  %2985 = vmatpush1.msra.mxu0 %v2844
  %2986 = vmatprep.subr.mxu0 %v2847
  %2987 = vmatpush1.msra.mxu0 %v2846
  %2988 = vmatprep.subr.mxu0 %v2849
  %2989 = vmatpush1.msra.mxu0 %v2848
  %2990 = vmatprep.subr.mxu0 %v2851
  %2991 = vmatpush1.msra.mxu0 %v2850
  %2992 = vmatprep.subr.mxu0 %v2853
  %2993 = vmatpush1.msra.mxu0 %v2852
  %2994 = vmatprep.subr.mxu0 %v2855
  %2995 = vmatpush1.msra.mxu0 %v2854
  %2996 = vmatprep.subr.mxu0 %v2857
  %2997 = vmatpush1.msra.mxu0 %v2856
  %2998 = vmatprep.subr.mxu0 %v2859
  %2999 = vmatpush1.msra.mxu0 %v2858
  %3000 = vmatprep.subr.mxu0 %v2861
  %3001 = vmatpush1.msra.mxu0 %v2860
  %3002 = vmatprep.subr.mxu0 %v2863
  %3003 = vmatpush1.msra.mxu0 %v2862
  %3004 = vmatprep.subr.mxu0 %v2865
  %3005 = vmatpush1.msra.mxu0 %v2864
  %3006 = vmatprep.subr.mxu0 %v2867
  %3007 = vmatpush1.msra.mxu0 %v2866
  %3008 = vmatprep.subr.mxu0 %v2869
  %3009 = vmatpush1.msra.mxu0 %v2868
  %3010 = vmatprep.subr.mxu0 %v2871
  %3011 = vmatpush1.msra.mxu0 %v2870
  %3012 = vmatprep.subr.mxu0 %v2873
  %3013 = vmatpush1.msra.mxu0 %v2872
  %3014 = vmatprep.subr.mxu0 %v2875
  %3015 = vmatpush1.msra.mxu0 %v2874
  %3016 = vmatprep.subr.mxu0 %v2877
  %3017 = vmatpush1.msra.mxu0 %v2876
  %3018 = vmatprep.subr.mxu0 %v2879
  %3019 = vmatpush1.msra.mxu0 %v2878
  %3020 = vmatprep.subr.mxu0 %v2881
  %3021 = vmatpush1.msra.mxu0 %v2880
  %3022 = vmatprep.subr.mxu0 %v2883
  %3023 = vmatpush1.msra.mxu0 %v2882
  %3024 = vmatprep.mubr.f32.mxu0 %v2817
  %3025 = vmatmul.mubr.f32.gmra.mrb[0].mxu0 %v2816
  %v3026 = vpop.f32.mrb[0].mxu0
  %v3027 = vadd.f32 %v2953, %v3026
  %v3028 = vpop.f32.mrb[0].mxu0
  %v3029 = vadd.f32 %v2957, %v3028
  %3030 = vdwg.mxu0
  %3031 = vmatprep.subr.mxu0 %v2885
  %3032 = vmatpush1.msra.mxu0 %v2884
  %3033 = vmatprep.subr.mxu0 %v2887
  %3034 = vmatpush1.msra.mxu0 %v2886
  %3035 = vmatprep.subr.mxu0 %v2889
  %3036 = vmatpush1.msra.mxu0 %v2888
  %3037 = vmatprep.subr.mxu0 %v2891
  %3038 = vmatpush1.msra.mxu0 %v2890
  %3039 = vmatprep.subr.mxu0 %v2893
  %3040 = vmatpush1.msra.mxu0 %v2892
  %3041 = vmatprep.subr.mxu0 %v2895
  %3042 = vmatpush1.msra.mxu0 %v2894
  %3043 = vmatprep.subr.mxu0 %v2897
  %3044 = vmatpush1.msra.mxu0 %v2896
  %3045 = vmatprep.subr.mxu0 %v2899
  %3046 = vmatpush1.msra.mxu0 %v2898
  %3047 = vmatprep.subr.mxu0 %v2901
  %3048 = vmatpush1.msra.mxu0 %v2900
  %3049 = vmatprep.subr.mxu0 %v2903
  %3050 = vmatpush1.msra.mxu0 %v2902
  %3051 = vmatprep.subr.mxu0 %v2905
  %3052 = vmatpush1.msra.mxu0 %v2904
  %3053 = vmatprep.subr.mxu0 %v2907
  %3054 = vmatpush1.msra.mxu0 %v2906
  %3055 = vmatprep.subr.mxu0 %v2909
  %3056 = vmatpush1.msra.mxu0 %v2908
  %3057 = vmatprep.subr.mxu0 %v2911
  %3058 = vmatpush1.msra.mxu0 %v2910
  %3059 = vmatprep.subr.mxu0 %v2913
  %3060 = vmatpush1.msra.mxu0 %v2912
  %3061 = vmatprep.subr.mxu0 %v2915
  %3062 = vmatpush1.msra.mxu0 %v2914
  %3063 = vmatprep.subr.mxu0 %v2917
  %3064 = vmatpush1.msra.mxu0 %v2916
  %3065 = vmatprep.subr.mxu0 %v2919
  %3066 = vmatpush1.msra.mxu0 %v2918
  %3067 = vmatprep.subr.mxu0 %v2921
  %3068 = vmatpush1.msra.mxu0 %v2920
  %3069 = vmatprep.subr.mxu0 %v2923
  %3070 = vmatpush1.msra.mxu0 %v2922
  %3071 = vmatprep.subr.mxu0 %v2925
  %3072 = vmatpush1.msra.mxu0 %v2924
  %3073 = vmatprep.subr.mxu0 %v2927
  %3074 = vmatpush1.msra.mxu0 %v2926
  %3075 = vmatprep.subr.mxu0 %v2929
  %3076 = vmatpush1.msra.mxu0 %v2928
  %3077 = vmatprep.subr.mxu0 %v2931
  %3078 = vmatpush1.msra.mxu0 %v2930
  %3079 = vmatprep.subr.mxu0 %v2933
  %3080 = vmatpush1.msra.mxu0 %v2932
  %3081 = vmatprep.subr.mxu0 %v2935
  %3082 = vmatpush1.msra.mxu0 %v2934
  %3083 = vmatprep.subr.mxu0 %v2937
  %3084 = vmatpush1.msra.mxu0 %v2936
  %3085 = vmatprep.subr.mxu0 %v2939
  %3086 = vmatpush1.msra.mxu0 %v2938
  %3087 = vmatprep.subr.mxu0 %v2941
  %3088 = vmatpush1.msra.mxu0 %v2940
  %3089 = vmatprep.subr.mxu0 %v2943
  %3090 = vmatpush1.msra.mxu0 %v2942
  %3091 = vmatprep.subr.mxu0 %v2945
  %3092 = vmatpush1.msra.mxu0 %v2944
  %3093 = vmatprep.subr.mxu0 %v2947
  %3094 = vmatpush1.msra.mxu0 %v2946
  %3095 = vmatprep.mubr.f32.mxu0 %v2819
  %3096 = vmatmul.mubr.f32.gmra.mrb[0].mxu0 %v2818
  %v3097 = vpop.f32.mrb[0].mxu0
  %v3098 = vadd.f32 %v3027, %v3097
  %v3099 = vpop.f32.mrb[0].mxu0
  %v3100 = vadd.f32 %v3029, %v3099
  %3101 = vdwg.mxu0
  %v3102 = vmax.f32 %v3098, 0.0
  %v3103 = vmax.f32 %v3100, 0.0
  %v3104 = vld [vmem:[%s7] sm:$0xff]
  %v3105 = vld [vmem:[%s7 + $0x8] sm:$0xff]
  %v3106 = vld [vmem:[%s7 + $0x10] sm:$0xff]
  %v3107 = vld [vmem:[%s7 + $0x18] sm:$0xff]
  %v3108 = vld [vmem:[%s7 + $0x20] sm:$0xff]
  %v3109 = vld [vmem:[%s7 + $0x28] sm:$0xff]
  %v3110 = vld [vmem:[%s7 + $0x30] sm:$0xff]
  %v3111 = vld [vmem:[%s7 + $0x38] sm:$0xff]
  %v3112 = vld [vmem:[%s7 + $0x40] sm:$0xff]
  %v3113 = vld [vmem:[%s7 + $0x48] sm:$0xff]
  %v3114 = vld [vmem:[%s7 + $0x50] sm:$0xff]
  %v3115 = vld [vmem:[%s7 + $0x58] sm:$0xff]
  %v3116 = vld [vmem:[%s7 + $0x60] sm:$0xff]
  %v3117 = vld [vmem:[%s7 + $0x68] sm:$0xff]
  %v3118 = vld [vmem:[%s7 + $0x70] sm:$0xff]
  %v3119 = vld [vmem:[%s7 + $0x78] sm:$0xff]
  %v3120 = vld [vmem:[%s7 + $0x80] sm:$0xff]
  %v3121 = vld [vmem:[%s7 + $0x88] sm:$0xff]
  %v3122 = vld [vmem:[%s7 + $0x90] sm:$0xff]
  %v3123 = vld [vmem:[%s7 + $0x98] sm:$0xff]
  %v3124 = vld [vmem:[%s7 + $0xa0] sm:$0xff]
  %v3125 = vld [vmem:[%s7 + $0xa8] sm:$0xff]
  %v3126 = vld [vmem:[%s7 + $0xb0] sm:$0xff]
  %v3127 = vld [vmem:[%s7 + $0xb8] sm:$0xff]
  %v3128 = vld [vmem:[%s7 + $0xc0] sm:$0xff]
  %v3129 = vld [vmem:[%s7 + $0xc8] sm:$0xff]
  %v3130 = vld [vmem:[%s7 + $0xd0] sm:$0xff]
  %v3131 = vld [vmem:[%s7 + $0xd8] sm:$0xff]
  %v3132 = vld [vmem:[%s7 + $0xe0] sm:$0xff]
  %v3133 = vld [vmem:[%s7 + $0xe8] sm:$0xff]
  %v3134 = vld [vmem:[%s7 + $0xf0] sm:$0xff]
  %v3135 = vld [vmem:[%s7 + $0xf8] sm:$0xff]
  %v3136 = vld [vmem:[%s8] sm:$0x1]
  %v3138 = vlaneseq
  %v3139 = vshrl.u32 %v3138, 7
  %v3140 = vsub.s32 0, %v3139
  %v3141 = vrot.slane %v3136, %v3140
  %3143 = vmatprep.subr.mxu0 0.0
  %3144 = vmatpush1.msra.mxu0 %v3104
  %3145 = vmatprep.subr.mxu0 0.0
  %3146 = vmatpush1.msra.mxu0 %v3105
  %3147 = vmatprep.subr.mxu0 0.0
  %3148 = vmatpush1.msra.mxu0 %v3106
  %3149 = vmatprep.subr.mxu0 0.0
  %3150 = vmatpush1.msra.mxu0 %v3107
  %3151 = vmatprep.subr.mxu0 0.0
  %3152 = vmatpush1.msra.mxu0 %v3108
  %3153 = vmatprep.subr.mxu0 0.0
  %3154 = vmatpush1.msra.mxu0 %v3109
  %3155 = vmatprep.subr.mxu0 0.0
  %3156 = vmatpush1.msra.mxu0 %v3110
  %3157 = vmatprep.subr.mxu0 0.0
  %3158 = vmatpush1.msra.mxu0 %v3111
  %3159 = vmatprep.subr.mxu0 0.0
  %3160 = vmatpush1.msra.mxu0 %v3112
  %3161 = vmatprep.subr.mxu0 0.0
  %3162 = vmatpush1.msra.mxu0 %v3113
  %3163 = vmatprep.subr.mxu0 0.0
  %3164 = vmatpush1.msra.mxu0 %v3114
  %3165 = vmatprep.subr.mxu0 0.0
  %3166 = vmatpush1.msra.mxu0 %v3115
  %3167 = vmatprep.subr.mxu0 0.0
  %3168 = vmatpush1.msra.mxu0 %v3116
  %3169 = vmatprep.subr.mxu0 0.0
  %3170 = vmatpush1.msra.mxu0 %v3117
  %3171 = vmatprep.subr.mxu0 0.0
  %3172 = vmatpush1.msra.mxu0 %v3118
  %3173 = vmatprep.subr.mxu0 0.0
  %3174 = vmatpush1.msra.mxu0 %v3119
  %3175 = vmatprep.subr.mxu0 0.0
  %3176 = vmatpush1.msra.mxu0 %v3120
  %3177 = vmatprep.subr.mxu0 0.0
  %3178 = vmatpush1.msra.mxu0 %v3121
  %3179 = vmatprep.subr.mxu0 0.0
  %3180 = vmatpush1.msra.mxu0 %v3122
  %3181 = vmatprep.subr.mxu0 0.0
  %3182 = vmatpush1.msra.mxu0 %v3123
  %3183 = vmatprep.subr.mxu0 0.0
  %3184 = vmatpush1.msra.mxu0 %v3124
  %3185 = vmatprep.subr.mxu0 0.0
  %3186 = vmatpush1.msra.mxu0 %v3125
  %3187 = vmatprep.subr.mxu0 0.0
  %3188 = vmatpush1.msra.mxu0 %v3126
  %3189 = vmatprep.subr.mxu0 0.0
  %3190 = vmatpush1.msra.mxu0 %v3127
  %3191 = vmatprep.subr.mxu0 0.0
  %3192 = vmatpush1.msra.mxu0 %v3128
  %3193 = vmatprep.subr.mxu0 0.0
  %3194 = vmatpush1.msra.mxu0 %v3129
  %3195 = vmatprep.subr.mxu0 0.0
  %3196 = vmatpush1.msra.mxu0 %v3130
  %3197 = vmatprep.subr.mxu0 0.0
  %3198 = vmatpush1.msra.mxu0 %v3131
  %3199 = vmatprep.subr.mxu0 0.0
  %3200 = vmatpush1.msra.mxu0 %v3132
  %3201 = vmatprep.subr.mxu0 0.0
  %3202 = vmatpush1.msra.mxu0 %v3133
  %3203 = vmatprep.subr.mxu0 0.0
  %3204 = vmatpush1.msra.mxu0 %v3134
  %3205 = vmatprep.subr.mxu0 0.0
  %3206 = vmatpush1.msra.mxu0 %v3135
  %3207 = vmatprep.mubr.f32.mxu0 %v3103
  %3208 = vmatmul.mubr.f32.gmra.mrb[0].mxu0 %v3102
  %v3209 = vpop.f32.mrb[0].mxu0
  %v3210 = vadd.f32 %v3141, %v3209
  %v3211 = vpop.f32.mrb[0].mxu0
  %3212 = vdwg.mxu0
  %v3213 = vmax.f32 %v3210, 0.0
  %v3214 = vld [vmem:[%s9] sm:$0xff]
  %v3215 = vld [vmem:[%s9 + $0x8] sm:$0xff]
  %v3216 = vld [vmem:[%s9 + $0x10] sm:$0xff]
  %v3217 = vld [vmem:[%s9 + $0x18] sm:$0xff]
  %v3218 = vld [vmem:[%s9 + $0x20] sm:$0xff]
  %v3219 = vld [vmem:[%s9 + $0x28] sm:$0xff]
  %v3220 = vld [vmem:[%s9 + $0x30] sm:$0xff]
  %v3221 = vld [vmem:[%s9 + $0x38] sm:$0xff]
  %v3222 = vld [vmem:[%s9 + $0x40] sm:$0xff]
  %v3223 = vld [vmem:[%s9 + $0x48] sm:$0xff]
  %v3224 = vld [vmem:[%s9 + $0x50] sm:$0xff]
  %v3225 = vld [vmem:[%s9 + $0x58] sm:$0xff]
  %v3226 = vld [vmem:[%s9 + $0x60] sm:$0xff]
  %v3227 = vld [vmem:[%s9 + $0x68] sm:$0xff]
  %v3228 = vld [vmem:[%s9 + $0x70] sm:$0xff]
  %v3229 = vld [vmem:[%s9 + $0x78] sm:$0xff]
  %v3230 = vld [vmem:[%s9 + $0x80] sm:$0xff]
  %v3231 = vld [vmem:[%s9 + $0x88] sm:$0xff]
  %v3232 = vld [vmem:[%s9 + $0x90] sm:$0xff]
  %v3233 = vld [vmem:[%s9 + $0x98] sm:$0xff]
  %v3234 = vld [vmem:[%s9 + $0xa0] sm:$0xff]
  %v3235 = vld [vmem:[%s9 + $0xa8] sm:$0xff]
  %v3236 = vld [vmem:[%s9 + $0xb0] sm:$0xff]
  %v3237 = vld [vmem:[%s9 + $0xb8] sm:$0xff]
  %v3238 = vld [vmem:[%s9 + $0xc0] sm:$0xff]
  %v3239 = vld [vmem:[%s9 + $0xc8] sm:$0xff]
  %v3240 = vld [vmem:[%s9 + $0xd0] sm:$0xff]
  %v3241 = vld [vmem:[%s9 + $0xd8] sm:$0xff]
  %v3242 = vld [vmem:[%s9 + $0xe0] sm:$0xff]
  %v3243 = vld [vmem:[%s9 + $0xe8] sm:$0xff]
  %v3244 = vld [vmem:[%s9 + $0xf0] sm:$0xff]
  %v3245 = vld [vmem:[%s9 + $0xf8] sm:$0xff]
  %v3246 = vld [vmem:[%s10] sm:$0x3]
  %v3248 = vlaneseq
  %v3249 = vshrl.u32 %v3248, 7
  %v3250 = vsub.s32 0, %v3249
  %v3251 = vrot.slane %v3246, %v3250
  %v3252 = vlaneseq
  %v3253 = vshrl.u32 %v3252, 7
  %v3254 = vsub.s32 1, %v3253
  %v3255 = vrot.slane %v3246, %v3254
  %3258 = vmatprep.subr.mxu0 %v3215
  %3259 = vmatpush1.msra.mxu0 %v3214
  %3260 = vmatprep.subr.mxu0 %v3217
  %3261 = vmatpush1.msra.mxu0 %v3216
  %3262 = vmatprep.subr.mxu0 %v3219
  %3263 = vmatpush1.msra.mxu0 %v3218
  %3264 = vmatprep.subr.mxu0 %v3221
  %3265 = vmatpush1.msra.mxu0 %v3220
  %3266 = vmatprep.subr.mxu0 %v3223
  %3267 = vmatpush1.msra.mxu0 %v3222
  %3268 = vmatprep.subr.mxu0 %v3225
  %3269 = vmatpush1.msra.mxu0 %v3224
  %3270 = vmatprep.subr.mxu0 %v3227
  %3271 = vmatpush1.msra.mxu0 %v3226
  %3272 = vmatprep.subr.mxu0 %v3229
  %3273 = vmatpush1.msra.mxu0 %v3228
  %3274 = vmatprep.subr.mxu0 %v3231
  %3275 = vmatpush1.msra.mxu0 %v3230
  %3276 = vmatprep.subr.mxu0 %v3233
  %3277 = vmatpush1.msra.mxu0 %v3232
  %3278 = vmatprep.subr.mxu0 %v3235
  %3279 = vmatpush1.msra.mxu0 %v3234
  %3280 = vmatprep.subr.mxu0 %v3237
  %3281 = vmatpush1.msra.mxu0 %v3236
  %3282 = vmatprep.subr.mxu0 %v3239
  %3283 = vmatpush1.msra.mxu0 %v3238
  %3284 = vmatprep.subr.mxu0 %v3241
  %3285 = vmatpush1.msra.mxu0 %v3240
  %3286 = vmatprep.subr.mxu0 %v3243
  %3287 = vmatpush1.msra.mxu0 %v3242
  %3288 = vmatprep.subr.mxu0 %v3245
  %3289 = vmatpush1.msra.mxu0 %v3244
  %3290 = vmatprep.subr.mxu0 0.0
  %3291 = vmatpush1.msra.mxu0 0.0
  %3292 = vmatprep.subr.mxu0 0.0
  %3293 = vmatpush1.msra.mxu0 0.0
  %3294 = vmatprep.subr.mxu0 0.0
  %3295 = vmatpush1.msra.mxu0 0.0
  %3296 = vmatprep.subr.mxu0 0.0
  %3297 = vmatpush1.msra.mxu0 0.0
  %3298 = vmatprep.subr.mxu0 0.0
  %3299 = vmatpush1.msra.mxu0 0.0
  %3300 = vmatprep.subr.mxu0 0.0
  %3301 = vmatpush1.msra.mxu0 0.0
  %3302 = vmatprep.subr.mxu0 0.0
  %3303 = vmatpush1.msra.mxu0 0.0
  %3304 = vmatprep.subr.mxu0 0.0
  %3305 = vmatpush1.msra.mxu0 0.0
  %3306 = vmatprep.subr.mxu0 0.0
  %3307 = vmatpush1.msra.mxu0 0.0
  %3308 = vmatprep.subr.mxu0 0.0
  %3309 = vmatpush1.msra.mxu0 0.0
  %3310 = vmatprep.subr.mxu0 0.0
  %3311 = vmatpush1.msra.mxu0 0.0
  %3312 = vmatprep.subr.mxu0 0.0
  %3313 = vmatpush1.msra.mxu0 0.0
  %3314 = vmatprep.subr.mxu0 0.0
  %3315 = vmatpush1.msra.mxu0 0.0
  %3316 = vmatprep.subr.mxu0 0.0
  %3317 = vmatpush1.msra.mxu0 0.0
  %3318 = vmatprep.subr.mxu0 0.0
  %3319 = vmatpush1.msra.mxu0 0.0
  %3320 = vmatprep.subr.mxu0 0.0
  %3321 = vmatpush1.msra.mxu0 0.0
  %3322 = vmatprep.mubr.f32.mxu0 0.0
  %3323 = vmatmul.mubr.f32.gmra.mrb[0].mxu0 %v3213
  %v3324 = vpop.f32.mrb[0].mxu0
  %v3325 = vadd.f32 %v3251, %v3324
  %v3326 = vpop.f32.mrb[0].mxu0
  %v3327 = vadd.f32 %v3255, %v3326
  %3328 = vdwg.mxu0
  %v3329 = vmax.f32 %v3325, 0.0
  %v3330 = vmax.f32 %v3327, 0.0
  %3331 = vst [vmem:[%s11] sm:$0xff] %v3329
  %3332 = vst [vmem:[%s11 + $0x8] sm:$0xff] %v3330
  // Predicated region
  $region46: #{encoder_forward.1} parent=0 // pred_check
    _
  $region47: #{encoder_forward.1} parent=0 // pred_check_branch
    %3334 = sbr.rel (0) target = $region49
  $region48: #{encoder_forward.1} parent=0 // pred_region
    _
  $region49: #{encoder_forward.1} parent=0 // pred_fallthru
    _
  // Predicated region
  $region50: #{encoder_forward.1} parent=0 // pred_check
    _
  $region51: #{encoder_forward.1} parent=0 // pred_check_branch
    %3336 = sbr.rel (0) target = $region53
  $region52: #{encoder_forward.1} parent=0 // pred_region
    _
  $region53: #{encoder_forward.1} parent=0 // pred_fallthru
    _

</llo_original>
